<compile_context>
chip_gen: v7x
topology: tpu7x:2x2x1
jax: 0.10.0
libtpu: 0.0.40
codegen_flags: <defaults>
</compile_context>

<pallas_src>
import math
from fractions import Fraction

import numpy as np
import jax
import jax.numpy as jnp
from jax.experimental import pallas as pl
from jax.experimental.pallas import tpu as pltpu

# ----------------------- module "constructor" config ------------------------
SAMPLING_RATE = 16000
STRETCH_RATE = 1.2
SHIFT_RATE = 0.9
N_FFT = 128
HOP_LENGTH = 32
WIN_LENGTH = 128

RATE = STRETCH_RATE * SHIFT_RATE          # torchaudio.TimeStretch fixed_rate
N_FREQ = N_FFT // 2 + 1
FP = 128                                  # n_freq padded to a full lane width

TWO_PI = 2.0 * math.pi
INV_TWO_PI = 1.0 / TWO_PI

# deterministic parameter: periodic Hann window (torch.hann_window default)
_n = np.arange(WIN_LENGTH)
HANN_WINDOW = (0.5 * (1.0 - np.cos(2.0 * np.pi * _n / WIN_LENGTH))).astype(np.float32)

_CPARAMS = pltpu.CompilerParams(
    dimension_semantics=("parallel",),
    vmem_limit_bytes=32 * 1024 * 1024,
)


def _round_up(x, m):
    return ((x + m - 1) // m) * m


def _row_grid(rows, cap=256):
    blk = min(cap, _round_up(rows, 8))
    return blk, _round_up(rows, blk)


# --------------------------- constant weight tables --------------------------
def _stft_weights():
    # onesided DFT, fused [cos | -sin] -> one (N_FFT, 2*FP) matmul weight.
    n = np.arange(N_FFT, dtype=np.float64)[:, None]
    k = np.arange(N_FREQ, dtype=np.float64)[None, :]
    ang = 2.0 * np.pi * n * k / N_FFT
    w = np.zeros((N_FFT, 2 * FP), np.float32)
    w[:, :N_FREQ] = np.cos(ang)
    w[:, FP:FP + N_FREQ] = -np.sin(ang)
    return w


def _idft_weights():
    # onesided IDFT, fused [icos ; isin] stacked along K -> (2*FP, N_FFT).
    k = np.arange(N_FREQ, dtype=np.float64)[:, None]
    n = np.arange(N_FFT, dtype=np.float64)[None, :]
    ang = 2.0 * np.pi * k * n / N_FFT
    scale = np.full((N_FREQ, 1), 2.0)
    scale[0, 0] = 1.0
    scale[-1, 0] = 1.0
    w = np.zeros((2 * FP, N_FFT), np.float32)
    w[:N_FREQ, :] = scale * np.cos(ang) / N_FFT
    w[FP:FP + N_FREQ, :] = -scale * np.sin(ang) / N_FFT
    return w


_STFT_W = _stft_weights()
_IDFT_W = _idft_weights()


# --------------------------------- kernels ----------------------------------
def _stft_kernel(frames_ref, win_ref, dft_ref, spec_ref):
    # (blk, n_fft) windowed frames -> single fused onesided DFT matmul.
    fw = frames_ref[...] * win_ref[...]
    spec_ref[...] = jnp.dot(fw, dft_ref[...], preferred_element_type=jnp.float32)


def _make_pv_istft_kernel(t_outp):
    """Fused phase-vocoder + onesided-IDFT + synthesis-window kernel.

    Rows are (batch, out_time) flattened with per-batch stride t_outp (so any
    block holding whole groups keeps the prefix sum batch-local); lanes are the
    padded frequency axis.
    """
    def kernel(s0_ref, s1_ref, base_ref, alphas_ref, tpos_ref,
               adv_ref, idft_ref, win_ref, frames_ref):
        s0 = s0_ref[...]
        s1 = s1_ref[...]
        re0, im0 = s0[:, :FP], s0[:, FP:]
        re1, im1 = s1[:, :FP], s1[:, FP:]
        adv = adv_ref[...]                   # (1, FP)
        alphas = alphas_ref[...]             # (blk, 1)
        tpos = tpos_ref[...]                 # (blk, 1) time index within group

        # phase difference via one atan2 of the complex ratio (EUP saving)
        d = jnp.arctan2(im1 * re0 - re1 * im0, re1 * re0 + im1 * im0)
        phase = d - adv
        phase = phase - TWO_PI * jnp.floor(phase * INV_TWO_PI + 0.5)
        phase = phase + adv

        # inclusive prefix sum over time (rows) within each t_outp group:
        # log-step sublane rolls (XLU) masked at group boundaries -> O(T log T)
        incl = phase
        shift = 1
        while shift < t_outp:
            rolled = pltpu.roll(incl, shift=shift, axis=0)
            mask = (tpos >= float(shift)).astype(jnp.float32)
            incl = incl + rolled * mask
            shift *= 2
        # phase_acc[t] = angle0[t=0] + sum_{j<t} phase[j]
        phase_acc = base_ref[...] + (incl - phase)

        norm0 = jnp.sqrt(re0 * re0 + im0 * im0)
        norm1 = jnp.sqrt(re1 * re1 + im1 * im1)
        mag = alphas * norm1 + (1.0 - alphas) * norm0

        sre = mag * jnp.cos(phase_acc)
        sim = mag * jnp.sin(phase_acc)

        # fused onesided IDFT ([re | im] @ [icos ; isin]) + synthesis window
        spec_cat = jnp.concatenate([sre, sim], axis=1)          # (blk, 2*FP)
        fr = jnp.dot(spec_cat, idft_ref[...], preferred_element_type=jnp.float32)
        frames_ref[...] = fr * win_ref[...]

    return kernel


def _resample_kernel(x_ref, w_ref, o_ref):
    # polyphase FIR: (blk, taps) @ (taps, phases padded to 128)
    o_ref[...] = jnp.dot(x_ref[...], w_ref[...], preferred_element_type=jnp.float32)


# ------------------------------ forward pipeline -----------------------------
@jax.jit
def time_stretch_and_pitch_shift(x):
    B, T = x.shape

    # ------------------------------ STFT -------------------------------------
    pad = N_FFT // 2
    xp = jnp.pad(x, ((0, 0), (pad, pad)), mode="reflect")
    n_frames = 1 + (T + 2 * pad - N_FFT) // HOP_LENGTH
    fidx = np.arange(n_frames)[:, None] * HOP_LENGTH + np.arange(N_FFT)[None, :]
    frames = xp[:, fidx].reshape(B * n_frames, N_FFT)

    rows_s = B * n_frames
    blk_s, rows_s_pad = _row_grid(rows_s)
    frames = jnp.pad(frames, ((0, rows_s_pad - rows_s), (0, 0)))

    win = jnp.asarray(HANN_WINDOW[None, :])

    spec = pl.pallas_call(
        _stft_kernel,
        grid=(rows_s_pad // blk_s,),
        in_specs=[pl.BlockSpec((blk_s, N_FFT), lambda i: (i, 0)),
                  pl.BlockSpec((1, N_FFT), lambda i: (0, 0)),
                  pl.BlockSpec((N_FFT, 2 * FP), lambda i: (0, 0))],
        out_specs=pl.BlockSpec((blk_s, 2 * FP), lambda i: (i, 0)),
        out_shape=jax.ShapeDtypeStruct((rows_s_pad, 2 * FP), jnp.float32),
        compiler_params=_CPARAMS,
    )(frames, win, jnp.asarray(_STFT_W))
    spec = spec[:rows_s].reshape(B, n_frames, 2 * FP)   # lanes = [re | im], F padded to 128

    # ----------------- phase vocoder + ISTFT frames (fused) ------------------
    time_steps = np.arange(0.0, n_frames, RATE)
    t_out = time_steps.shape[0]
    idx0 = time_steps.astype(np.int64)
    idx1 = idx0 + 1
    alphas_np = (time_steps % 1.0).astype(np.float32)

    t_outp = _round_up(t_out, 8)
    groups_per_blk = max(1, min(B, max(1, 256 // t_outp)))
    b_pad = _round_up(B, groups_per_blk)
    blk_p = groups_per_blk * t_outp
    rows_p = b_pad * t_outp

    spec_p = jnp.pad(spec, ((0, b_pad - B), (0, 2), (0, 0)))   # torch pads 2 zero frames
    s0 = jnp.pad(spec_p[:, idx0, :], ((0, 0), (0, t_outp - t_out), (0, 0)))
    s1 = jnp.pad(spec_p[:, idx1, :], ((0, 0), (0, t_outp - t_out), (0, 0)))
    base = jnp.arctan2(s0[:, 0, FP:], s0[:, 0, :FP])            # angle_0 at t=0, (b_pad, FP)
    base = jnp.broadcast_to(base[:, None, :], (b_pad, t_outp, FP)).reshape(rows_p, FP)
    s0 = s0.reshape(rows_p, 2 * FP)
    s1 = s1.reshape(rows_p, 2 * FP)

    alphas_col = np.zeros((t_outp, 1), np.float32)
    alphas_col[:t_out, 0] = alphas_np
    alphas_rows = jnp.asarray(np.tile(alphas_col, (b_pad, 1)))
    tpos_rows = jnp.asarray(
        np.tile(np.arange(t_outp, dtype=np.float32)[:, None], (b_pad, 1)))

    adv_np = np.zeros((1, FP), np.float32)
    adv_np[0, :N_FREQ] = np.linspace(0.0, np.pi * HOP_LENGTH, N_FREQ)

    frames_t = pl.pallas_call(
        _make_pv_istft_kernel(t_outp),
        grid=(rows_p // blk_p,),
        in_specs=[pl.BlockSpec((blk_p, 2 * FP), lambda i: (i, 0)),
                  pl.BlockSpec((blk_p, 2 * FP), lambda i: (i, 0)),
                  pl.BlockSpec((blk_p, FP), lambda i: (i, 0)),
                  pl.BlockSpec((blk_p, 1), lambda i: (i, 0)),
                  pl.BlockSpec((blk_p, 1), lambda i: (i, 0)),
                  pl.BlockSpec((1, FP), lambda i: (0, 0)),
                  pl.BlockSpec((2 * FP, N_FFT), lambda i: (0, 0)),
                  pl.BlockSpec((1, N_FFT), lambda i: (0, 0))],
        out_specs=pl.BlockSpec((blk_p, N_FFT), lambda i: (i, 0)),
        out_shape=jax.ShapeDtypeStruct((rows_p, N_FFT), jnp.float32),
        compiler_params=_CPARAMS,
    )(s0, s1, base, alphas_rows, tpos_rows,
      jnp.asarray(adv_np), jnp.asarray(_IDFT_W), win)

    # ----------------- overlap-add + window envelope (XLA glue) --------------
    frames_t = frames_t.reshape(b_pad, t_outp, N_FFT)[:B, :t_out, :]
    R = N_FFT // HOP_LENGTH
    f4 = frames_t.reshape(B, t_out, R, HOP_LENGTH)
    n_chunks = t_out + R - 1
    y = jnp.zeros((B, n_chunks, HOP_LENGTH), jnp.float32)
    for r in range(R):                     # OLA = sum of R hop-shifted views (no scatter)
        y = y + jnp.pad(f4[:, :, r, :], ((0, 0), (r, R - 1 - r), (0, 0)))
    L = n_chunks * HOP_LENGTH              # == N_FFT + HOP*(t_out-1)
    y = y.reshape(B, L)

    env = np.zeros((L,), np.float64)       # input-independent -> numpy constant
    w2 = HANN_WINDOW.astype(np.float64) ** 2
    for t in range(t_out):
        env[t * HOP_LENGTH:t * HOP_LENGTH + N_FFT] += w2
    env = env[pad:L - pad]
    inv_env = np.where(env > 1e-11, 1.0 / np.maximum(env, 1e-11), 0.0).astype(np.float32)
    x_t = y[:, pad:L - pad] * jnp.asarray(inv_env[None, :])

    # ------------------------- polyphase resample ----------------------------
    # TODO(synk): resampy's precomputed 'kaiser_best' FIR is approximated with a
    # Hann-windowed-sinc polyphase interpolator of the same structure.
    L_in = x_t.shape[1]
    ratio = SAMPLING_RATE / (SAMPLING_RATE / SHIFT_RATE)   # new_freq / orig_freq
    frac = Fraction(ratio).limit_denominator(1000)
    p_ph, q_ph = frac.numerator, frac.denominator          # 9 outputs per 10 inputs
    L_out = int(np.ceil(L_in * ratio))
    nb = -(-L_out // p_ph)

    scale = min(1.0, ratio)
    num_zeros = 16
    radius = num_zeros / scale
    left = int(np.ceil(radius))
    taps = _round_up(left + int(np.ceil((p_ph - 1) * q_ph / p_ph + radius)) + 1, 8)

    i_rel = np.arange(taps, dtype=np.float64)[:, None]
    ph = np.arange(p_ph, dtype=np.float64)[None, :]
    tau = ph * q_ph / p_ph - (i_rel - left)
    taper = np.where(np.abs(tau) < radius,
                     0.5 * (1.0 + np.cos(np.pi * tau * scale / num_zeros)), 0.0)
    wpoly = np.zeros((taps, FP), np.float32)               # phases padded to 128 lanes
    wpoly[:, :p_ph] = (scale * np.sinc(scale * tau) * taper).astype(np.float32)

    right_pad = max(0, (nb - 1) * q_ph + taps - (left + L_in))
    xq = jnp.pad(x_t, ((0, 0), (left, right_pad)))
    ridx = np.arange(nb)[:, None] * q_ph + np.arange(taps)[None, :]
    xf = xq[:, ridx].reshape(B * nb, taps)

    rows_r = B * nb
    blk_r, rows_r_pad = _row_grid(rows_r)
    xf = jnp.pad(xf, ((0, rows_r_pad - rows_r), (0, 0)))

    res = pl.pallas_call(
        _resample_kernel,
        grid=(rows_r_pad // blk_r,),
        in_specs=[pl.BlockSpec((blk_r, taps), lambda i: (i, 0)),
                  pl.BlockSpec((taps, FP), lambda i: (0, 0))],
        out_specs=pl.BlockSpec((blk_r, FP), lambda i: (i, 0)),
        out_shape=jax.ShapeDtypeStruct((rows_r_pad, FP), jnp.float32),
        compiler_params=_CPARAMS,
    )(xf, jnp.asarray(wpoly))
    return res[:rows_r, :p_ph].reshape(B, nb * p_ph)[:, :L_out]


# ----------------------------------- main ------------------------------------
if __name__ == "__main__":
    key = jax.random.PRNGKey(0)
    B, T = 2, 1024
    x = jax.random.normal(key, (B, T), dtype=jnp.float32)

    out = time_stretch_and_pitch_shift(x)
    out = jax.block_until_ready(out)

    assert out.ndim == 2 and out.shape[0] == B
    assert bool(jnp.all(jnp.isfinite(out)))
    print("KERNEL_OK")
</pallas_src>

<mosaic_0001>
module attributes {stable_mosaic.version = 11 : i64} {
  func.func @_stft_kernel(%arg0: i32, %arg1: memref<72x128xf32, #tpu.memory_space<vmem>>, %arg2: memref<1x128xf32, #tpu.memory_space<vmem>>, %arg3: memref<128x256xf32, #tpu.memory_space<vmem>>, %arg4: memref<72x256xf32, #tpu.memory_space<vmem>>) attributes {dimension_semantics = [#tpu.dimension_semantics<parallel>], iteration_bounds = array<i64: 1>, scalar_prefetch = 0 : i64, scratch_operands = 0 : i64, tpu.core_type = #tpu.core_type<tc>, window_params = [{transform_indices = @transform_0, window_bounds = array<i64: 72, 128>}, {pipeline_mode = #tpu.pipeline_mode<synchronous>, transform_indices = @transform_1, window_bounds = array<i64: 1, 128>}, {pipeline_mode = #tpu.pipeline_mode<synchronous>, transform_indices = @transform_2, window_bounds = array<i64: 128, 256>}, {transform_indices = @transform_3, window_bounds = array<i64: 72, 256>}]} {
    %c0 = arith.constant 0 : index
    %c0_0 = arith.constant 0 : index
    %0 = vector.load %arg1[%c0, %c0_0] : memref<72x128xf32, #tpu.memory_space<vmem>>, vector<72x128xf32>
    %c0_1 = arith.constant 0 : index
    %c0_2 = arith.constant 0 : index
    %1 = vector.load %arg2[%c0_1, %c0_2] : memref<1x128xf32, #tpu.memory_space<vmem>>, vector<1x128xf32>
    %2 = vector.broadcast %1 : vector<1x128xf32> to vector<72x128xf32>
    %3 = arith.mulf %0, %2 : vector<72x128xf32>
    %c0_3 = arith.constant 0 : index
    %c0_4 = arith.constant 0 : index
    %4 = vector.load %arg3[%c0_3, %c0_4] : memref<128x256xf32, #tpu.memory_space<vmem>>, vector<128x256xf32>
    %cst = arith.constant dense<0.000000e+00> : vector<72x256xf32>
    %5 = tpu.matmul %3, %4, %cst {dimension_numbers = #tpu.dot_dimension_numbers<[1], [0], [0], [1], [0, 0, 1, 1], [], []>} : vector<72x128xf32>, vector<128x256xf32>, vector<72x256xf32> -> vector<72x256xf32>
    %c0_5 = arith.constant 0 : index
    %c0_6 = arith.constant 0 : index
    %6 = vector.load %arg4[%c0_5, %c0_6] : memref<72x256xf32, #tpu.memory_space<vmem>>, vector<72x256xf32>
    tpu.vector_store %arg4[%c0_5, %c0_6], %5 {strides = array<i32>} : memref<72x256xf32, #tpu.memory_space<vmem>>, vector<72x256xf32>,
    return
  }
  func.func @transform_0(%arg0: i32) -> (i32, i32) {
    %c0_i32 = arith.constant 0 : i32
    %c0_i32_0 = arith.constant 0 : i32
    return %arg0, %c0_i32 : i32, i32
  }
  func.func @transform_1(%arg0: i32) -> (i32, i32) {
    %c0_i32 = arith.constant 0 : i32
    %c0_i32_0 = arith.constant 0 : i32
    %c0_i32_1 = arith.constant 0 : i32
    return %c0_i32, %c0_i32_0 : i32, i32
  }
  func.func @transform_2(%arg0: i32) -> (i32, i32) {
    %c0_i32 = arith.constant 0 : i32
    %c0_i32_0 = arith.constant 0 : i32
    %c0_i32_1 = arith.constant 0 : i32
    return %c0_i32, %c0_i32_0 : i32, i32
  }
  func.func @transform_3(%arg0: i32) -> (i32, i32) {
    %c0_i32 = arith.constant 0 : i32
    %c0_i32_0 = arith.constant 0 : i32
    return %arg0, %c0_i32 : i32, i32
  }
}

module attributes {stable_mosaic.version = 11 : i64} {
  func.func @kernel(%arg0: i32, %arg1: memref<64x256xf32, #tpu.memory_space<vmem>>, %arg2: memref<64x256xf32, #tpu.memory_space<vmem>>, %arg3: memref<64x128xf32, #tpu.memory_space<vmem>>, %arg4: memref<64x1xf32, #tpu.memory_space<vmem>>, %arg5: memref<64x1xf32, #tpu.memory_space<vmem>>, %arg6: memref<1x128xf32, #tpu.memory_space<vmem>>, %arg7: memref<256x128xf32, #tpu.memory_space<vmem>>, %arg8: memref<1x128xf32, #tpu.memory_space<vmem>>, %arg9: memref<64x128xf32, #tpu.memory_space<vmem>>) attributes {dimension_semantics = [#tpu.dimension_semantics<parallel>], iteration_bounds = array<i64: 1>, scalar_prefetch = 0 : i64, scratch_operands = 0 : i64, tpu.core_type = #tpu.core_type<tc>, window_params = [{transform_indices = @transform_0, window_bounds = array<i64: 64, 256>}, {transform_indices = @transform_1, window_bounds = array<i64: 64, 256>}, {transform_indices = @transform_2, window_bounds = array<i64: 64, 128>}, {transform_indices = @transform_3, window_bounds = array<i64: 64, 1>}, {transform_indices = @transform_4, window_bounds = array<i64: 64, 1>}, {pipeline_mode = #tpu.pipeline_mode<synchronous>, transform_indices = @transform_5, window_bounds = array<i64: 1, 128>}, {pipeline_mode = #tpu.pipeline_mode<synchronous>, transform_indices = @transform_6, window_bounds = array<i64: 256, 128>}, {pipeline_mode = #tpu.pipeline_mode<synchronous>, transform_indices = @transform_7, window_bounds = array<i64: 1, 128>}, {transform_indices = @transform_8, window_bounds = array<i64: 64, 128>}]} {
    %c0 = arith.constant 0 : index
    %c0_0 = arith.constant 0 : index
    %0 = vector.load %arg1[%c0, %c0_0] : memref<64x256xf32, #tpu.memory_space<vmem>>, vector<64x256xf32>
    %c0_1 = arith.constant 0 : index
    %c0_2 = arith.constant 0 : index
    %1 = vector.load %arg2[%c0_1, %c0_2] : memref<64x256xf32, #tpu.memory_space<vmem>>, vector<64x256xf32>
    %2 = vector.extract_strided_slice %0 {offsets = [0, 0], sizes = [64, 128], strides = [1, 1]} : vector<64x256xf32> to vector<64x128xf32>
    %3 = vector.extract_strided_slice %0 {offsets = [0, 128], sizes = [64, 128], strides = [1, 1]} : vector<64x256xf32> to vector<64x128xf32>
    %4 = vector.extract_strided_slice %1 {offsets = [0, 0], sizes = [64, 128], strides = [1, 1]} : vector<64x256xf32> to vector<64x128xf32>
    %5 = vector.extract_strided_slice %1 {offsets = [0, 128], sizes = [64, 128], strides = [1, 1]} : vector<64x256xf32> to vector<64x128xf32>
    %c0_3 = arith.constant 0 : index
    %c0_4 = arith.constant 0 : index
    %6 = vector.load %arg6[%c0_3, %c0_4] : memref<1x128xf32, #tpu.memory_space<vmem>>, vector<1x128xf32>
    %c0_5 = arith.constant 0 : index
    %c0_6 = arith.constant 0 : index
    %7 = vector.load %arg4[%c0_5, %c0_6] : memref<64x1xf32, #tpu.memory_space<vmem>>, vector<64x1xf32>
    %c0_7 = arith.constant 0 : index
    %c0_8 = arith.constant 0 : index
    %8 = vector.load %arg5[%c0_7, %c0_8] : memref<64x1xf32, #tpu.memory_space<vmem>>, vector<64x1xf32>
    %9 = arith.mulf %5, %2 : vector<64x128xf32>
    %10 = arith.mulf %4, %3 : vector<64x128xf32>
    %11 = arith.subf %9, %10 : vector<64x128xf32>
    %12 = arith.mulf %4, %2 : vector<64x128xf32>
    %13 = arith.mulf %5, %3 : vector<64x128xf32>
    %14 = arith.addf %12, %13 : vector<64x128xf32>
    %15 = math.atan2 %11, %14 : vector<64x128xf32>
    %16 = vector.broadcast %6 : vector<1x128xf32> to vector<64x128xf32>
    %17 = arith.subf %15, %16 : vector<64x128xf32>
    %cst = arith.constant 0.159154937 : f32
    %18 = vector.broadcast %cst : f32 to vector<64x128xf32>
    %19 = arith.mulf %17, %18 : vector<64x128xf32>
    %cst_9 = arith.constant 5.000000e-01 : f32
    %20 = vector.broadcast %cst_9 : f32 to vector<64x128xf32>
    %21 = arith.addf %19, %20 : vector<64x128xf32>
    %22 = math.floor %21 : vector<64x128xf32>
    %cst_10 = arith.constant 6.28318548 : f32
    %23 = vector.broadcast %cst_10 : f32 to vector<64x128xf32>
    %24 = arith.mulf %23, %22 : vector<64x128xf32>
    %25 = arith.subf %17, %24 : vector<64x128xf32>
    %26 = vector.broadcast %6 : vector<1x128xf32> to vector<64x128xf32>
    %27 = arith.addf %25, %26 : vector<64x128xf32>
    %c1_i32 = arith.constant 1 : i32
    %28 = tpu.dynamic_rotate %27 by %c1_i32 dim 0 : vector<64x128xf32>, i32 -> vector<64x128xf32>
    %cst_11 = arith.constant 1.000000e+00 : f32
    %29 = vector.broadcast %cst_11 : f32 to vector<64x1xf32>
    %30 = arith.cmpf oge, %8, %29 : vector<64x1xf32>
    %31 = arith.extui %30 : vector<64x1xi1> to vector<64x1xi32>
    %32 = arith.sitofp %31 : vector<64x1xi32> to vector<64x1xf32>
    %33 = vector.broadcast %32 : vector<64x1xf32> to vector<64x128xf32>
    %34 = arith.mulf %28, %33 : vector<64x128xf32>
    %35 = arith.addf %27, %34 : vector<64x128xf32>
    %c2_i32 = arith.constant 2 : i32
    %36 = tpu.dynamic_rotate %35 by %c2_i32 dim 0 : vector<64x128xf32>, i32 -> vector<64x128xf32>
    %cst_12 = arith.constant 2.000000e+00 : f32
    %37 = vector.broadcast %cst_12 : f32 to vector<64x1xf32>
    %38 = arith.cmpf oge, %8, %37 : vector<64x1xf32>
    %39 = arith.extui %38 : vector<64x1xi1> to vector<64x1xi32>
    %40 = arith.sitofp %39 : vector<64x1xi32> to vector<64x1xf32>
    %41 = vector.broadcast %40 : vector<64x1xf32> to vector<64x128xf32>
    %42 = arith.mulf %36, %41 : vector<64x128xf32>
    %43 = arith.addf %35, %42 : vector<64x128xf32>
    %c4_i32 = arith.constant 4 : i32
    %44 = tpu.dynamic_rotate %43 by %c4_i32 dim 0 : vector<64x128xf32>, i32 -> vector<64x128xf32>
    %cst_13 = arith.constant 4.000000e+00 : f32
    %45 = vector.broadcast %cst_13 : f32 to vector<64x1xf32>
    %46 = arith.cmpf oge, %8, %45 : vector<64x1xf32>
    %47 = arith.extui %46 : vector<64x1xi1> to vector<64x1xi32>
    %48 = arith.sitofp %47 : vector<64x1xi32> to vector<64x1xf32>
    %49 = vector.broadcast %48 : vector<64x1xf32> to vector<64x128xf32>
    %50 = arith.mulf %44, %49 : vector<64x128xf32>
    %51 = arith.addf %43, %50 : vector<64x128xf32>
    %c8_i32 = arith.constant 8 : i32
    %52 = tpu.dynamic_rotate %51 by %c8_i32 dim 0 : vector<64x128xf32>, i32 -> vector<64x128xf32>
    %cst_14 = arith.constant 8.000000e+00 : f32
    %53 = vector.broadcast %cst_14 : f32 to vector<64x1xf32>
    %54 = arith.cmpf oge, %8, %53 : vector<64x1xf32>
    %55 = arith.extui %54 : vector<64x1xi1> to vector<64x1xi32>
    %56 = arith.sitofp %55 : vector<64x1xi32> to vector<64x1xf32>
    %57 = vector.broadcast %56 : vector<64x1xf32> to vector<64x128xf32>
    %58 = arith.mulf %52, %57 : vector<64x128xf32>
    %59 = arith.addf %51, %58 : vector<64x128xf32>
    %c16_i32 = arith.constant 16 : i32
    %60 = tpu.dynamic_rotate %59 by %c16_i32 dim 0 : vector<64x128xf32>, i32 -> vector<64x128xf32>
    %cst_15 = arith.constant 1.600000e+01 : f32
    %61 = vector.broadcast %cst_15 : f32 to vector<64x1xf32>
    %62 = arith.cmpf oge, %8, %61 : vector<64x1xf32>
    %63 = arith.extui %62 : vector<64x1xi1> to vector<64x1xi32>
    %64 = arith.sitofp %63 : vector<64x1xi32> to vector<64x1xf32>
    %65 = vector.broadcast %64 : vector<64x1xf32> to vector<64x128xf32>
    %66 = arith.mulf %60, %65 : vector<64x128xf32>
    %67 = arith.addf %59, %66 : vector<64x128xf32>
    %c0_16 = arith.constant 0 : index
    %c0_17 = arith.constant 0 : index
    %68 = vector.load %arg3[%c0_16, %c0_17] : memref<64x128xf32, #tpu.memory_space<vmem>>, vector<64x128xf32>
    %69 = arith.subf %67, %27 : vector<64x128xf32>
    %70 = arith.addf %68, %69 : vector<64x128xf32>
    %71 = arith.mulf %2, %2 : vector<64x128xf32>
    %72 = arith.mulf %3, %3 : vector<64x128xf32>
    %73 = arith.addf %71, %72 : vector<64x128xf32>
    %74 = math.sqrt %73 : vector<64x128xf32>
    %75 = arith.mulf %4, %4 : vector<64x128xf32>
    %76 = arith.mulf %5, %5 : vector<64x128xf32>
    %77 = arith.addf %75, %76 : vector<64x128xf32>
    %78 = math.sqrt %77 : vector<64x128xf32>
    %79 = vector.broadcast %7 : vector<64x1xf32> to vector<64x128xf32>
    %80 = arith.mulf %79, %78 : vector<64x128xf32>
    %cst_18 = arith.constant 1.000000e+00 : f32
    %81 = vector.broadcast %cst_18 : f32 to vector<64x1xf32>
    %82 = arith.subf %81, %7 : vector<64x1xf32>
    %83 = vector.broadcast %82 : vector<64x1xf32> to vector<64x128xf32>
    %84 = arith.mulf %83, %74 : vector<64x128xf32>
    %85 = arith.addf %80, %84 : vector<64x128xf32>
    %86 = math.cos %70 : vector<64x128xf32>
    %87 = arith.mulf %85, %86 : vector<64x128xf32>
    %88 = math.sin %70 : vector<64x128xf32>
    %89 = arith.mulf %85, %88 : vector<64x128xf32>
    %90 = tpu.concatenate %87, %89 in 1 : vector<64x128xf32>, vector<64x128xf32> -> vector<64x256xf32>
    %c0_19 = arith.constant 0 : index
    %c0_20 = arith.constant 0 : index
    %91 = vector.load %arg7[%c0_19, %c0_20] : memref<256x128xf32, #tpu.memory_space<vmem>>, vector<256x128xf32>
    %cst_21 = arith.constant dense<0.000000e+00> : vector<64x128xf32>
    %92 = tpu.matmul %90, %91, %cst_21 {dimension_numbers = #tpu.dot_dimension_numbers<[1], [0], [0], [1], [0, 0, 1, 1], [], []>} : vector<64x256xf32>, vector<256x128xf32>, vector<64x128xf32> -> vector<64x128xf32>
    %c0_22 = arith.constant 0 : index
    %c0_23 = arith.constant 0 : index
    %93 = vector.load %arg8[%c0_22, %c0_23] : memref<1x128xf32, #tpu.memory_space<vmem>>, vector<1x128xf32>
    %94 = vector.broadcast %93 : vector<1x128xf32> to vector<64x128xf32>
    %95 = arith.mulf %92, %94 : vector<64x128xf32>
    %c0_24 = arith.constant 0 : index
    %c0_25 = arith.constant 0 : index
    %96 = vector.load %arg9[%c0_24, %c0_25] : memref<64x128xf32, #tpu.memory_space<vmem>>, vector<64x128xf32>
    tpu.vector_store %arg9[%c0_24, %c0_25], %95 {strides = array<i32>} : memref<64x128xf32, #tpu.memory_space<vmem>>, vector<64x128xf32>,
    return
  }
  func.func @transform_0(%arg0: i32) -> (i32, i32) {
    %c0_i32 = arith.constant 0 : i32
    %c0_i32_0 = arith.constant 0 : i32
    return %arg0, %c0_i32 : i32, i32
  }
  func.func @transform_1(%arg0: i32) -> (i32, i32) {
    %c0_i32 = arith.constant 0 : i32
    %c0_i32_0 = arith.constant 0 : i32
    return %arg0, %c0_i32 : i32, i32
  }
  func.func @transform_2(%arg0: i32) -> (i32, i32) {
    %c0_i32 = arith.constant 0 : i32
    %c0_i32_0 = arith.constant 0 : i32
    return %arg0, %c0_i32 : i32, i32
  }
  func.func @transform_3(%arg0: i32) -> (i32, i32) {
    %c0_i32 = arith.constant 0 : i32
    %c0_i32_0 = arith.constant 0 : i32
    return %arg0, %c0_i32 : i32, i32
  }
  func.func @transform_4(%arg0: i32) -> (i32, i32) {
    %c0_i32 = arith.constant 0 : i32
    %c0_i32_0 = arith.constant 0 : i32
    return %arg0, %c0_i32 : i32, i32
  }
  func.func @transform_5(%arg0: i32) -> (i32, i32) {
    %c0_i32 = arith.constant 0 : i32
    %c0_i32_0 = arith.constant 0 : i32
    %c0_i32_1 = arith.constant 0 : i32
    return %c0_i32, %c0_i32_0 : i32, i32
  }
  func.func @transform_6(%arg0: i32) -> (i32, i32) {
    %c0_i32 = arith.constant 0 : i32
    %c0_i32_0 = arith.constant 0 : i32
    %c0_i32_1 = arith.constant 0 : i32
    return %c0_i32, %c0_i32_0 : i32, i32
  }
  func.func @transform_7(%arg0: i32) -> (i32, i32) {
    %c0_i32 = arith.constant 0 : i32
    %c0_i32_0 = arith.constant 0 : i32
    %c0_i32_1 = arith.constant 0 : i32
    return %c0_i32, %c0_i32_0 : i32, i32
  }
  func.func @transform_8(%arg0: i32) -> (i32, i32) {
    %c0_i32 = arith.constant 0 : i32
    %c0_i32_0 = arith.constant 0 : i32
    return %arg0, %c0_i32 : i32, i32
  }
}

module attributes {stable_mosaic.version = 11 : i64} {
  func.func @_resample_kernel(%arg0: i32, %arg1: memref<192x48xf32, #tpu.memory_space<vmem>>, %arg2: memref<48x128xf32, #tpu.memory_space<vmem>>, %arg3: memref<192x128xf32, #tpu.memory_space<vmem>>) attributes {dimension_semantics = [#tpu.dimension_semantics<parallel>], iteration_bounds = array<i64: 1>, scalar_prefetch = 0 : i64, scratch_operands = 0 : i64, tpu.core_type = #tpu.core_type<tc>, window_params = [{transform_indices = @transform_0, window_bounds = array<i64: 192, 48>}, {pipeline_mode = #tpu.pipeline_mode<synchronous>, transform_indices = @transform_1, window_bounds = array<i64: 48, 128>}, {transform_indices = @transform_2, window_bounds = array<i64: 192, 128>}]} {
    %c0 = arith.constant 0 : index
    %c0_0 = arith.constant 0 : index
    %0 = vector.load %arg1[%c0, %c0_0] : memref<192x48xf32, #tpu.memory_space<vmem>>, vector<192x48xf32>
    %c0_1 = arith.constant 0 : index
    %c0_2 = arith.constant 0 : index
    %1 = vector.load %arg2[%c0_1, %c0_2] : memref<48x128xf32, #tpu.memory_space<vmem>>, vector<48x128xf32>
    %cst = arith.constant dense<0.000000e+00> : vector<192x128xf32>
    %2 = tpu.matmul %0, %1, %cst {dimension_numbers = #tpu.dot_dimension_numbers<[1], [0], [0], [1], [0, 0, 1, 1], [], []>} : vector<192x48xf32>, vector<48x128xf32>, vector<192x128xf32> -> vector<192x128xf32>
    %c0_3 = arith.constant 0 : index
    %c0_4 = arith.constant 0 : index
    %3 = vector.load %arg3[%c0_3, %c0_4] : memref<192x128xf32, #tpu.memory_space<vmem>>, vector<192x128xf32>
    tpu.vector_store %arg3[%c0_3, %c0_4], %2 {strides = array<i32>} : memref<192x128xf32, #tpu.memory_space<vmem>>, vector<192x128xf32>,
    return
  }
  func.func @transform_0(%arg0: i32) -> (i32, i32) {
    %c0_i32 = arith.constant 0 : i32
    %c0_i32_0 = arith.constant 0 : i32
    return %arg0, %c0_i32 : i32, i32
  }
  func.func @transform_1(%arg0: i32) -> (i32, i32) {
    %c0_i32 = arith.constant 0 : i32
    %c0_i32_0 = arith.constant 0 : i32
    %c0_i32_1 = arith.constant 0 : i32
    return %c0_i32, %c0_i32_0 : i32, i32
  }
  func.func @transform_2(%arg0: i32) -> (i32, i32) {
    %c0_i32 = arith.constant 0 : i32
    %c0_i32_0 = arith.constant 0 : i32
    return %arg0, %c0_i32 : i32, i32
  }
}

</mosaic_0001>

<llo_original>
// kernel: time_stretch_and_pitch_shift.3
$region0: #{time_stretch_and_pitch_shift.3}
  #allocation0 [shape = 'u32[]', space=smem, size = 0x4, offset = 0x4, fixed_abs, tag = 'smem constant byte address 0x4 - core index']
  #allocation1 [shape = 'u32[144,128]{1,0:T(1,128)}', space=vmem, size = 0x12000, scoped, tag = 'internal scratch']
  %s0 = inlined_call_operand.vmem [shape: f32[72,128], index: 0, kind: input, shape index: {}]
  %s1 = inlined_call_operand.vmem [shape: f32[1,128], index: 1, kind: input, shape index: {}]
  %s2 = inlined_call_operand.vmem [shape: f32[128,256], index: 2, kind: input, shape index: {}]
  %s3 = inlined_call_operand.vmem [shape: f32[72,256], index: 3, kind: output, shape index: {}]
  %s4 = sld [smem:[#allocation0]]
  $region22: #{time_stretch_and_pitch_shift.3} parent=0
    _
  %s6 = ssub.s32 1, %s4
  %s7 = scalar_select 0, %s6, %s4
  // Predicated region
  $region2: #{time_stretch_and_pitch_shift.3} parent=0 // pred_check
    _
  $region3: #{time_stretch_and_pitch_shift.3} parent=0 // pred_check_branch
    %9 = sbr.rel (0) target = $region5
  $region4: #{time_stretch_and_pitch_shift.3} parent=0 // pred_region
    _
  $region5: #{time_stretch_and_pitch_shift.3} parent=0 // pred_fallthru
    _
  // Predicated region
  $region6: #{time_stretch_and_pitch_shift.3} parent=0 // pred_check
    _
  $region7: #{time_stretch_and_pitch_shift.3} parent=0 // pred_check_branch
    %11 = sbr.rel (0) target = $region9
  $region8: #{time_stretch_and_pitch_shift.3} parent=0 // pred_region
    _
  $region9: #{time_stretch_and_pitch_shift.3} parent=0 // pred_fallthru
    _
  // Predicated region
  $region10: #{time_stretch_and_pitch_shift.3} parent=0 // pred_check
    _
  $region11: #{time_stretch_and_pitch_shift.3} parent=0 // pred_check_branch
    %13 = sbr.rel (0) target = $region13
  $region12: #{time_stretch_and_pitch_shift.3} parent=0 // pred_region
    _
  $region13: #{time_stretch_and_pitch_shift.3} parent=0 // pred_fallthru
    _
  %v14 = vld [vmem:[%s0] sm:$0xff]
  %v15 = vld [vmem:[%s0 + $0x8] sm:$0xff]
  %v16 = vld [vmem:[%s0 + $0x10] sm:$0xff]
  %v17 = vld [vmem:[%s0 + $0x18] sm:$0xff]
  %v18 = vld [vmem:[%s0 + $0x20] sm:$0xff]
  %v19 = vld [vmem:[%s0 + $0x28] sm:$0xff]
  %v20 = vld [vmem:[%s0 + $0x30] sm:$0xff]
  %v21 = vld [vmem:[%s0 + $0x38] sm:$0xff]
  %v22 = vld [vmem:[%s0 + $0x40] sm:$0xff]
  %v23 = vld [vmem:[%s1] sm:$0x1]
  %v25 = vlaneseq
  %v26 = vshrl.u32 %v25, 7
  %v27 = vsub.s32 0, %v26
  %v28 = vrot.slane %v23, %v27
  %v30 = vmul.f32 %v14, %v28
  %v31 = vmul.f32 %v15, %v28
  %v32 = vmul.f32 %v16, %v28
  %v33 = vmul.f32 %v17, %v28
  %v34 = vmul.f32 %v18, %v28
  %v35 = vmul.f32 %v19, %v28
  %v36 = vmul.f32 %v20, %v28
  %v37 = vmul.f32 %v21, %v28
  %v38 = vmul.f32 %v22, %v28
  %v39 = vld [vmem:[%s2] sm:$0xff]
  %v40 = vld [vmem:[%s2 + $0x8] sm:$0xff]
  %v41 = vld [vmem:[%s2 + $0x10] sm:$0xff]
  %v42 = vld [vmem:[%s2 + $0x18] sm:$0xff]
  %v43 = vld [vmem:[%s2 + $0x20] sm:$0xff]
  %v44 = vld [vmem:[%s2 + $0x28] sm:$0xff]
  %v45 = vld [vmem:[%s2 + $0x30] sm:$0xff]
  %v46 = vld [vmem:[%s2 + $0x38] sm:$0xff]
  %v47 = vld [vmem:[%s2 + $0x40] sm:$0xff]
  %v48 = vld [vmem:[%s2 + $0x48] sm:$0xff]
  %v49 = vld [vmem:[%s2 + $0x50] sm:$0xff]
  %v50 = vld [vmem:[%s2 + $0x58] sm:$0xff]
  %v51 = vld [vmem:[%s2 + $0x60] sm:$0xff]
  %v52 = vld [vmem:[%s2 + $0x68] sm:$0xff]
  %v53 = vld [vmem:[%s2 + $0x70] sm:$0xff]
  %v54 = vld [vmem:[%s2 + $0x78] sm:$0xff]
  %v55 = vld [vmem:[%s2 + $0x80] sm:$0xff]
  %v56 = vld [vmem:[%s2 + $0x88] sm:$0xff]
  %v57 = vld [vmem:[%s2 + $0x90] sm:$0xff]
  %v58 = vld [vmem:[%s2 + $0x98] sm:$0xff]
  %v59 = vld [vmem:[%s2 + $0xa0] sm:$0xff]
  %v60 = vld [vmem:[%s2 + $0xa8] sm:$0xff]
  %v61 = vld [vmem:[%s2 + $0xb0] sm:$0xff]
  %v62 = vld [vmem:[%s2 + $0xb8] sm:$0xff]
  %v63 = vld [vmem:[%s2 + $0xc0] sm:$0xff]
  %v64 = vld [vmem:[%s2 + $0xc8] sm:$0xff]
  %v65 = vld [vmem:[%s2 + $0xd0] sm:$0xff]
  %v66 = vld [vmem:[%s2 + $0xd8] sm:$0xff]
  %v67 = vld [vmem:[%s2 + $0xe0] sm:$0xff]
  %v68 = vld [vmem:[%s2 + $0xe8] sm:$0xff]
  %v69 = vld [vmem:[%s2 + $0xf0] sm:$0xff]
  %v70 = vld [vmem:[%s2 + $0xf8] sm:$0xff]
  %71 = vmatprep.subr.mxu0 %v40
  %72 = vmatpush1.msra.mxu0 %v39
  %73 = vmatprep.subr.mxu0 %v42
  %74 = vmatpush1.msra.mxu0 %v41
  %75 = vmatprep.subr.mxu0 %v44
  %76 = vmatpush1.msra.mxu0 %v43
  %77 = vmatprep.subr.mxu0 %v46
  %78 = vmatpush1.msra.mxu0 %v45
  %79 = vmatprep.subr.mxu0 %v48
  %80 = vmatpush1.msra.mxu0 %v47
  %81 = vmatprep.subr.mxu0 %v50
  %82 = vmatpush1.msra.mxu0 %v49
  %83 = vmatprep.subr.mxu0 %v52
  %84 = vmatpush1.msra.mxu0 %v51
  %85 = vmatprep.subr.mxu0 %v54
  %86 = vmatpush1.msra.mxu0 %v53
  %87 = vmatprep.subr.mxu0 %v56
  %88 = vmatpush1.msra.mxu0 %v55
  %89 = vmatprep.subr.mxu0 %v58
  %90 = vmatpush1.msra.mxu0 %v57
  %91 = vmatprep.subr.mxu0 %v60
  %92 = vmatpush1.msra.mxu0 %v59
  %93 = vmatprep.subr.mxu0 %v62
  %94 = vmatpush1.msra.mxu0 %v61
  %95 = vmatprep.subr.mxu0 %v64
  %96 = vmatpush1.msra.mxu0 %v63
  %97 = vmatprep.subr.mxu0 %v66
  %98 = vmatpush1.msra.mxu0 %v65
  %99 = vmatprep.subr.mxu0 %v68
  %100 = vmatpush1.msra.mxu0 %v67
  %101 = vmatprep.subr.mxu0 %v70
  %102 = vmatpush1.msra.mxu0 %v69
  %103 = vmatprep.subr.mxu0 0.0
  %104 = vmatpush1.msra.mxu0 0.0
  %105 = vmatprep.subr.mxu0 0.0
  %106 = vmatpush1.msra.mxu0 0.0
  %107 = vmatprep.subr.mxu0 0.0
  %108 = vmatpush1.msra.mxu0 0.0
  %109 = vmatprep.subr.mxu0 0.0
  %110 = vmatpush1.msra.mxu0 0.0
  %111 = vmatprep.subr.mxu0 0.0
  %112 = vmatpush1.msra.mxu0 0.0
  %113 = vmatprep.subr.mxu0 0.0
  %114 = vmatpush1.msra.mxu0 0.0
  %115 = vmatprep.subr.mxu0 0.0
  %116 = vmatpush1.msra.mxu0 0.0
  %117 = vmatprep.subr.mxu0 0.0
  %118 = vmatpush1.msra.mxu0 0.0
  %119 = vmatprep.subr.mxu0 0.0
  %120 = vmatpush1.msra.mxu0 0.0
  %121 = vmatprep.subr.mxu0 0.0
  %122 = vmatpush1.msra.mxu0 0.0
  %123 = vmatprep.subr.mxu0 0.0
  %124 = vmatpush1.msra.mxu0 0.0
  %125 = vmatprep.subr.mxu0 0.0
  %126 = vmatpush1.msra.mxu0 0.0
  %127 = vmatprep.subr.mxu0 0.0
  %128 = vmatpush1.msra.mxu0 0.0
  %129 = vmatprep.subr.mxu0 0.0
  %130 = vmatpush1.msra.mxu0 0.0
  %131 = vmatprep.subr.mxu0 0.0
  %132 = vmatpush1.msra.mxu0 0.0
  %133 = vmatprep.subr.mxu0 0.0
  %134 = vmatpush1.msra.mxu0 0.0
  %135 = vmatprep.mubr.f32.mxu0 0.0
  %136 = vmatmul.mubr.f32.gmra.mrb[0].mxu0 %v30
  %v137 = vpop.f32.mrb[0].mxu0
  %v138 = vadd.f32 0.0, %v137
  %v139 = vpop.f32.mrb[0].mxu0
  %v140 = vadd.f32 0.0, %v139
  %141 = vmatprep.mubr.f32.mxu0 0.0
  %142 = vmatmul.mubr.f32.gmra.mrb[0].mxu0 %v31
  %v143 = vpop.f32.mrb[0].mxu0
  %v144 = vadd.f32 0.0, %v143
  %v145 = vpop.f32.mrb[0].mxu0
  %v146 = vadd.f32 0.0, %v145
  %147 = vmatprep.mubr.f32.mxu0 0.0
  %148 = vmatmul.mubr.f32.gmra.mrb[0].mxu0 %v32
  %v149 = vpop.f32.mrb[0].mxu0
  %v150 = vadd.f32 0.0, %v149
  %v151 = vpop.f32.mrb[0].mxu0
  %v152 = vadd.f32 0.0, %v151
  %153 = vmatprep.mubr.f32.mxu0 0.0
  %154 = vmatmul.mubr.f32.gmra.mrb[0].mxu0 %v33
  %v155 = vpop.f32.mrb[0].mxu0
  %v156 = vadd.f32 0.0, %v155
  %v157 = vpop.f32.mrb[0].mxu0
  %v158 = vadd.f32 0.0, %v157
  %159 = vmatprep.mubr.f32.mxu0 0.0
  %160 = vmatmul.mubr.f32.gmra.mrb[0].mxu0 %v34
  %v161 = vpop.f32.mrb[0].mxu0
  %v162 = vadd.f32 0.0, %v161
  %v163 = vpop.f32.mrb[0].mxu0
  %v164 = vadd.f32 0.0, %v163
  %165 = vmatprep.mubr.f32.mxu0 0.0
  %166 = vmatmul.mubr.f32.gmra.mrb[0].mxu0 %v35
  %v167 = vpop.f32.mrb[0].mxu0
  %v168 = vadd.f32 0.0, %v167
  %v169 = vpop.f32.mrb[0].mxu0
  %v170 = vadd.f32 0.0, %v169
  %171 = vmatprep.mubr.f32.mxu0 0.0
  %172 = vmatmul.mubr.f32.gmra.mrb[0].mxu0 %v36
  %v173 = vpop.f32.mrb[0].mxu0
  %v174 = vadd.f32 0.0, %v173
  %v175 = vpop.f32.mrb[0].mxu0
  %v176 = vadd.f32 0.0, %v175
  %177 = vmatprep.mubr.f32.mxu0 0.0
  %178 = vmatmul.mubr.f32.gmra.mrb[0].mxu0 %v37
  %v179 = vpop.f32.mrb[0].mxu0
  %v180 = vadd.f32 0.0, %v179
  %v181 = vpop.f32.mrb[0].mxu0
  %v182 = vadd.f32 0.0, %v181
  %183 = vmatprep.mubr.f32.mxu0 0.0
  %184 = vmatmul.mubr.f32.gmra.mrb[0].mxu0 %v38
  %v185 = vpop.f32.mrb[0].mxu0
  %v186 = vadd.f32 0.0, %v185
  %v187 = vpop.f32.mrb[0].mxu0
  %v188 = vadd.f32 0.0, %v187
  %189 = vdwg.mxu0
  %190 = vst [vmem:[%s3] sm:$0xff] %v138
  %191 = vst [vmem:[%s3 + $0x8] sm:$0xff] %v140
  %192 = vst [vmem:[%s3 + $0x10] sm:$0xff] %v144
  %193 = vst [vmem:[%s3 + $0x18] sm:$0xff] %v146
  %194 = vst [vmem:[%s3 + $0x20] sm:$0xff] %v150
  %195 = vst [vmem:[%s3 + $0x28] sm:$0xff] %v152
  %196 = vst [vmem:[%s3 + $0x30] sm:$0xff] %v156
  %197 = vst [vmem:[%s3 + $0x38] sm:$0xff] %v158
  %198 = vst [vmem:[%s3 + $0x40] sm:$0xff] %v162
  %199 = vst [vmem:[%s3 + $0x48] sm:$0xff] %v164
  %200 = vst [vmem:[%s3 + $0x50] sm:$0xff] %v168
  %201 = vst [vmem:[%s3 + $0x58] sm:$0xff] %v170
  %202 = vst [vmem:[%s3 + $0x60] sm:$0xff] %v174
  %203 = vst [vmem:[%s3 + $0x68] sm:$0xff] %v176
  %204 = vst [vmem:[%s3 + $0x70] sm:$0xff] %v180
  %205 = vst [vmem:[%s3 + $0x78] sm:$0xff] %v182
  %206 = vst [vmem:[%s3 + $0x80] sm:$0xff] %v186
  %207 = vst [vmem:[%s3 + $0x88] sm:$0xff] %v188
  // Predicated region
  $region14: #{time_stretch_and_pitch_shift.3} parent=0 // pred_check
    _
  $region15: #{time_stretch_and_pitch_shift.3} parent=0 // pred_check_branch
    %209 = sbr.rel (0) target = $region17
  $region16: #{time_stretch_and_pitch_shift.3} parent=0 // pred_region
    _
  $region17: #{time_stretch_and_pitch_shift.3} parent=0 // pred_fallthru
    _
  // Predicated region
  $region18: #{time_stretch_and_pitch_shift.3} parent=0 // pred_check
    _
  $region19: #{time_stretch_and_pitch_shift.3} parent=0 // pred_check_branch
    %211 = sbr.rel (0) target = $region21
  $region20: #{time_stretch_and_pitch_shift.3} parent=0 // pred_region
    _
  $region21: #{time_stretch_and_pitch_shift.3} parent=0 // pred_fallthru
    _

// kernel: time_stretch_and_pitch_shift.4
$region0: #{time_stretch_and_pitch_shift.4}
  #allocation0 [shape = 'u32[]', space=smem, size = 0x4, offset = 0x4, fixed_abs, tag = 'smem constant byte address 0x4 - core index']
  #allocation1 [shape = 'u32[144,128]{1,0:T(1,128)}', space=vmem, size = 0x12000, scoped, tag = 'internal scratch']
  %s0 = inlined_call_operand.vmem [shape: f32[64,256], index: 0, kind: input, shape index: {}]
  %s1 = inlined_call_operand.vmem [shape: f32[64,256], index: 1, kind: input, shape index: {}]
  %s2 = inlined_call_operand.vmem [shape: f32[64,128], index: 2, kind: input, shape index: {}]
  %s3 = inlined_call_operand.vmem [shape: f32[64,1], index: 3, kind: input, shape index: {}]
  %s4 = inlined_call_operand.vmem [shape: f32[64,1], index: 4, kind: input, shape index: {}]
  %s5 = inlined_call_operand.vmem [shape: f32[1,128], index: 5, kind: input, shape index: {}]
  %s6 = inlined_call_operand.vmem [shape: f32[256,128], index: 6, kind: input, shape index: {}]
  %s7 = inlined_call_operand.vmem [shape: f32[1,128], index: 7, kind: input, shape index: {}]
  %s8 = inlined_call_operand.vmem [shape: f32[64,128], index: 8, kind: output, shape index: {}]
  %s9 = sld [smem:[#allocation0]]
  $region42: #{time_stretch_and_pitch_shift.4} parent=0
    _
  %s11 = ssub.s32 1, %s9
  %s12 = scalar_select 0, %s11, %s9
  // Predicated region
  $region2: #{time_stretch_and_pitch_shift.4} parent=0 // pred_check
    _
  $region3: #{time_stretch_and_pitch_shift.4} parent=0 // pred_check_branch
    %14 = sbr.rel (0) target = $region5
  $region4: #{time_stretch_and_pitch_shift.4} parent=0 // pred_region
    _
  $region5: #{time_stretch_and_pitch_shift.4} parent=0 // pred_fallthru
    _
  // Predicated region
  $region6: #{time_stretch_and_pitch_shift.4} parent=0 // pred_check
    _
  $region7: #{time_stretch_and_pitch_shift.4} parent=0 // pred_check_branch
    %16 = sbr.rel (0) target = $region9
  $region8: #{time_stretch_and_pitch_shift.4} parent=0 // pred_region
    _
  $region9: #{time_stretch_and_pitch_shift.4} parent=0 // pred_fallthru
    _
  // Predicated region
  $region10: #{time_stretch_and_pitch_shift.4} parent=0 // pred_check
    _
  $region11: #{time_stretch_and_pitch_shift.4} parent=0 // pred_check_branch
    %18 = sbr.rel (0) target = $region13
  $region12: #{time_stretch_and_pitch_shift.4} parent=0 // pred_region
    _
  $region13: #{time_stretch_and_pitch_shift.4} parent=0 // pred_fallthru
    _
  // Predicated region
  $region14: #{time_stretch_and_pitch_shift.4} parent=0 // pred_check
    _
  $region15: #{time_stretch_and_pitch_shift.4} parent=0 // pred_check_branch
    %20 = sbr.rel (0) target = $region17
  $region16: #{time_stretch_and_pitch_shift.4} parent=0 // pred_region
    _
  $region17: #{time_stretch_and_pitch_shift.4} parent=0 // pred_fallthru
    _
  // Predicated region
  $region18: #{time_stretch_and_pitch_shift.4} parent=0 // pred_check
    _
  $region19: #{time_stretch_and_pitch_shift.4} parent=0 // pred_check_branch
    %22 = sbr.rel (0) target = $region21
  $region20: #{time_stretch_and_pitch_shift.4} parent=0 // pred_region
    _
  $region21: #{time_stretch_and_pitch_shift.4} parent=0 // pred_fallthru
    _
  // Predicated region
  $region22: #{time_stretch_and_pitch_shift.4} parent=0 // pred_check
    _
  $region23: #{time_stretch_and_pitch_shift.4} parent=0 // pred_check_branch
    %24 = sbr.rel (0) target = $region25
  $region24: #{time_stretch_and_pitch_shift.4} parent=0 // pred_region
    _
  $region25: #{time_stretch_and_pitch_shift.4} parent=0 // pred_fallthru
    _
  // Predicated region
  $region26: #{time_stretch_and_pitch_shift.4} parent=0 // pred_check
    _
  $region27: #{time_stretch_and_pitch_shift.4} parent=0 // pred_check_branch
    %26 = sbr.rel (0) target = $region29
  $region28: #{time_stretch_and_pitch_shift.4} parent=0 // pred_region
    _
  $region29: #{time_stretch_and_pitch_shift.4} parent=0 // pred_fallthru
    _
  // Predicated region
  $region30: #{time_stretch_and_pitch_shift.4} parent=0 // pred_check
    _
  $region31: #{time_stretch_and_pitch_shift.4} parent=0 // pred_check_branch
    %28 = sbr.rel (0) target = $region33
  $region32: #{time_stretch_and_pitch_shift.4} parent=0 // pred_region
    _
  $region33: #{time_stretch_and_pitch_shift.4} parent=0 // pred_fallthru
    _
  %v29 = vld [vmem:[%s0] sm:$0xff]
  %v30 = vld [vmem:[%s0 + $0x8] sm:$0xff]
  %v31 = vld [vmem:[%s0 + $0x10] sm:$0xff]
  %v32 = vld [vmem:[%s0 + $0x18] sm:$0xff]
  %v33 = vld [vmem:[%s0 + $0x20] sm:$0xff]
  %v34 = vld [vmem:[%s0 + $0x28] sm:$0xff]
  %v35 = vld [vmem:[%s0 + $0x30] sm:$0xff]
  %v36 = vld [vmem:[%s0 + $0x38] sm:$0xff]
  %v37 = vld [vmem:[%s0 + $0x40] sm:$0xff]
  %v38 = vld [vmem:[%s0 + $0x48] sm:$0xff]
  %v39 = vld [vmem:[%s0 + $0x50] sm:$0xff]
  %v40 = vld [vmem:[%s0 + $0x58] sm:$0xff]
  %v41 = vld [vmem:[%s0 + $0x60] sm:$0xff]
  %v42 = vld [vmem:[%s0 + $0x68] sm:$0xff]
  %v43 = vld [vmem:[%s0 + $0x70] sm:$0xff]
  %v44 = vld [vmem:[%s0 + $0x78] sm:$0xff]
  %v45 = vld [vmem:[%s1] sm:$0xff]
  %v46 = vld [vmem:[%s1 + $0x8] sm:$0xff]
  %v47 = vld [vmem:[%s1 + $0x10] sm:$0xff]
  %v48 = vld [vmem:[%s1 + $0x18] sm:$0xff]
  %v49 = vld [vmem:[%s1 + $0x20] sm:$0xff]
  %v50 = vld [vmem:[%s1 + $0x28] sm:$0xff]
  %v51 = vld [vmem:[%s1 + $0x30] sm:$0xff]
  %v52 = vld [vmem:[%s1 + $0x38] sm:$0xff]
  %v53 = vld [vmem:[%s1 + $0x40] sm:$0xff]
  %v54 = vld [vmem:[%s1 + $0x48] sm:$0xff]
  %v55 = vld [vmem:[%s1 + $0x50] sm:$0xff]
  %v56 = vld [vmem:[%s1 + $0x58] sm:$0xff]
  %v57 = vld [vmem:[%s1 + $0x60] sm:$0xff]
  %v58 = vld [vmem:[%s1 + $0x68] sm:$0xff]
  %v59 = vld [vmem:[%s1 + $0x70] sm:$0xff]
  %v60 = vld [vmem:[%s1 + $0x78] sm:$0xff]
  %v61 = vld [vmem:[%s5] sm:$0x1]
  %v62 = vld [vmem:[%s3] sm:$0xff]
  %v63 = vld [vmem:[%s3 + $0x8] sm:$0xff]
  %v64 = vld [vmem:[%s3 + $0x10] sm:$0xff]
  %v65 = vld [vmem:[%s3 + $0x18] sm:$0xff]
  %v66 = vld [vmem:[%s3 + $0x20] sm:$0xff]
  %v67 = vld [vmem:[%s3 + $0x28] sm:$0xff]
  %v68 = vld [vmem:[%s3 + $0x30] sm:$0xff]
  %v69 = vld [vmem:[%s3 + $0x38] sm:$0xff]
  %v70 = vld [vmem:[%s4] sm:$0xff]
  %v71 = vld [vmem:[%s4 + $0x8] sm:$0xff]
  %v72 = vld [vmem:[%s4 + $0x10] sm:$0xff]
  %v73 = vld [vmem:[%s4 + $0x18] sm:$0xff]
  %v74 = vld [vmem:[%s4 + $0x20] sm:$0xff]
  %v75 = vld [vmem:[%s4 + $0x28] sm:$0xff]
  %v76 = vld [vmem:[%s4 + $0x30] sm:$0xff]
  %v77 = vld [vmem:[%s4 + $0x38] sm:$0xff]
  %v78 = vmul.f32 %v46, %v29
  %v79 = vmul.f32 %v48, %v31
  %v80 = vmul.f32 %v50, %v33
  %v81 = vmul.f32 %v52, %v35
  %v82 = vmul.f32 %v54, %v37
  %v83 = vmul.f32 %v56, %v39
  %v84 = vmul.f32 %v58, %v41
  %v85 = vmul.f32 %v60, %v43
  %v86 = vmul.f32 %v45, %v30
  %v87 = vmul.f32 %v47, %v32
  %v88 = vmul.f32 %v49, %v34
  %v89 = vmul.f32 %v51, %v36
  %v90 = vmul.f32 %v53, %v38
  %v91 = vmul.f32 %v55, %v40
  %v92 = vmul.f32 %v57, %v42
  %v93 = vmul.f32 %v59, %v44
  %v94 = vsub.f32 %v78, %v86
  %v95 = vsub.f32 %v79, %v87
  %v96 = vsub.f32 %v80, %v88
  %v97 = vsub.f32 %v81, %v89
  %v98 = vsub.f32 %v82, %v90
  %v99 = vsub.f32 %v83, %v91
  %v100 = vsub.f32 %v84, %v92
  %v101 = vsub.f32 %v85, %v93
  %v102 = vmul.f32 %v45, %v29
  %v103 = vmul.f32 %v47, %v31
  %v104 = vmul.f32 %v49, %v33
  %v105 = vmul.f32 %v51, %v35
  %v106 = vmul.f32 %v53, %v37
  %v107 = vmul.f32 %v55, %v39
  %v108 = vmul.f32 %v57, %v41
  %v109 = vmul.f32 %v59, %v43
  %v110 = vmul.f32 %v46, %v30
  %v111 = vmul.f32 %v48, %v32
  %v112 = vmul.f32 %v50, %v34
  %v113 = vmul.f32 %v52, %v36
  %v114 = vmul.f32 %v54, %v38
  %v115 = vmul.f32 %v56, %v40
  %v116 = vmul.f32 %v58, %v42
  %v117 = vmul.f32 %v60, %v44
  %v118 = vadd.f32 %v102, %v110
  %v119 = vadd.f32 %v103, %v111
  %v120 = vadd.f32 %v104, %v112
  %v121 = vadd.f32 %v105, %v113
  %v122 = vadd.f32 %v106, %v114
  %v123 = vadd.f32 %v107, %v115
  %v124 = vadd.f32 %v108, %v116
  %v125 = vadd.f32 %v109, %v117
  %v126 = vand.u32 2147483647, %v118
  %v127 = vand.u32 2147483647, %v94
  %v128 = vmin.f32 %v126, %v127
  %v129 = vmax.f32 %v126, %v127
  %v130 = vrcp.pop %v129
  %v131 = vmul.f32 %v128, %v130
  %v132 = vmul.f32 %v131, %v131
  %v133 = vmul.f32 0.002785687, %v132
  %v134 = vadd.f32 %v133, -0.015866
  %v135 = vmul.f32 %v134, %v132
  %v136 = vadd.f32 %v135, 0.04247222
  %v137 = vmul.f32 %v136, %v132
  %v138 = vadd.f32 %v137, -0.074975304
  %v139 = vmul.f32 %v138, %v132
  %v140 = vadd.f32 %v139, 0.1064488
  %v141 = vmul.f32 %v140, %v132
  %v142 = vadd.f32 %v141, -0.14207031
  %v143 = vmul.f32 %v142, %v132
  %v144 = vadd.f32 %v143, 0.19993454
  %v145 = vmul.f32 %v144, %v132
  %v146 = vadd.f32 %v145, -0.33333147
  %v147 = vmul.f32 %v146, %v132
  %v148 = vmul.f32 %v147, %v131
  %v149 = vadd.f32 %v148, %v131
  %vm150 = vcmp.gt.f32.partialorder %v127, %v126
  %v151 = vsub.f32 1.5707964, %v149
  %v152 = vsel %vm150, %v151, %v149
  %vm153 = vcmp.lt.f32.partialorder %v118, 0.0
  %v154 = vsub.f32 3.1415927, %v152
  %v155 = vsel %vm153, %v154, %v152
  %vm156 = vcmp.lt.s32.totalorder %v118, 0
  %v157 = vsel %vm156, 3.1415927, 0.0
  %vm158 = vcmp.eq.f32.partialorder %v94, 0.0
  %v159 = vsel %vm158, %v157, %v155
  %vm160 = vcmp.ne.f32.partialorder %v118, %v118
  %vm161 = vcmp.ne.f32.partialorder %v94, %v94
  %vm162 = vmor %vm160, %vm161
  %v163 = vsel %vm162, nan, %v159
  %vm164 = vcmp.lt.f32.partialorder %v118, 0.0
  %v165 = vsel %vm164, 2.3561945, 0.7853982
  %vm166 = vcmp.eq.s32.totalorder %v126, inf
  %vm167 = vcmp.eq.s32.totalorder %v127, inf
  %vm168 = vmand %vm166, %vm167
  %v169 = vsel %vm168, %v165, %v163
  %v170 = vand.u32 2147483647, %v169
  %v171 = vand.u32 %v94, 2147483648
  %v172 = vor.u32 %v170, %v171
  %v173 = vand.u32 2147483647, %v119
  %v174 = vand.u32 2147483647, %v95
  %v175 = vmin.f32 %v173, %v174
  %v176 = vmax.f32 %v173, %v174
  %v177 = vrcp.pop %v176
  %v178 = vmul.f32 %v175, %v177
  %v179 = vmul.f32 %v178, %v178
  %v180 = vmul.f32 0.002785687, %v179
  %v181 = vadd.f32 %v180, -0.015866
  %v182 = vmul.f32 %v181, %v179
  %v183 = vadd.f32 %v182, 0.04247222
  %v184 = vmul.f32 %v183, %v179
  %v185 = vadd.f32 %v184, -0.074975304
  %v186 = vmul.f32 %v185, %v179
  %v187 = vadd.f32 %v186, 0.1064488
  %v188 = vmul.f32 %v187, %v179
  %v189 = vadd.f32 %v188, -0.14207031
  %v190 = vmul.f32 %v189, %v179
  %v191 = vadd.f32 %v190, 0.19993454
  %v192 = vmul.f32 %v191, %v179
  %v193 = vadd.f32 %v192, -0.33333147
  %v194 = vmul.f32 %v193, %v179
  %v195 = vmul.f32 %v194, %v178
  %v196 = vadd.f32 %v195, %v178
  %vm197 = vcmp.gt.f32.partialorder %v174, %v173
  %v198 = vsub.f32 1.5707964, %v196
  %v199 = vsel %vm197, %v198, %v196
  %vm200 = vcmp.lt.f32.partialorder %v119, 0.0
  %v201 = vsub.f32 3.1415927, %v199
  %v202 = vsel %vm200, %v201, %v199
  %vm203 = vcmp.lt.s32.totalorder %v119, 0
  %v204 = vsel %vm203, 3.1415927, 0.0
  %vm205 = vcmp.eq.f32.partialorder %v95, 0.0
  %v206 = vsel %vm205, %v204, %v202
  %vm207 = vcmp.ne.f32.partialorder %v119, %v119
  %vm208 = vcmp.ne.f32.partialorder %v95, %v95
  %vm209 = vmor %vm207, %vm208
  %v210 = vsel %vm209, nan, %v206
  %vm211 = vcmp.lt.f32.partialorder %v119, 0.0
  %v212 = vsel %vm211, 2.3561945, 0.7853982
  %vm213 = vcmp.eq.s32.totalorder %v173, inf
  %vm214 = vcmp.eq.s32.totalorder %v174, inf
  %vm215 = vmand %vm213, %vm214
  %v216 = vsel %vm215, %v212, %v210
  %v217 = vand.u32 2147483647, %v216
  %v218 = vand.u32 %v95, 2147483648
  %v219 = vor.u32 %v217, %v218
  %v220 = vand.u32 2147483647, %v120
  %v221 = vand.u32 2147483647, %v96
  %v222 = vmin.f32 %v220, %v221
  %v223 = vmax.f32 %v220, %v221
  %v224 = vrcp.pop %v223
  %v225 = vmul.f32 %v222, %v224
  %v226 = vmul.f32 %v225, %v225
  %v227 = vmul.f32 0.002785687, %v226
  %v228 = vadd.f32 %v227, -0.015866
  %v229 = vmul.f32 %v228, %v226
  %v230 = vadd.f32 %v229, 0.04247222
  %v231 = vmul.f32 %v230, %v226
  %v232 = vadd.f32 %v231, -0.074975304
  %v233 = vmul.f32 %v232, %v226
  %v234 = vadd.f32 %v233, 0.1064488
  %v235 = vmul.f32 %v234, %v226
  %v236 = vadd.f32 %v235, -0.14207031
  %v237 = vmul.f32 %v236, %v226
  %v238 = vadd.f32 %v237, 0.19993454
  %v239 = vmul.f32 %v238, %v226
  %v240 = vadd.f32 %v239, -0.33333147
  %v241 = vmul.f32 %v240, %v226
  %v242 = vmul.f32 %v241, %v225
  %v243 = vadd.f32 %v242, %v225
  %vm244 = vcmp.gt.f32.partialorder %v221, %v220
  %v245 = vsub.f32 1.5707964, %v243
  %v246 = vsel %vm244, %v245, %v243
  %vm247 = vcmp.lt.f32.partialorder %v120, 0.0
  %v248 = vsub.f32 3.1415927, %v246
  %v249 = vsel %vm247, %v248, %v246
  %vm250 = vcmp.lt.s32.totalorder %v120, 0
  %v251 = vsel %vm250, 3.1415927, 0.0
  %vm252 = vcmp.eq.f32.partialorder %v96, 0.0
  %v253 = vsel %vm252, %v251, %v249
  %vm254 = vcmp.ne.f32.partialorder %v120, %v120
  %vm255 = vcmp.ne.f32.partialorder %v96, %v96
  %vm256 = vmor %vm254, %vm255
  %v257 = vsel %vm256, nan, %v253
  %vm258 = vcmp.lt.f32.partialorder %v120, 0.0
  %v259 = vsel %vm258, 2.3561945, 0.7853982
  %vm260 = vcmp.eq.s32.totalorder %v220, inf
  %vm261 = vcmp.eq.s32.totalorder %v221, inf
  %vm262 = vmand %vm260, %vm261
  %v263 = vsel %vm262, %v259, %v257
  %v264 = vand.u32 2147483647, %v263
  %v265 = vand.u32 %v96, 2147483648
  %v266 = vor.u32 %v264, %v265
  %v267 = vand.u32 2147483647, %v121
  %v268 = vand.u32 2147483647, %v97
  %v269 = vmin.f32 %v267, %v268
  %v270 = vmax.f32 %v267, %v268
  %v271 = vrcp.pop %v270
  %v272 = vmul.f32 %v269, %v271
  %v273 = vmul.f32 %v272, %v272
  %v274 = vmul.f32 0.002785687, %v273
  %v275 = vadd.f32 %v274, -0.015866
  %v276 = vmul.f32 %v275, %v273
  %v277 = vadd.f32 %v276, 0.04247222
  %v278 = vmul.f32 %v277, %v273
  %v279 = vadd.f32 %v278, -0.074975304
  %v280 = vmul.f32 %v279, %v273
  %v281 = vadd.f32 %v280, 0.1064488
  %v282 = vmul.f32 %v281, %v273
  %v283 = vadd.f32 %v282, -0.14207031
  %v284 = vmul.f32 %v283, %v273
  %v285 = vadd.f32 %v284, 0.19993454
  %v286 = vmul.f32 %v285, %v273
  %v287 = vadd.f32 %v286, -0.33333147
  %v288 = vmul.f32 %v287, %v273
  %v289 = vmul.f32 %v288, %v272
  %v290 = vadd.f32 %v289, %v272
  %vm291 = vcmp.gt.f32.partialorder %v268, %v267
  %v292 = vsub.f32 1.5707964, %v290
  %v293 = vsel %vm291, %v292, %v290
  %vm294 = vcmp.lt.f32.partialorder %v121, 0.0
  %v295 = vsub.f32 3.1415927, %v293
  %v296 = vsel %vm294, %v295, %v293
  %vm297 = vcmp.lt.s32.totalorder %v121, 0
  %v298 = vsel %vm297, 3.1415927, 0.0
  %vm299 = vcmp.eq.f32.partialorder %v97, 0.0
  %v300 = vsel %vm299, %v298, %v296
  %vm301 = vcmp.ne.f32.partialorder %v121, %v121
  %vm302 = vcmp.ne.f32.partialorder %v97, %v97
  %vm303 = vmor %vm301, %vm302
  %v304 = vsel %vm303, nan, %v300
  %vm305 = vcmp.lt.f32.partialorder %v121, 0.0
  %v306 = vsel %vm305, 2.3561945, 0.7853982
  %vm307 = vcmp.eq.s32.totalorder %v267, inf
  %vm308 = vcmp.eq.s32.totalorder %v268, inf
  %vm309 = vmand %vm307, %vm308
  %v310 = vsel %vm309, %v306, %v304
  %v311 = vand.u32 2147483647, %v310
  %v312 = vand.u32 %v97, 2147483648
  %v313 = vor.u32 %v311, %v312
  %v314 = vand.u32 2147483647, %v122
  %v315 = vand.u32 2147483647, %v98
  %v316 = vmin.f32 %v314, %v315
  %v317 = vmax.f32 %v314, %v315
  %v318 = vrcp.pop %v317
  %v319 = vmul.f32 %v316, %v318
  %v320 = vmul.f32 %v319, %v319
  %v321 = vmul.f32 0.002785687, %v320
  %v322 = vadd.f32 %v321, -0.015866
  %v323 = vmul.f32 %v322, %v320
  %v324 = vadd.f32 %v323, 0.04247222
  %v325 = vmul.f32 %v324, %v320
  %v326 = vadd.f32 %v325, -0.074975304
  %v327 = vmul.f32 %v326, %v320
  %v328 = vadd.f32 %v327, 0.1064488
  %v329 = vmul.f32 %v328, %v320
  %v330 = vadd.f32 %v329, -0.14207031
  %v331 = vmul.f32 %v330, %v320
  %v332 = vadd.f32 %v331, 0.19993454
  %v333 = vmul.f32 %v332, %v320
  %v334 = vadd.f32 %v333, -0.33333147
  %v335 = vmul.f32 %v334, %v320
  %v336 = vmul.f32 %v335, %v319
  %v337 = vadd.f32 %v336, %v319
  %vm338 = vcmp.gt.f32.partialorder %v315, %v314
  %v339 = vsub.f32 1.5707964, %v337
  %v340 = vsel %vm338, %v339, %v337
  %vm341 = vcmp.lt.f32.partialorder %v122, 0.0
  %v342 = vsub.f32 3.1415927, %v340
  %v343 = vsel %vm341, %v342, %v340
  %vm344 = vcmp.lt.s32.totalorder %v122, 0
  %v345 = vsel %vm344, 3.1415927, 0.0
  %vm346 = vcmp.eq.f32.partialorder %v98, 0.0
  %v347 = vsel %vm346, %v345, %v343
  %vm348 = vcmp.ne.f32.partialorder %v122, %v122
  %vm349 = vcmp.ne.f32.partialorder %v98, %v98
  %vm350 = vmor %vm348, %vm349
  %v351 = vsel %vm350, nan, %v347
  %vm352 = vcmp.lt.f32.partialorder %v122, 0.0
  %v353 = vsel %vm352, 2.3561945, 0.7853982
  %vm354 = vcmp.eq.s32.totalorder %v314, inf
  %vm355 = vcmp.eq.s32.totalorder %v315, inf
  %vm356 = vmand %vm354, %vm355
  %v357 = vsel %vm356, %v353, %v351
  %v358 = vand.u32 2147483647, %v357
  %v359 = vand.u32 %v98, 2147483648
  %v360 = vor.u32 %v358, %v359
  %v361 = vand.u32 2147483647, %v123
  %v362 = vand.u32 2147483647, %v99
  %v363 = vmin.f32 %v361, %v362
  %v364 = vmax.f32 %v361, %v362
  %v365 = vrcp.pop %v364
  %v366 = vmul.f32 %v363, %v365
  %v367 = vmul.f32 %v366, %v366
  %v368 = vmul.f32 0.002785687, %v367
  %v369 = vadd.f32 %v368, -0.015866
  %v370 = vmul.f32 %v369, %v367
  %v371 = vadd.f32 %v370, 0.04247222
  %v372 = vmul.f32 %v371, %v367
  %v373 = vadd.f32 %v372, -0.074975304
  %v374 = vmul.f32 %v373, %v367
  %v375 = vadd.f32 %v374, 0.1064488
  %v376 = vmul.f32 %v375, %v367
  %v377 = vadd.f32 %v376, -0.14207031
  %v378 = vmul.f32 %v377, %v367
  %v379 = vadd.f32 %v378, 0.19993454
  %v380 = vmul.f32 %v379, %v367
  %v381 = vadd.f32 %v380, -0.33333147
  %v382 = vmul.f32 %v381, %v367
  %v383 = vmul.f32 %v382, %v366
  %v384 = vadd.f32 %v383, %v366
  %vm385 = vcmp.gt.f32.partialorder %v362, %v361
  %v386 = vsub.f32 1.5707964, %v384
  %v387 = vsel %vm385, %v386, %v384
  %vm388 = vcmp.lt.f32.partialorder %v123, 0.0
  %v389 = vsub.f32 3.1415927, %v387
  %v390 = vsel %vm388, %v389, %v387
  %vm391 = vcmp.lt.s32.totalorder %v123, 0
  %v392 = vsel %vm391, 3.1415927, 0.0
  %vm393 = vcmp.eq.f32.partialorder %v99, 0.0
  %v394 = vsel %vm393, %v392, %v390
  %vm395 = vcmp.ne.f32.partialorder %v123, %v123
  %vm396 = vcmp.ne.f32.partialorder %v99, %v99
  %vm397 = vmor %vm395, %vm396
  %v398 = vsel %vm397, nan, %v394
  %vm399 = vcmp.lt.f32.partialorder %v123, 0.0
  %v400 = vsel %vm399, 2.3561945, 0.7853982
  %vm401 = vcmp.eq.s32.totalorder %v361, inf
  %vm402 = vcmp.eq.s32.totalorder %v362, inf
  %vm403 = vmand %vm401, %vm402
  %v404 = vsel %vm403, %v400, %v398
  %v405 = vand.u32 2147483647, %v404
  %v406 = vand.u32 %v99, 2147483648
  %v407 = vor.u32 %v405, %v406
  %v408 = vand.u32 2147483647, %v124
  %v409 = vand.u32 2147483647, %v100
  %v410 = vmin.f32 %v408, %v409
  %v411 = vmax.f32 %v408, %v409
  %v412 = vrcp.pop %v411
  %v413 = vmul.f32 %v410, %v412
  %v414 = vmul.f32 %v413, %v413
  %v415 = vmul.f32 0.002785687, %v414
  %v416 = vadd.f32 %v415, -0.015866
  %v417 = vmul.f32 %v416, %v414
  %v418 = vadd.f32 %v417, 0.04247222
  %v419 = vmul.f32 %v418, %v414
  %v420 = vadd.f32 %v419, -0.074975304
  %v421 = vmul.f32 %v420, %v414
  %v422 = vadd.f32 %v421, 0.1064488
  %v423 = vmul.f32 %v422, %v414
  %v424 = vadd.f32 %v423, -0.14207031
  %v425 = vmul.f32 %v424, %v414
  %v426 = vadd.f32 %v425, 0.19993454
  %v427 = vmul.f32 %v426, %v414
  %v428 = vadd.f32 %v427, -0.33333147
  %v429 = vmul.f32 %v428, %v414
  %v430 = vmul.f32 %v429, %v413
  %v431 = vadd.f32 %v430, %v413
  %vm432 = vcmp.gt.f32.partialorder %v409, %v408
  %v433 = vsub.f32 1.5707964, %v431
  %v434 = vsel %vm432, %v433, %v431
  %vm435 = vcmp.lt.f32.partialorder %v124, 0.0
  %v436 = vsub.f32 3.1415927, %v434
  %v437 = vsel %vm435, %v436, %v434
  %vm438 = vcmp.lt.s32.totalorder %v124, 0
  %v439 = vsel %vm438, 3.1415927, 0.0
  %vm440 = vcmp.eq.f32.partialorder %v100, 0.0
  %v441 = vsel %vm440, %v439, %v437
  %vm442 = vcmp.ne.f32.partialorder %v124, %v124
  %vm443 = vcmp.ne.f32.partialorder %v100, %v100
  %vm444 = vmor %vm442, %vm443
  %v445 = vsel %vm444, nan, %v441
  %vm446 = vcmp.lt.f32.partialorder %v124, 0.0
  %v447 = vsel %vm446, 2.3561945, 0.7853982
  %vm448 = vcmp.eq.s32.totalorder %v408, inf
  %vm449 = vcmp.eq.s32.totalorder %v409, inf
  %vm450 = vmand %vm448, %vm449
  %v451 = vsel %vm450, %v447, %v445
  %v452 = vand.u32 2147483647, %v451
  %v453 = vand.u32 %v100, 2147483648
  %v454 = vor.u32 %v452, %v453
  %v455 = vand.u32 2147483647, %v125
  %v456 = vand.u32 2147483647, %v101
  %v457 = vmin.f32 %v455, %v456
  %v458 = vmax.f32 %v455, %v456
  %v459 = vrcp.pop %v458
  %v460 = vmul.f32 %v457, %v459
  %v461 = vmul.f32 %v460, %v460
  %v462 = vmul.f32 0.002785687, %v461
  %v463 = vadd.f32 %v462, -0.015866
  %v464 = vmul.f32 %v463, %v461
  %v465 = vadd.f32 %v464, 0.04247222
  %v466 = vmul.f32 %v465, %v461
  %v467 = vadd.f32 %v466, -0.074975304
  %v468 = vmul.f32 %v467, %v461
  %v469 = vadd.f32 %v468, 0.1064488
  %v470 = vmul.f32 %v469, %v461
  %v471 = vadd.f32 %v470, -0.14207031
  %v472 = vmul.f32 %v471, %v461
  %v473 = vadd.f32 %v472, 0.19993454
  %v474 = vmul.f32 %v473, %v461
  %v475 = vadd.f32 %v474, -0.33333147
  %v476 = vmul.f32 %v475, %v461
  %v477 = vmul.f32 %v476, %v460
  %v478 = vadd.f32 %v477, %v460
  %vm479 = vcmp.gt.f32.partialorder %v456, %v455
  %v480 = vsub.f32 1.5707964, %v478
  %v481 = vsel %vm479, %v480, %v478
  %vm482 = vcmp.lt.f32.partialorder %v125, 0.0
  %v483 = vsub.f32 3.1415927, %v481
  %v484 = vsel %vm482, %v483, %v481
  %vm485 = vcmp.lt.s32.totalorder %v125, 0
  %v486 = vsel %vm485, 3.1415927, 0.0
  %vm487 = vcmp.eq.f32.partialorder %v101, 0.0
  %v488 = vsel %vm487, %v486, %v484
  %vm489 = vcmp.ne.f32.partialorder %v125, %v125
  %vm490 = vcmp.ne.f32.partialorder %v101, %v101
  %vm491 = vmor %vm489, %vm490
  %v492 = vsel %vm491, nan, %v488
  %vm493 = vcmp.lt.f32.partialorder %v125, 0.0
  %v494 = vsel %vm493, 2.3561945, 0.7853982
  %vm495 = vcmp.eq.s32.totalorder %v455, inf
  %vm496 = vcmp.eq.s32.totalorder %v456, inf
  %vm497 = vmand %vm495, %vm496
  %v498 = vsel %vm497, %v494, %v492
  %v499 = vand.u32 2147483647, %v498
  %v500 = vand.u32 %v101, 2147483648
  %v501 = vor.u32 %v499, %v500
  %v503 = vlaneseq
  %v504 = vshrl.u32 %v503, 7
  %v505 = vsub.s32 0, %v504
  %v506 = vrot.slane %v61, %v505
  %v508 = vsub.f32 %v172, %v506
  %v509 = vsub.f32 %v219, %v506
  %v510 = vsub.f32 %v266, %v506
  %v511 = vsub.f32 %v313, %v506
  %v512 = vsub.f32 %v360, %v506
  %v513 = vsub.f32 %v407, %v506
  %v514 = vsub.f32 %v454, %v506
  %v515 = vsub.f32 %v501, %v506
  %v516 = vmul.f32 %v508, 0.15915494
  %v517 = vmul.f32 %v509, 0.15915494
  %v518 = vmul.f32 %v510, 0.15915494
  %v519 = vmul.f32 %v511, 0.15915494
  %v520 = vmul.f32 %v512, 0.15915494
  %v521 = vmul.f32 %v513, 0.15915494
  %v522 = vmul.f32 %v514, 0.15915494
  %v523 = vmul.f32 %v515, 0.15915494
  %v524 = vadd.f32 %v516, 0.5
  %v525 = vadd.f32 %v517, 0.5
  %v526 = vadd.f32 %v518, 0.5
  %v527 = vadd.f32 %v519, 0.5
  %v528 = vadd.f32 %v520, 0.5
  %v529 = vadd.f32 %v521, 0.5
  %v530 = vadd.f32 %v522, 0.5
  %v531 = vadd.f32 %v523, 0.5
  %v532 = vfloor.f32 %v524
  %v533 = vfloor.f32 %v525
  %v534 = vfloor.f32 %v526
  %v535 = vfloor.f32 %v527
  %v536 = vfloor.f32 %v528
  %v537 = vfloor.f32 %v529
  %v538 = vfloor.f32 %v530
  %v539 = vfloor.f32 %v531
  %v540 = vmul.f32 %v532, 6.2831855
  %v541 = vmul.f32 %v533, 6.2831855
  %v542 = vmul.f32 %v534, 6.2831855
  %v543 = vmul.f32 %v535, 6.2831855
  %v544 = vmul.f32 %v536, 6.2831855
  %v545 = vmul.f32 %v537, 6.2831855
  %v546 = vmul.f32 %v538, 6.2831855
  %v547 = vmul.f32 %v539, 6.2831855
  %v548 = vsub.f32 %v508, %v540
  %v549 = vsub.f32 %v509, %v541
  %v550 = vsub.f32 %v510, %v542
  %v551 = vsub.f32 %v511, %v543
  %v552 = vsub.f32 %v512, %v544
  %v553 = vsub.f32 %v513, %v545
  %v554 = vsub.f32 %v514, %v546
  %v555 = vsub.f32 %v515, %v547
  %v556 = vadd.f32 %v548, %v506
  %v557 = vadd.f32 %v549, %v506
  %v558 = vadd.f32 %v550, %v506
  %v559 = vadd.f32 %v551, %v506
  %v560 = vadd.f32 %v552, %v506
  %v561 = vadd.f32 %v553, %v506
  %v562 = vadd.f32 %v554, %v506
  %v563 = vadd.f32 %v555, %v506
  %v564 = vrot.slane %v556, 7
  %v565 = vrot.slane %v557, 7
  %v566 = vrot.slane %v558, 7
  %v567 = vrot.slane %v559, 7
  %v568 = vrot.slane %v560, 7
  %v569 = vrot.slane %v561, 7
  %v570 = vrot.slane %v562, 7
  %v571 = vrot.slane %v563, 7
  %v572 = vlaneseq
  %v573 = vshrl.u32 %v572, 7
  %vm574 = vcmp.lt.s32.totalorder %v573, 1
  %v575 = vsel %vm574, %v570, %v571
  %v576 = vsel %vm574, %v569, %v570
  %v577 = vsel %vm574, %v568, %v569
  %v578 = vsel %vm574, %v567, %v568
  %v579 = vsel %vm574, %v566, %v567
  %v580 = vsel %vm574, %v565, %v566
  %v581 = vsel %vm574, %v564, %v565
  %v582 = vsel %vm574, %v571, %v564
  %vm583 = vcmp.ge.f32.partialorder %v70, 1.0
  %vm584 = vcmp.ge.f32.partialorder %v71, 1.0
  %vm585 = vcmp.ge.f32.partialorder %v72, 1.0
  %vm586 = vcmp.ge.f32.partialorder %v73, 1.0
  %vm587 = vcmp.ge.f32.partialorder %v74, 1.0
  %vm588 = vcmp.ge.f32.partialorder %v75, 1.0
  %vm589 = vcmp.ge.f32.partialorder %v76, 1.0
  %vm590 = vcmp.ge.f32.partialorder %v77, 1.0
  %v591 = vsel %vm583, 1, 0
  %v592 = vsel %vm584, 1, 0
  %v593 = vsel %vm585, 1, 0
  %v594 = vsel %vm586, 1, 0
  %v595 = vsel %vm587, 1, 0
  %v596 = vsel %vm588, 1, 0
  %v597 = vsel %vm589, 1, 0
  %v598 = vsel %vm590, 1, 0
  %v599 = vcvt.s32.f32 %v591
  %v600 = vcvt.s32.f32 %v592
  %v601 = vcvt.s32.f32 %v593
  %v602 = vcvt.s32.f32 %v594
  %v603 = vcvt.s32.f32 %v595
  %v604 = vcvt.s32.f32 %v596
  %v605 = vcvt.s32.f32 %v597
  %v606 = vcvt.s32.f32 %v598
  %608 = vset.pattern.permute.xlu0 0
  %609 = vperm.xlu0 %608, %v599
  %v610 = vpop.permute.xlu0 %609
  %613 = vset.pattern.permute.xlu0 0
  %614 = vperm.xlu0 %613, %v600
  %v615 = vpop.permute.xlu0 %614
  %618 = vset.pattern.permute.xlu0 0
  %619 = vperm.xlu0 %618, %v601
  %v620 = vpop.permute.xlu0 %619
  %623 = vset.pattern.permute.xlu0 0
  %624 = vperm.xlu0 %623, %v602
  %v625 = vpop.permute.xlu0 %624
  %628 = vset.pattern.permute.xlu0 0
  %629 = vperm.xlu0 %628, %v603
  %v630 = vpop.permute.xlu0 %629
  %633 = vset.pattern.permute.xlu0 0
  %634 = vperm.xlu0 %633, %v604
  %v635 = vpop.permute.xlu0 %634
  %638 = vset.pattern.permute.xlu0 0
  %639 = vperm.xlu0 %638, %v605
  %v640 = vpop.permute.xlu0 %639
  %643 = vset.pattern.permute.xlu0 0
  %644 = vperm.xlu0 %643, %v606
  %v645 = vpop.permute.xlu0 %644
  %v647 = vmul.f32 %v582, %v610
  %v648 = vmul.f32 %v581, %v615
  %v649 = vmul.f32 %v580, %v620
  %v650 = vmul.f32 %v579, %v625
  %v651 = vmul.f32 %v578, %v630
  %v652 = vmul.f32 %v577, %v635
  %v653 = vmul.f32 %v576, %v640
  %v654 = vmul.f32 %v575, %v645
  %v655 = vadd.f32 %v556, %v647
  %v656 = vadd.f32 %v557, %v648
  %v657 = vadd.f32 %v558, %v649
  %v658 = vadd.f32 %v559, %v650
  %v659 = vadd.f32 %v560, %v651
  %v660 = vadd.f32 %v561, %v652
  %v661 = vadd.f32 %v562, %v653
  %v662 = vadd.f32 %v563, %v654
  %v663 = vrot.slane %v655, 6
  %v664 = vrot.slane %v656, 6
  %v665 = vrot.slane %v657, 6
  %v666 = vrot.slane %v658, 6
  %v667 = vrot.slane %v659, 6
  %v668 = vrot.slane %v660, 6
  %v669 = vrot.slane %v661, 6
  %v670 = vrot.slane %v662, 6
  %vm671 = vcmp.lt.s32.totalorder %v573, 2
  %v672 = vsel %vm671, %v669, %v670
  %v673 = vsel %vm671, %v668, %v669
  %v674 = vsel %vm671, %v667, %v668
  %v675 = vsel %vm671, %v666, %v667
  %v676 = vsel %vm671, %v665, %v666
  %v677 = vsel %vm671, %v664, %v665
  %v678 = vsel %vm671, %v663, %v664
  %v679 = vsel %vm671, %v670, %v663
  %vm680 = vcmp.ge.f32.partialorder %v70, 2.0
  %vm681 = vcmp.ge.f32.partialorder %v71, 2.0
  %vm682 = vcmp.ge.f32.partialorder %v72, 2.0
  %vm683 = vcmp.ge.f32.partialorder %v73, 2.0
  %vm684 = vcmp.ge.f32.partialorder %v74, 2.0
  %vm685 = vcmp.ge.f32.partialorder %v75, 2.0
  %vm686 = vcmp.ge.f32.partialorder %v76, 2.0
  %vm687 = vcmp.ge.f32.partialorder %v77, 2.0
  %v688 = vsel %vm680, 1, 0
  %v689 = vsel %vm681, 1, 0
  %v690 = vsel %vm682, 1, 0
  %v691 = vsel %vm683, 1, 0
  %v692 = vsel %vm684, 1, 0
  %v693 = vsel %vm685, 1, 0
  %v694 = vsel %vm686, 1, 0
  %v695 = vsel %vm687, 1, 0
  %v696 = vcvt.s32.f32 %v688
  %v697 = vcvt.s32.f32 %v689
  %v698 = vcvt.s32.f32 %v690
  %v699 = vcvt.s32.f32 %v691
  %v700 = vcvt.s32.f32 %v692
  %v701 = vcvt.s32.f32 %v693
  %v702 = vcvt.s32.f32 %v694
  %v703 = vcvt.s32.f32 %v695
  %705 = vset.pattern.permute.xlu0 0
  %706 = vperm.xlu0 %705, %v696
  %v707 = vpop.permute.xlu0 %706
  %710 = vset.pattern.permute.xlu0 0
  %711 = vperm.xlu0 %710, %v697
  %v712 = vpop.permute.xlu0 %711
  %715 = vset.pattern.permute.xlu0 0
  %716 = vperm.xlu0 %715, %v698
  %v717 = vpop.permute.xlu0 %716
  %720 = vset.pattern.permute.xlu0 0
  %721 = vperm.xlu0 %720, %v699
  %v722 = vpop.permute.xlu0 %721
  %725 = vset.pattern.permute.xlu0 0
  %726 = vperm.xlu0 %725, %v700
  %v727 = vpop.permute.xlu0 %726
  %730 = vset.pattern.permute.xlu0 0
  %731 = vperm.xlu0 %730, %v701
  %v732 = vpop.permute.xlu0 %731
  %735 = vset.pattern.permute.xlu0 0
  %736 = vperm.xlu0 %735, %v702
  %v737 = vpop.permute.xlu0 %736
  %740 = vset.pattern.permute.xlu0 0
  %741 = vperm.xlu0 %740, %v703
  %v742 = vpop.permute.xlu0 %741
  %v744 = vmul.f32 %v679, %v707
  %v745 = vmul.f32 %v678, %v712
  %v746 = vmul.f32 %v677, %v717
  %v747 = vmul.f32 %v676, %v722
  %v748 = vmul.f32 %v675, %v727
  %v749 = vmul.f32 %v674, %v732
  %v750 = vmul.f32 %v673, %v737
  %v751 = vmul.f32 %v672, %v742
  %v752 = vadd.f32 %v655, %v744
  %v753 = vadd.f32 %v656, %v745
  %v754 = vadd.f32 %v657, %v746
  %v755 = vadd.f32 %v658, %v747
  %v756 = vadd.f32 %v659, %v748
  %v757 = vadd.f32 %v660, %v749
  %v758 = vadd.f32 %v661, %v750
  %v759 = vadd.f32 %v662, %v751
  %v760 = vrot.slane %v752, 4
  %v761 = vrot.slane %v753, 4
  %v762 = vrot.slane %v754, 4
  %v763 = vrot.slane %v755, 4
  %v764 = vrot.slane %v756, 4
  %v765 = vrot.slane %v757, 4
  %v766 = vrot.slane %v758, 4
  %v767 = vrot.slane %v759, 4
  %vm768 = vcmp.lt.s32.totalorder %v573, 4
  %v769 = vsel %vm768, %v766, %v767
  %v770 = vsel %vm768, %v765, %v766
  %v771 = vsel %vm768, %v764, %v765
  %v772 = vsel %vm768, %v763, %v764
  %v773 = vsel %vm768, %v762, %v763
  %v774 = vsel %vm768, %v761, %v762
  %v775 = vsel %vm768, %v760, %v761
  %v776 = vsel %vm768, %v767, %v760
  %vm777 = vcmp.ge.f32.partialorder %v70, 4.0
  %vm778 = vcmp.ge.f32.partialorder %v71, 4.0
  %vm779 = vcmp.ge.f32.partialorder %v72, 4.0
  %vm780 = vcmp.ge.f32.partialorder %v73, 4.0
  %vm781 = vcmp.ge.f32.partialorder %v74, 4.0
  %vm782 = vcmp.ge.f32.partialorder %v75, 4.0
  %vm783 = vcmp.ge.f32.partialorder %v76, 4.0
  %vm784 = vcmp.ge.f32.partialorder %v77, 4.0
  %v785 = vsel %vm777, 1, 0
  %v786 = vsel %vm778, 1, 0
  %v787 = vsel %vm779, 1, 0
  %v788 = vsel %vm780, 1, 0
  %v789 = vsel %vm781, 1, 0
  %v790 = vsel %vm782, 1, 0
  %v791 = vsel %vm783, 1, 0
  %v792 = vsel %vm784, 1, 0
  %v793 = vcvt.s32.f32 %v785
  %v794 = vcvt.s32.f32 %v786
  %v795 = vcvt.s32.f32 %v787
  %v796 = vcvt.s32.f32 %v788
  %v797 = vcvt.s32.f32 %v789
  %v798 = vcvt.s32.f32 %v790
  %v799 = vcvt.s32.f32 %v791
  %v800 = vcvt.s32.f32 %v792
  %802 = vset.pattern.permute.xlu0 0
  %803 = vperm.xlu0 %802, %v793
  %v804 = vpop.permute.xlu0 %803
  %807 = vset.pattern.permute.xlu0 0
  %808 = vperm.xlu0 %807, %v794
  %v809 = vpop.permute.xlu0 %808
  %812 = vset.pattern.permute.xlu0 0
  %813 = vperm.xlu0 %812, %v795
  %v814 = vpop.permute.xlu0 %813
  %817 = vset.pattern.permute.xlu0 0
  %818 = vperm.xlu0 %817, %v796
  %v819 = vpop.permute.xlu0 %818
  %822 = vset.pattern.permute.xlu0 0
  %823 = vperm.xlu0 %822, %v797
  %v824 = vpop.permute.xlu0 %823
  %827 = vset.pattern.permute.xlu0 0
  %828 = vperm.xlu0 %827, %v798
  %v829 = vpop.permute.xlu0 %828
  %832 = vset.pattern.permute.xlu0 0
  %833 = vperm.xlu0 %832, %v799
  %v834 = vpop.permute.xlu0 %833
  %837 = vset.pattern.permute.xlu0 0
  %838 = vperm.xlu0 %837, %v800
  %v839 = vpop.permute.xlu0 %838
  %v841 = vmul.f32 %v776, %v804
  %v842 = vmul.f32 %v775, %v809
  %v843 = vmul.f32 %v774, %v814
  %v844 = vmul.f32 %v773, %v819
  %v845 = vmul.f32 %v772, %v824
  %v846 = vmul.f32 %v771, %v829
  %v847 = vmul.f32 %v770, %v834
  %v848 = vmul.f32 %v769, %v839
  %v849 = vadd.f32 %v752, %v841
  %v850 = vadd.f32 %v753, %v842
  %v851 = vadd.f32 %v754, %v843
  %v852 = vadd.f32 %v755, %v844
  %v853 = vadd.f32 %v756, %v845
  %v854 = vadd.f32 %v757, %v846
  %v855 = vadd.f32 %v758, %v847
  %v856 = vadd.f32 %v759, %v848
  %vm857 = vcmp.ge.f32.partialorder %v70, 8.0
  %vm858 = vcmp.ge.f32.partialorder %v71, 8.0
  %vm859 = vcmp.ge.f32.partialorder %v72, 8.0
  %vm860 = vcmp.ge.f32.partialorder %v73, 8.0
  %vm861 = vcmp.ge.f32.partialorder %v74, 8.0
  %vm862 = vcmp.ge.f32.partialorder %v75, 8.0
  %vm863 = vcmp.ge.f32.partialorder %v76, 8.0
  %vm864 = vcmp.ge.f32.partialorder %v77, 8.0
  %v865 = vsel %vm857, 1, 0
  %v866 = vsel %vm858, 1, 0
  %v867 = vsel %vm859, 1, 0
  %v868 = vsel %vm860, 1, 0
  %v869 = vsel %vm861, 1, 0
  %v870 = vsel %vm862, 1, 0
  %v871 = vsel %vm863, 1, 0
  %v872 = vsel %vm864, 1, 0
  %v873 = vcvt.s32.f32 %v865
  %v874 = vcvt.s32.f32 %v866
  %v875 = vcvt.s32.f32 %v867
  %v876 = vcvt.s32.f32 %v868
  %v877 = vcvt.s32.f32 %v869
  %v878 = vcvt.s32.f32 %v870
  %v879 = vcvt.s32.f32 %v871
  %v880 = vcvt.s32.f32 %v872
  %882 = vset.pattern.permute.xlu0 0
  %883 = vperm.xlu0 %882, %v873
  %v884 = vpop.permute.xlu0 %883
  %887 = vset.pattern.permute.xlu0 0
  %888 = vperm.xlu0 %887, %v874
  %v889 = vpop.permute.xlu0 %888
  %892 = vset.pattern.permute.xlu0 0
  %893 = vperm.xlu0 %892, %v875
  %v894 = vpop.permute.xlu0 %893
  %897 = vset.pattern.permute.xlu0 0
  %898 = vperm.xlu0 %897, %v876
  %v899 = vpop.permute.xlu0 %898
  %902 = vset.pattern.permute.xlu0 0
  %903 = vperm.xlu0 %902, %v877
  %v904 = vpop.permute.xlu0 %903
  %907 = vset.pattern.permute.xlu0 0
  %908 = vperm.xlu0 %907, %v878
  %v909 = vpop.permute.xlu0 %908
  %912 = vset.pattern.permute.xlu0 0
  %913 = vperm.xlu0 %912, %v879
  %v914 = vpop.permute.xlu0 %913
  %917 = vset.pattern.permute.xlu0 0
  %918 = vperm.xlu0 %917, %v880
  %v919 = vpop.permute.xlu0 %918
  %v921 = vmul.f32 %v856, %v884
  %v922 = vmul.f32 %v849, %v889
  %v923 = vmul.f32 %v850, %v894
  %v924 = vmul.f32 %v851, %v899
  %v925 = vmul.f32 %v852, %v904
  %v926 = vmul.f32 %v853, %v909
  %v927 = vmul.f32 %v854, %v914
  %v928 = vmul.f32 %v855, %v919
  %v929 = vadd.f32 %v849, %v921
  %v930 = vadd.f32 %v850, %v922
  %v931 = vadd.f32 %v851, %v923
  %v932 = vadd.f32 %v852, %v924
  %v933 = vadd.f32 %v853, %v925
  %v934 = vadd.f32 %v854, %v926
  %v935 = vadd.f32 %v855, %v927
  %v936 = vadd.f32 %v856, %v928
  %vm937 = vcmp.ge.f32.partialorder %v70, 16.0
  %vm938 = vcmp.ge.f32.partialorder %v71, 16.0
  %vm939 = vcmp.ge.f32.partialorder %v72, 16.0
  %vm940 = vcmp.ge.f32.partialorder %v73, 16.0
  %vm941 = vcmp.ge.f32.partialorder %v74, 16.0
  %vm942 = vcmp.ge.f32.partialorder %v75, 16.0
  %vm943 = vcmp.ge.f32.partialorder %v76, 16.0
  %vm944 = vcmp.ge.f32.partialorder %v77, 16.0
  %v945 = vsel %vm937, 1, 0
  %v946 = vsel %vm938, 1, 0
  %v947 = vsel %vm939, 1, 0
  %v948 = vsel %vm940, 1, 0
  %v949 = vsel %vm941, 1, 0
  %v950 = vsel %vm942, 1, 0
  %v951 = vsel %vm943, 1, 0
  %v952 = vsel %vm944, 1, 0
  %v953 = vcvt.s32.f32 %v945
  %v954 = vcvt.s32.f32 %v946
  %v955 = vcvt.s32.f32 %v947
  %v956 = vcvt.s32.f32 %v948
  %v957 = vcvt.s32.f32 %v949
  %v958 = vcvt.s32.f32 %v950
  %v959 = vcvt.s32.f32 %v951
  %v960 = vcvt.s32.f32 %v952
  %962 = vset.pattern.permute.xlu0 0
  %963 = vperm.xlu0 %962, %v953
  %v964 = vpop.permute.xlu0 %963
  %967 = vset.pattern.permute.xlu0 0
  %968 = vperm.xlu0 %967, %v954
  %v969 = vpop.permute.xlu0 %968
  %972 = vset.pattern.permute.xlu0 0
  %973 = vperm.xlu0 %972, %v955
  %v974 = vpop.permute.xlu0 %973
  %977 = vset.pattern.permute.xlu0 0
  %978 = vperm.xlu0 %977, %v956
  %v979 = vpop.permute.xlu0 %978
  %982 = vset.pattern.permute.xlu0 0
  %983 = vperm.xlu0 %982, %v957
  %v984 = vpop.permute.xlu0 %983
  %987 = vset.pattern.permute.xlu0 0
  %988 = vperm.xlu0 %987, %v958
  %v989 = vpop.permute.xlu0 %988
  %992 = vset.pattern.permute.xlu0 0
  %993 = vperm.xlu0 %992, %v959
  %v994 = vpop.permute.xlu0 %993
  %997 = vset.pattern.permute.xlu0 0
  %998 = vperm.xlu0 %997, %v960
  %v999 = vpop.permute.xlu0 %998
  %v1001 = vmul.f32 %v935, %v964
  %v1002 = vmul.f32 %v936, %v969
  %v1003 = vmul.f32 %v929, %v974
  %v1004 = vmul.f32 %v930, %v979
  %v1005 = vmul.f32 %v931, %v984
  %v1006 = vmul.f32 %v932, %v989
  %v1007 = vmul.f32 %v933, %v994
  %v1008 = vmul.f32 %v934, %v999
  %v1009 = vadd.f32 %v929, %v1001
  %v1010 = vadd.f32 %v930, %v1002
  %v1011 = vadd.f32 %v931, %v1003
  %v1012 = vadd.f32 %v932, %v1004
  %v1013 = vadd.f32 %v933, %v1005
  %v1014 = vadd.f32 %v934, %v1006
  %v1015 = vadd.f32 %v935, %v1007
  %v1016 = vadd.f32 %v936, %v1008
  %v1017 = vld [vmem:[%s2] sm:$0xff]
  %v1018 = vld [vmem:[%s2 + $0x8] sm:$0xff]
  %v1019 = vld [vmem:[%s2 + $0x10] sm:$0xff]
  %v1020 = vld [vmem:[%s2 + $0x18] sm:$0xff]
  %v1021 = vld [vmem:[%s2 + $0x20] sm:$0xff]
  %v1022 = vld [vmem:[%s2 + $0x28] sm:$0xff]
  %v1023 = vld [vmem:[%s2 + $0x30] sm:$0xff]
  %v1024 = vld [vmem:[%s2 + $0x38] sm:$0xff]
  %v1025 = vsub.f32 %v1009, %v556
  %v1026 = vsub.f32 %v1010, %v557
  %v1027 = vsub.f32 %v1011, %v558
  %v1028 = vsub.f32 %v1012, %v559
  %v1029 = vsub.f32 %v1013, %v560
  %v1030 = vsub.f32 %v1014, %v561
  %v1031 = vsub.f32 %v1015, %v562
  %v1032 = vsub.f32 %v1016, %v563
  %v1033 = vadd.f32 %v1017, %v1025
  %v1034 = vadd.f32 %v1018, %v1026
  %v1035 = vadd.f32 %v1019, %v1027
  %v1036 = vadd.f32 %v1020, %v1028
  %v1037 = vadd.f32 %v1021, %v1029
  %v1038 = vadd.f32 %v1022, %v1030
  %v1039 = vadd.f32 %v1023, %v1031
  %v1040 = vadd.f32 %v1024, %v1032
  %v1041 = vmul.f32 %v29, %v29
  %v1042 = vmul.f32 %v31, %v31
  %v1043 = vmul.f32 %v33, %v33
  %v1044 = vmul.f32 %v35, %v35
  %v1045 = vmul.f32 %v37, %v37
  %v1046 = vmul.f32 %v39, %v39
  %v1047 = vmul.f32 %v41, %v41
  %v1048 = vmul.f32 %v43, %v43
  %v1049 = vmul.f32 %v30, %v30
  %v1050 = vmul.f32 %v32, %v32
  %v1051 = vmul.f32 %v34, %v34
  %v1052 = vmul.f32 %v36, %v36
  %v1053 = vmul.f32 %v38, %v38
  %v1054 = vmul.f32 %v40, %v40
  %v1055 = vmul.f32 %v42, %v42
  %v1056 = vmul.f32 %v44, %v44
  %v1057 = vadd.f32 %v1041, %v1049
  %v1058 = vadd.f32 %v1042, %v1050
  %v1059 = vadd.f32 %v1043, %v1051
  %v1060 = vadd.f32 %v1044, %v1052
  %v1061 = vadd.f32 %v1045, %v1053
  %v1062 = vadd.f32 %v1046, %v1054
  %v1063 = vadd.f32 %v1047, %v1055
  %v1064 = vadd.f32 %v1048, %v1056
  %v1065 = vrsqrt.pop %v1057
  %v1066 = vmul.f32 %v1057, %v1065
  %vm1067 = vcmp.eq.f32.partialorder %v1057, inf
  %v1068 = vsel %vm1067, %v1057, %v1066
  %vm1069 = vcmp.eq.f32.partialorder %v1057, 0.0
  %v1070 = vand.u32 %v1057, 2147483648
  %v1071 = vsel %vm1069, %v1070, %v1068
  %v1072 = vrsqrt.pop %v1058
  %v1073 = vmul.f32 %v1058, %v1072
  %vm1074 = vcmp.eq.f32.partialorder %v1058, inf
  %v1075 = vsel %vm1074, %v1058, %v1073
  %vm1076 = vcmp.eq.f32.partialorder %v1058, 0.0
  %v1077 = vand.u32 %v1058, 2147483648
  %v1078 = vsel %vm1076, %v1077, %v1075
  %v1079 = vrsqrt.pop %v1059
  %v1080 = vmul.f32 %v1059, %v1079
  %vm1081 = vcmp.eq.f32.partialorder %v1059, inf
  %v1082 = vsel %vm1081, %v1059, %v1080
  %vm1083 = vcmp.eq.f32.partialorder %v1059, 0.0
  %v1084 = vand.u32 %v1059, 2147483648
  %v1085 = vsel %vm1083, %v1084, %v1082
  %v1086 = vrsqrt.pop %v1060
  %v1087 = vmul.f32 %v1060, %v1086
  %vm1088 = vcmp.eq.f32.partialorder %v1060, inf
  %v1089 = vsel %vm1088, %v1060, %v1087
  %vm1090 = vcmp.eq.f32.partialorder %v1060, 0.0
  %v1091 = vand.u32 %v1060, 2147483648
  %v1092 = vsel %vm1090, %v1091, %v1089
  %v1093 = vrsqrt.pop %v1061
  %v1094 = vmul.f32 %v1061, %v1093
  %vm1095 = vcmp.eq.f32.partialorder %v1061, inf
  %v1096 = vsel %vm1095, %v1061, %v1094
  %vm1097 = vcmp.eq.f32.partialorder %v1061, 0.0
  %v1098 = vand.u32 %v1061, 2147483648
  %v1099 = vsel %vm1097, %v1098, %v1096
  %v1100 = vrsqrt.pop %v1062
  %v1101 = vmul.f32 %v1062, %v1100
  %vm1102 = vcmp.eq.f32.partialorder %v1062, inf
  %v1103 = vsel %vm1102, %v1062, %v1101
  %vm1104 = vcmp.eq.f32.partialorder %v1062, 0.0
  %v1105 = vand.u32 %v1062, 2147483648
  %v1106 = vsel %vm1104, %v1105, %v1103
  %v1107 = vrsqrt.pop %v1063
  %v1108 = vmul.f32 %v1063, %v1107
  %vm1109 = vcmp.eq.f32.partialorder %v1063, inf
  %v1110 = vsel %vm1109, %v1063, %v1108
  %vm1111 = vcmp.eq.f32.partialorder %v1063, 0.0
  %v1112 = vand.u32 %v1063, 2147483648
  %v1113 = vsel %vm1111, %v1112, %v1110
  %v1114 = vrsqrt.pop %v1064
  %v1115 = vmul.f32 %v1064, %v1114
  %vm1116 = vcmp.eq.f32.partialorder %v1064, inf
  %v1117 = vsel %vm1116, %v1064, %v1115
  %vm1118 = vcmp.eq.f32.partialorder %v1064, 0.0
  %v1119 = vand.u32 %v1064, 2147483648
  %v1120 = vsel %vm1118, %v1119, %v1117
  %v1121 = vmul.f32 %v45, %v45
  %v1122 = vmul.f32 %v47, %v47
  %v1123 = vmul.f32 %v49, %v49
  %v1124 = vmul.f32 %v51, %v51
  %v1125 = vmul.f32 %v53, %v53
  %v1126 = vmul.f32 %v55, %v55
  %v1127 = vmul.f32 %v57, %v57
  %v1128 = vmul.f32 %v59, %v59
  %v1129 = vmul.f32 %v46, %v46
  %v1130 = vmul.f32 %v48, %v48
  %v1131 = vmul.f32 %v50, %v50
  %v1132 = vmul.f32 %v52, %v52
  %v1133 = vmul.f32 %v54, %v54
  %v1134 = vmul.f32 %v56, %v56
  %v1135 = vmul.f32 %v58, %v58
  %v1136 = vmul.f32 %v60, %v60
  %v1137 = vadd.f32 %v1121, %v1129
  %v1138 = vadd.f32 %v1122, %v1130
  %v1139 = vadd.f32 %v1123, %v1131
  %v1140 = vadd.f32 %v1124, %v1132
  %v1141 = vadd.f32 %v1125, %v1133
  %v1142 = vadd.f32 %v1126, %v1134
  %v1143 = vadd.f32 %v1127, %v1135
  %v1144 = vadd.f32 %v1128, %v1136
  %v1145 = vrsqrt.pop %v1137
  %v1146 = vmul.f32 %v1137, %v1145
  %vm1147 = vcmp.eq.f32.partialorder %v1137, inf
  %v1148 = vsel %vm1147, %v1137, %v1146
  %vm1149 = vcmp.eq.f32.partialorder %v1137, 0.0
  %v1150 = vand.u32 %v1137, 2147483648
  %v1151 = vsel %vm1149, %v1150, %v1148
  %v1152 = vrsqrt.pop %v1138
  %v1153 = vmul.f32 %v1138, %v1152
  %vm1154 = vcmp.eq.f32.partialorder %v1138, inf
  %v1155 = vsel %vm1154, %v1138, %v1153
  %vm1156 = vcmp.eq.f32.partialorder %v1138, 0.0
  %v1157 = vand.u32 %v1138, 2147483648
  %v1158 = vsel %vm1156, %v1157, %v1155
  %v1159 = vrsqrt.pop %v1139
  %v1160 = vmul.f32 %v1139, %v1159
  %vm1161 = vcmp.eq.f32.partialorder %v1139, inf
  %v1162 = vsel %vm1161, %v1139, %v1160
  %vm1163 = vcmp.eq.f32.partialorder %v1139, 0.0
  %v1164 = vand.u32 %v1139, 2147483648
  %v1165 = vsel %vm1163, %v1164, %v1162
  %v1166 = vrsqrt.pop %v1140
  %v1167 = vmul.f32 %v1140, %v1166
  %vm1168 = vcmp.eq.f32.partialorder %v1140, inf
  %v1169 = vsel %vm1168, %v1140, %v1167
  %vm1170 = vcmp.eq.f32.partialorder %v1140, 0.0
  %v1171 = vand.u32 %v1140, 2147483648
  %v1172 = vsel %vm1170, %v1171, %v1169
  %v1173 = vrsqrt.pop %v1141
  %v1174 = vmul.f32 %v1141, %v1173
  %vm1175 = vcmp.eq.f32.partialorder %v1141, inf
  %v1176 = vsel %vm1175, %v1141, %v1174
  %vm1177 = vcmp.eq.f32.partialorder %v1141, 0.0
  %v1178 = vand.u32 %v1141, 2147483648
  %v1179 = vsel %vm1177, %v1178, %v1176
  %v1180 = vrsqrt.pop %v1142
  %v1181 = vmul.f32 %v1142, %v1180
  %vm1182 = vcmp.eq.f32.partialorder %v1142, inf
  %v1183 = vsel %vm1182, %v1142, %v1181
  %vm1184 = vcmp.eq.f32.partialorder %v1142, 0.0
  %v1185 = vand.u32 %v1142, 2147483648
  %v1186 = vsel %vm1184, %v1185, %v1183
  %v1187 = vrsqrt.pop %v1143
  %v1188 = vmul.f32 %v1143, %v1187
  %vm1189 = vcmp.eq.f32.partialorder %v1143, inf
  %v1190 = vsel %vm1189, %v1143, %v1188
  %vm1191 = vcmp.eq.f32.partialorder %v1143, 0.0
  %v1192 = vand.u32 %v1143, 2147483648
  %v1193 = vsel %vm1191, %v1192, %v1190
  %v1194 = vrsqrt.pop %v1144
  %v1195 = vmul.f32 %v1144, %v1194
  %vm1196 = vcmp.eq.f32.partialorder %v1144, inf
  %v1197 = vsel %vm1196, %v1144, %v1195
  %vm1198 = vcmp.eq.f32.partialorder %v1144, 0.0
  %v1199 = vand.u32 %v1144, 2147483648
  %v1200 = vsel %vm1198, %v1199, %v1197
  %1202 = vset.pattern.permute.xlu0 0
  %1203 = vperm.xlu0 %1202, %v62
  %v1204 = vpop.permute.xlu0 %1203
  %1207 = vset.pattern.permute.xlu0 0
  %1208 = vperm.xlu0 %1207, %v63
  %v1209 = vpop.permute.xlu0 %1208
  %1212 = vset.pattern.permute.xlu0 0
  %1213 = vperm.xlu0 %1212, %v64
  %v1214 = vpop.permute.xlu0 %1213
  %1217 = vset.pattern.permute.xlu0 0
  %1218 = vperm.xlu0 %1217, %v65
  %v1219 = vpop.permute.xlu0 %1218
  %1222 = vset.pattern.permute.xlu0 0
  %1223 = vperm.xlu0 %1222, %v66
  %v1224 = vpop.permute.xlu0 %1223
  %1227 = vset.pattern.permute.xlu0 0
  %1228 = vperm.xlu0 %1227, %v67
  %v1229 = vpop.permute.xlu0 %1228
  %1232 = vset.pattern.permute.xlu0 0
  %1233 = vperm.xlu0 %1232, %v68
  %v1234 = vpop.permute.xlu0 %1233
  %1237 = vset.pattern.permute.xlu0 0
  %1238 = vperm.xlu0 %1237, %v69
  %v1239 = vpop.permute.xlu0 %1238
  %v1241 = vmul.f32 %v1204, %v1151
  %v1242 = vmul.f32 %v1209, %v1158
  %v1243 = vmul.f32 %v1214, %v1165
  %v1244 = vmul.f32 %v1219, %v1172
  %v1245 = vmul.f32 %v1224, %v1179
  %v1246 = vmul.f32 %v1229, %v1186
  %v1247 = vmul.f32 %v1234, %v1193
  %v1248 = vmul.f32 %v1239, %v1200
  %v1249 = vsub.f32 1.0, %v62
  %v1250 = vsub.f32 1.0, %v63
  %v1251 = vsub.f32 1.0, %v64
  %v1252 = vsub.f32 1.0, %v65
  %v1253 = vsub.f32 1.0, %v66
  %v1254 = vsub.f32 1.0, %v67
  %v1255 = vsub.f32 1.0, %v68
  %v1256 = vsub.f32 1.0, %v69
  %1258 = vset.pattern.permute.xlu0 0
  %1259 = vperm.xlu0 %1258, %v1249
  %v1260 = vpop.permute.xlu0 %1259
  %1263 = vset.pattern.permute.xlu0 0
  %1264 = vperm.xlu0 %1263, %v1250
  %v1265 = vpop.permute.xlu0 %1264
  %1268 = vset.pattern.permute.xlu0 0
  %1269 = vperm.xlu0 %1268, %v1251
  %v1270 = vpop.permute.xlu0 %1269
  %1273 = vset.pattern.permute.xlu0 0
  %1274 = vperm.xlu0 %1273, %v1252
  %v1275 = vpop.permute.xlu0 %1274
  %1278 = vset.pattern.permute.xlu0 0
  %1279 = vperm.xlu0 %1278, %v1253
  %v1280 = vpop.permute.xlu0 %1279
  %1283 = vset.pattern.permute.xlu0 0
  %1284 = vperm.xlu0 %1283, %v1254
  %v1285 = vpop.permute.xlu0 %1284
  %1288 = vset.pattern.permute.xlu0 0
  %1289 = vperm.xlu0 %1288, %v1255
  %v1290 = vpop.permute.xlu0 %1289
  %1293 = vset.pattern.permute.xlu0 0
  %1294 = vperm.xlu0 %1293, %v1256
  %v1295 = vpop.permute.xlu0 %1294
  %v1297 = vmul.f32 %v1260, %v1071
  %v1298 = vmul.f32 %v1265, %v1078
  %v1299 = vmul.f32 %v1270, %v1085
  %v1300 = vmul.f32 %v1275, %v1092
  %v1301 = vmul.f32 %v1280, %v1099
  %v1302 = vmul.f32 %v1285, %v1106
  %v1303 = vmul.f32 %v1290, %v1113
  %v1304 = vmul.f32 %v1295, %v1120
  %v1305 = vadd.f32 %v1241, %v1297
  %v1306 = vadd.f32 %v1242, %v1298
  %v1307 = vadd.f32 %v1243, %v1299
  %v1308 = vadd.f32 %v1244, %v1300
  %v1309 = vadd.f32 %v1245, %v1301
  %v1310 = vadd.f32 %v1246, %v1302
  %v1311 = vadd.f32 %v1247, %v1303
  %v1312 = vadd.f32 %v1248, %v1304
  %v1313 = vand.u32 2147483647, %v1033
  %vm1314 = vcmp.le.f32.partialorder %v1313, 0.7853982
  %vm1315 = vcmp.lt.s32.totalorder %v1033, 0
  %v1316 = vand.u32 %v1033, 2139095040
  %v1317 = vshrl.u32 %v1316, 23
  %v1318 = vsub.s32 %v1317, 127
  %v1319 = vand.u32 2147483647, %v1033
  %v1320 = vand.u32 %v1319, 8388607
  %v1321 = vor.u32 %v1320, 8388608
  %v1322 = vsub.s32 0, %v1321
  %v1323 = vadd.s32 %v1318, 1
  %vm1324 = vcmp.gt.s32.totalorder %v1323, 0
  %v1325 = vsel %vm1324, %v1323, 0
  %v1326 = vshrl.u32 %v1325, 5
  %v1327 = vand.u32 %v1325, 31
  %v1328 = vsub.s32 32, %v1327
  %v1329 = vshrl.u32 683565275, %v1328
  %v1330 = vshll.u32 683565275, %v1327
  %v1331 = vshrl.u32 2475754826, %v1328
  %v1332 = vor.u32 %v1330, %v1331
  %v1333 = vshll.u32 2475754826, %v1327
  %v1334 = vshrl.u32 2131351028, %v1328
  %v1335 = vor.u32 %v1333, %v1334
  %v1336 = vshll.u32 2131351028, %v1327
  %v1337 = vshrl.u32 2102212464, %v1328
  %v1338 = vor.u32 %v1336, %v1337
  %v1339 = vshll.u32 2102212464, %v1327
  %v1340 = vshrl.u32 920167782, %v1328
  %v1341 = vor.u32 %v1339, %v1340
  %v1342 = vshll.u32 920167782, %v1327
  %v1343 = vshrl.u32 1326507024, %v1328
  %v1344 = vor.u32 %v1342, %v1343
  %vm1345 = vcmp.lt.s32.totalorder %v1326, 1
  %vm1346 = vcmp.lt.s32.totalorder %v1326, 2
  %vm1347 = vcmp.lt.s32.totalorder %v1326, 3
  %vm1348 = vcmp.lt.s32.totalorder %v1326, 4
  %v1349 = vsel %vm1345, %v1329, %v1332
  %v1350 = vsel %vm1348, %v1338, 2102212464
  %v1351 = vsel %vm1347, %v1335, %v1350
  %v1352 = vsel %vm1346, %v1349, %v1351
  %v1353 = vsel %vm1345, %v1332, %v1335
  %v1354 = vsel %vm1348, %v1341, 920167782
  %v1355 = vsel %vm1347, %v1338, %v1354
  %v1356 = vsel %vm1346, %v1353, %v1355
  %v1357 = vsel %vm1345, %v1335, %v1338
  %v1358 = vsel %vm1348, %v1344, 1326507024
  %v1359 = vsel %vm1347, %v1341, %v1358
  %v1360 = vsel %vm1346, %v1357, %v1359
  %v1361 = vshll.u32 %v1321, 8
  %v1362 = vmul.u32.u64.compose %v1361, %v1360
  %v1363 = vextract.low.u32 %v1362
  %v1364 = vextract.high.u32 %v1362
  %v1365 = vmul.u32.u64.compose %v1361, %v1356
  %v1366 = vextract.low.u32 %v1365
  %v1367 = vextract.high.u32 %v1365
  %v1368 = vmul.u32 %v1361, %v1352
  %v1369 = vadd.s32 %v1364, %v1366
  %vm1370 = vc.u32 %v1364, %v1366
  %v1371 = vadd.s32 %v1367, 1
  %v1372 = vsel %vm1370, %v1371, %v1367
  %v1373 = vadd.s32 %v1368, %v1372
  %v1374 = vadd.s32 %v1373, 536870912
  %v1375 = vshrl.u32 %v1374, 30
  %v1376 = vshll.u32 %v1375, 30
  %v1377 = vsub.s32 %v1373, %v1376
  %vm1378 = vcmp.lt.s32.totalorder %v1377, 0
  %v1379 = vsub.s32 0, %v1377
  %v1380 = vsel %vm1378, %v1379, %v1377
  %v1381 = vclz %v1380
  %v1382 = vsub.s32 %v1381, 2
  %vm1383 = vcmp.gt.s32.totalorder 0, %v1382
  %v1384 = vsel %vm1383, 0, %v1382
  %v1385 = vsub.s32 32, %v1384
  %v1386 = vshll.u32 %v1377, %v1384
  %v1387 = vshrl.u32 %v1369, %v1385
  %v1388 = vor.u32 %v1386, %v1387
  %v1389 = vsub.s32 4294967266, %v1384
  %v1390 = vadd.s32 %v1389, 127
  %v1391 = vshll.u32 %v1390, 23
  %v1392 = vor.u32 4788187, %v1391
  %v1393 = vand.u32 2147483647, %v1392
  %v1395 = vcvt.s32.f32 %v1388
  %v1396 = vmul.f32 %v1395, %v1393
  %v1397 = vxor.u32 %v1396, 2147483648
  %v1398 = vsel %vm1315, %v1397, %v1396
  %v1399 = vsub.s32 4, %v1375
  %v1400 = vsel %vm1315, %v1399, %v1375
  %v1401 = vsel %vm1314, %v1033, %v1398
  %v1402 = vsel %vm1314, 0, %v1400
  %v1403 = vcosq.f32.pop %v1401
  %v1404 = vsinq.f32.pop %v1401
  %vm1405 = vweird.f32 %v1033
  %v1406 = vand.u32 %v1402, 3
  %vm1407 = vcmp.lt.s32.totalorder %v1406, 2
  %vm1408 = vcmp.eq.s32.totalorder %v1406, 0
  %v1409 = vxor.u32 %v1404, 2147483648
  %v1410 = vsel %vm1408, %v1403, %v1409
  %vm1411 = vcmp.eq.s32.totalorder %v1406, 2
  %v1412 = vxor.u32 %v1403, 2147483648
  %v1413 = vsel %vm1411, %v1412, %v1404
  %v1414 = vsel %vm1407, %v1410, %v1413
  %v1415 = vsel %vm1405, nan, %v1414
  %v1416 = vand.u32 2147483647, %v1034
  %vm1417 = vcmp.le.f32.partialorder %v1416, 0.7853982
  %vm1418 = vcmp.lt.s32.totalorder %v1034, 0
  %v1419 = vand.u32 %v1034, 2139095040
  %v1420 = vshrl.u32 %v1419, 23
  %v1421 = vsub.s32 %v1420, 127
  %v1422 = vand.u32 2147483647, %v1034
  %v1423 = vand.u32 %v1422, 8388607
  %v1424 = vor.u32 %v1423, 8388608
  %v1425 = vsub.s32 0, %v1424
  %v1426 = vadd.s32 %v1421, 1
  %vm1427 = vcmp.gt.s32.totalorder %v1426, 0
  %v1428 = vsel %vm1427, %v1426, 0
  %v1429 = vshrl.u32 %v1428, 5
  %v1430 = vand.u32 %v1428, 31
  %v1431 = vsub.s32 32, %v1430
  %v1432 = vshrl.u32 683565275, %v1431
  %v1433 = vshll.u32 683565275, %v1430
  %v1434 = vshrl.u32 2475754826, %v1431
  %v1435 = vor.u32 %v1433, %v1434
  %v1436 = vshll.u32 2475754826, %v1430
  %v1437 = vshrl.u32 2131351028, %v1431
  %v1438 = vor.u32 %v1436, %v1437
  %v1439 = vshll.u32 2131351028, %v1430
  %v1440 = vshrl.u32 2102212464, %v1431
  %v1441 = vor.u32 %v1439, %v1440
  %v1442 = vshll.u32 2102212464, %v1430
  %v1443 = vshrl.u32 920167782, %v1431
  %v1444 = vor.u32 %v1442, %v1443
  %v1445 = vshll.u32 920167782, %v1430
  %v1446 = vshrl.u32 1326507024, %v1431
  %v1447 = vor.u32 %v1445, %v1446
  %vm1448 = vcmp.lt.s32.totalorder %v1429, 1
  %vm1449 = vcmp.lt.s32.totalorder %v1429, 2
  %vm1450 = vcmp.lt.s32.totalorder %v1429, 3
  %vm1451 = vcmp.lt.s32.totalorder %v1429, 4
  %v1452 = vsel %vm1448, %v1432, %v1435
  %v1453 = vsel %vm1451, %v1441, 2102212464
  %v1454 = vsel %vm1450, %v1438, %v1453
  %v1455 = vsel %vm1449, %v1452, %v1454
  %v1456 = vsel %vm1448, %v1435, %v1438
  %v1457 = vsel %vm1451, %v1444, 920167782
  %v1458 = vsel %vm1450, %v1441, %v1457
  %v1459 = vsel %vm1449, %v1456, %v1458
  %v1460 = vsel %vm1448, %v1438, %v1441
  %v1461 = vsel %vm1451, %v1447, 1326507024
  %v1462 = vsel %vm1450, %v1444, %v1461
  %v1463 = vsel %vm1449, %v1460, %v1462
  %v1464 = vshll.u32 %v1424, 8
  %v1465 = vmul.u32.u64.compose %v1464, %v1463
  %v1466 = vextract.low.u32 %v1465
  %v1467 = vextract.high.u32 %v1465
  %v1468 = vmul.u32.u64.compose %v1464, %v1459
  %v1469 = vextract.low.u32 %v1468
  %v1470 = vextract.high.u32 %v1468
  %v1471 = vmul.u32 %v1464, %v1455
  %v1472 = vadd.s32 %v1467, %v1469
  %vm1473 = vc.u32 %v1467, %v1469
  %v1474 = vadd.s32 %v1470, 1
  %v1475 = vsel %vm1473, %v1474, %v1470
  %v1476 = vadd.s32 %v1471, %v1475
  %v1477 = vadd.s32 %v1476, 536870912
  %v1478 = vshrl.u32 %v1477, 30
  %v1479 = vshll.u32 %v1478, 30
  %v1480 = vsub.s32 %v1476, %v1479
  %vm1481 = vcmp.lt.s32.totalorder %v1480, 0
  %v1482 = vsub.s32 0, %v1480
  %v1483 = vsel %vm1481, %v1482, %v1480
  %v1484 = vclz %v1483
  %v1485 = vsub.s32 %v1484, 2
  %vm1486 = vcmp.gt.s32.totalorder 0, %v1485
  %v1487 = vsel %vm1486, 0, %v1485
  %v1488 = vsub.s32 32, %v1487
  %v1489 = vshll.u32 %v1480, %v1487
  %v1490 = vshrl.u32 %v1472, %v1488
  %v1491 = vor.u32 %v1489, %v1490
  %v1492 = vsub.s32 4294967266, %v1487
  %v1493 = vadd.s32 %v1492, 127
  %v1494 = vshll.u32 %v1493, 23
  %v1495 = vor.u32 4788187, %v1494
  %v1496 = vand.u32 2147483647, %v1495
  %v1498 = vcvt.s32.f32 %v1491
  %v1499 = vmul.f32 %v1498, %v1496
  %v1500 = vxor.u32 %v1499, 2147483648
  %v1501 = vsel %vm1418, %v1500, %v1499
  %v1502 = vsub.s32 4, %v1478
  %v1503 = vsel %vm1418, %v1502, %v1478
  %v1504 = vsel %vm1417, %v1034, %v1501
  %v1505 = vsel %vm1417, 0, %v1503
  %v1506 = vcosq.f32.pop %v1504
  %v1507 = vsinq.f32.pop %v1504
  %vm1508 = vweird.f32 %v1034
  %v1509 = vand.u32 %v1505, 3
  %vm1510 = vcmp.lt.s32.totalorder %v1509, 2
  %vm1511 = vcmp.eq.s32.totalorder %v1509, 0
  %v1512 = vxor.u32 %v1507, 2147483648
  %v1513 = vsel %vm1511, %v1506, %v1512
  %vm1514 = vcmp.eq.s32.totalorder %v1509, 2
  %v1515 = vxor.u32 %v1506, 2147483648
  %v1516 = vsel %vm1514, %v1515, %v1507
  %v1517 = vsel %vm1510, %v1513, %v1516
  %v1518 = vsel %vm1508, nan, %v1517
  %v1519 = vand.u32 2147483647, %v1035
  %vm1520 = vcmp.le.f32.partialorder %v1519, 0.7853982
  %vm1521 = vcmp.lt.s32.totalorder %v1035, 0
  %v1522 = vand.u32 %v1035, 2139095040
  %v1523 = vshrl.u32 %v1522, 23
  %v1524 = vsub.s32 %v1523, 127
  %v1525 = vand.u32 2147483647, %v1035
  %v1526 = vand.u32 %v1525, 8388607
  %v1527 = vor.u32 %v1526, 8388608
  %v1528 = vsub.s32 0, %v1527
  %v1529 = vadd.s32 %v1524, 1
  %vm1530 = vcmp.gt.s32.totalorder %v1529, 0
  %v1531 = vsel %vm1530, %v1529, 0
  %v1532 = vshrl.u32 %v1531, 5
  %v1533 = vand.u32 %v1531, 31
  %v1534 = vsub.s32 32, %v1533
  %v1535 = vshrl.u32 683565275, %v1534
  %v1536 = vshll.u32 683565275, %v1533
  %v1537 = vshrl.u32 2475754826, %v1534
  %v1538 = vor.u32 %v1536, %v1537
  %v1539 = vshll.u32 2475754826, %v1533
  %v1540 = vshrl.u32 2131351028, %v1534
  %v1541 = vor.u32 %v1539, %v1540
  %v1542 = vshll.u32 2131351028, %v1533
  %v1543 = vshrl.u32 2102212464, %v1534
  %v1544 = vor.u32 %v1542, %v1543
  %v1545 = vshll.u32 2102212464, %v1533
  %v1546 = vshrl.u32 920167782, %v1534
  %v1547 = vor.u32 %v1545, %v1546
  %v1548 = vshll.u32 920167782, %v1533
  %v1549 = vshrl.u32 1326507024, %v1534
  %v1550 = vor.u32 %v1548, %v1549
  %vm1551 = vcmp.lt.s32.totalorder %v1532, 1
  %vm1552 = vcmp.lt.s32.totalorder %v1532, 2
  %vm1553 = vcmp.lt.s32.totalorder %v1532, 3
  %vm1554 = vcmp.lt.s32.totalorder %v1532, 4
  %v1555 = vsel %vm1551, %v1535, %v1538
  %v1556 = vsel %vm1554, %v1544, 2102212464
  %v1557 = vsel %vm1553, %v1541, %v1556
  %v1558 = vsel %vm1552, %v1555, %v1557
  %v1559 = vsel %vm1551, %v1538, %v1541
  %v1560 = vsel %vm1554, %v1547, 920167782
  %v1561 = vsel %vm1553, %v1544, %v1560
  %v1562 = vsel %vm1552, %v1559, %v1561
  %v1563 = vsel %vm1551, %v1541, %v1544
  %v1564 = vsel %vm1554, %v1550, 1326507024
  %v1565 = vsel %vm1553, %v1547, %v1564
  %v1566 = vsel %vm1552, %v1563, %v1565
  %v1567 = vshll.u32 %v1527, 8
  %v1568 = vmul.u32.u64.compose %v1567, %v1566
  %v1569 = vextract.low.u32 %v1568
  %v1570 = vextract.high.u32 %v1568
  %v1571 = vmul.u32.u64.compose %v1567, %v1562
  %v1572 = vextract.low.u32 %v1571
  %v1573 = vextract.high.u32 %v1571
  %v1574 = vmul.u32 %v1567, %v1558
  %v1575 = vadd.s32 %v1570, %v1572
  %vm1576 = vc.u32 %v1570, %v1572
  %v1577 = vadd.s32 %v1573, 1
  %v1578 = vsel %vm1576, %v1577, %v1573
  %v1579 = vadd.s32 %v1574, %v1578
  %v1580 = vadd.s32 %v1579, 536870912
  %v1581 = vshrl.u32 %v1580, 30
  %v1582 = vshll.u32 %v1581, 30
  %v1583 = vsub.s32 %v1579, %v1582
  %vm1584 = vcmp.lt.s32.totalorder %v1583, 0
  %v1585 = vsub.s32 0, %v1583
  %v1586 = vsel %vm1584, %v1585, %v1583
  %v1587 = vclz %v1586
  %v1588 = vsub.s32 %v1587, 2
  %vm1589 = vcmp.gt.s32.totalorder 0, %v1588
  %v1590 = vsel %vm1589, 0, %v1588
  %v1591 = vsub.s32 32, %v1590
  %v1592 = vshll.u32 %v1583, %v1590
  %v1593 = vshrl.u32 %v1575, %v1591
  %v1594 = vor.u32 %v1592, %v1593
  %v1595 = vsub.s32 4294967266, %v1590
  %v1596 = vadd.s32 %v1595, 127
  %v1597 = vshll.u32 %v1596, 23
  %v1598 = vor.u32 4788187, %v1597
  %v1599 = vand.u32 2147483647, %v1598
  %v1601 = vcvt.s32.f32 %v1594
  %v1602 = vmul.f32 %v1601, %v1599
  %v1603 = vxor.u32 %v1602, 2147483648
  %v1604 = vsel %vm1521, %v1603, %v1602
  %v1605 = vsub.s32 4, %v1581
  %v1606 = vsel %vm1521, %v1605, %v1581
  %v1607 = vsel %vm1520, %v1035, %v1604
  %v1608 = vsel %vm1520, 0, %v1606
  %v1609 = vcosq.f32.pop %v1607
  %v1610 = vsinq.f32.pop %v1607
  %vm1611 = vweird.f32 %v1035
  %v1612 = vand.u32 %v1608, 3
  %vm1613 = vcmp.lt.s32.totalorder %v1612, 2
  %vm1614 = vcmp.eq.s32.totalorder %v1612, 0
  %v1615 = vxor.u32 %v1610, 2147483648
  %v1616 = vsel %vm1614, %v1609, %v1615
  %vm1617 = vcmp.eq.s32.totalorder %v1612, 2
  %v1618 = vxor.u32 %v1609, 2147483648
  %v1619 = vsel %vm1617, %v1618, %v1610
  %v1620 = vsel %vm1613, %v1616, %v1619
  %v1621 = vsel %vm1611, nan, %v1620
  %v1622 = vand.u32 2147483647, %v1036
  %vm1623 = vcmp.le.f32.partialorder %v1622, 0.7853982
  %vm1624 = vcmp.lt.s32.totalorder %v1036, 0
  %v1625 = vand.u32 %v1036, 2139095040
  %v1626 = vshrl.u32 %v1625, 23
  %v1627 = vsub.s32 %v1626, 127
  %v1628 = vand.u32 2147483647, %v1036
  %v1629 = vand.u32 %v1628, 8388607
  %v1630 = vor.u32 %v1629, 8388608
  %v1631 = vsub.s32 0, %v1630
  %v1632 = vadd.s32 %v1627, 1
  %vm1633 = vcmp.gt.s32.totalorder %v1632, 0
  %v1634 = vsel %vm1633, %v1632, 0
  %v1635 = vshrl.u32 %v1634, 5
  %v1636 = vand.u32 %v1634, 31
  %v1637 = vsub.s32 32, %v1636
  %v1638 = vshrl.u32 683565275, %v1637
  %v1639 = vshll.u32 683565275, %v1636
  %v1640 = vshrl.u32 2475754826, %v1637
  %v1641 = vor.u32 %v1639, %v1640
  %v1642 = vshll.u32 2475754826, %v1636
  %v1643 = vshrl.u32 2131351028, %v1637
  %v1644 = vor.u32 %v1642, %v1643
  %v1645 = vshll.u32 2131351028, %v1636
  %v1646 = vshrl.u32 2102212464, %v1637
  %v1647 = vor.u32 %v1645, %v1646
  %v1648 = vshll.u32 2102212464, %v1636
  %v1649 = vshrl.u32 920167782, %v1637
  %v1650 = vor.u32 %v1648, %v1649
  %v1651 = vshll.u32 920167782, %v1636
  %v1652 = vshrl.u32 1326507024, %v1637
  %v1653 = vor.u32 %v1651, %v1652
  %vm1654 = vcmp.lt.s32.totalorder %v1635, 1
  %vm1655 = vcmp.lt.s32.totalorder %v1635, 2
  %vm1656 = vcmp.lt.s32.totalorder %v1635, 3
  %vm1657 = vcmp.lt.s32.totalorder %v1635, 4
  %v1658 = vsel %vm1654, %v1638, %v1641
  %v1659 = vsel %vm1657, %v1647, 2102212464
  %v1660 = vsel %vm1656, %v1644, %v1659
  %v1661 = vsel %vm1655, %v1658, %v1660
  %v1662 = vsel %vm1654, %v1641, %v1644
  %v1663 = vsel %vm1657, %v1650, 920167782
  %v1664 = vsel %vm1656, %v1647, %v1663
  %v1665 = vsel %vm1655, %v1662, %v1664
  %v1666 = vsel %vm1654, %v1644, %v1647
  %v1667 = vsel %vm1657, %v1653, 1326507024
  %v1668 = vsel %vm1656, %v1650, %v1667
  %v1669 = vsel %vm1655, %v1666, %v1668
  %v1670 = vshll.u32 %v1630, 8
  %v1671 = vmul.u32.u64.compose %v1670, %v1669
  %v1672 = vextract.low.u32 %v1671
  %v1673 = vextract.high.u32 %v1671
  %v1674 = vmul.u32.u64.compose %v1670, %v1665
  %v1675 = vextract.low.u32 %v1674
  %v1676 = vextract.high.u32 %v1674
  %v1677 = vmul.u32 %v1670, %v1661
  %v1678 = vadd.s32 %v1673, %v1675
  %vm1679 = vc.u32 %v1673, %v1675
  %v1680 = vadd.s32 %v1676, 1
  %v1681 = vsel %vm1679, %v1680, %v1676
  %v1682 = vadd.s32 %v1677, %v1681
  %v1683 = vadd.s32 %v1682, 536870912
  %v1684 = vshrl.u32 %v1683, 30
  %v1685 = vshll.u32 %v1684, 30
  %v1686 = vsub.s32 %v1682, %v1685
  %vm1687 = vcmp.lt.s32.totalorder %v1686, 0
  %v1688 = vsub.s32 0, %v1686
  %v1689 = vsel %vm1687, %v1688, %v1686
  %v1690 = vclz %v1689
  %v1691 = vsub.s32 %v1690, 2
  %vm1692 = vcmp.gt.s32.totalorder 0, %v1691
  %v1693 = vsel %vm1692, 0, %v1691
  %v1694 = vsub.s32 32, %v1693
  %v1695 = vshll.u32 %v1686, %v1693
  %v1696 = vshrl.u32 %v1678, %v1694
  %v1697 = vor.u32 %v1695, %v1696
  %v1698 = vsub.s32 4294967266, %v1693
  %v1699 = vadd.s32 %v1698, 127
  %v1700 = vshll.u32 %v1699, 23
  %v1701 = vor.u32 4788187, %v1700
  %v1702 = vand.u32 2147483647, %v1701
  %v1704 = vcvt.s32.f32 %v1697
  %v1705 = vmul.f32 %v1704, %v1702
  %v1706 = vxor.u32 %v1705, 2147483648
  %v1707 = vsel %vm1624, %v1706, %v1705
  %v1708 = vsub.s32 4, %v1684
  %v1709 = vsel %vm1624, %v1708, %v1684
  %v1710 = vsel %vm1623, %v1036, %v1707
  %v1711 = vsel %vm1623, 0, %v1709
  %v1712 = vcosq.f32.pop %v1710
  %v1713 = vsinq.f32.pop %v1710
  %vm1714 = vweird.f32 %v1036
  %v1715 = vand.u32 %v1711, 3
  %vm1716 = vcmp.lt.s32.totalorder %v1715, 2
  %vm1717 = vcmp.eq.s32.totalorder %v1715, 0
  %v1718 = vxor.u32 %v1713, 2147483648
  %v1719 = vsel %vm1717, %v1712, %v1718
  %vm1720 = vcmp.eq.s32.totalorder %v1715, 2
  %v1721 = vxor.u32 %v1712, 2147483648
  %v1722 = vsel %vm1720, %v1721, %v1713
  %v1723 = vsel %vm1716, %v1719, %v1722
  %v1724 = vsel %vm1714, nan, %v1723
  %v1725 = vand.u32 2147483647, %v1037
  %vm1726 = vcmp.le.f32.partialorder %v1725, 0.7853982
  %vm1727 = vcmp.lt.s32.totalorder %v1037, 0
  %v1728 = vand.u32 %v1037, 2139095040
  %v1729 = vshrl.u32 %v1728, 23
  %v1730 = vsub.s32 %v1729, 127
  %v1731 = vand.u32 2147483647, %v1037
  %v1732 = vand.u32 %v1731, 8388607
  %v1733 = vor.u32 %v1732, 8388608
  %v1734 = vsub.s32 0, %v1733
  %v1735 = vadd.s32 %v1730, 1
  %vm1736 = vcmp.gt.s32.totalorder %v1735, 0
  %v1737 = vsel %vm1736, %v1735, 0
  %v1738 = vshrl.u32 %v1737, 5
  %v1739 = vand.u32 %v1737, 31
  %v1740 = vsub.s32 32, %v1739
  %v1741 = vshrl.u32 683565275, %v1740
  %v1742 = vshll.u32 683565275, %v1739
  %v1743 = vshrl.u32 2475754826, %v1740
  %v1744 = vor.u32 %v1742, %v1743
  %v1745 = vshll.u32 2475754826, %v1739
  %v1746 = vshrl.u32 2131351028, %v1740
  %v1747 = vor.u32 %v1745, %v1746
  %v1748 = vshll.u32 2131351028, %v1739
  %v1749 = vshrl.u32 2102212464, %v1740
  %v1750 = vor.u32 %v1748, %v1749
  %v1751 = vshll.u32 2102212464, %v1739
  %v1752 = vshrl.u32 920167782, %v1740
  %v1753 = vor.u32 %v1751, %v1752
  %v1754 = vshll.u32 920167782, %v1739
  %v1755 = vshrl.u32 1326507024, %v1740
  %v1756 = vor.u32 %v1754, %v1755
  %vm1757 = vcmp.lt.s32.totalorder %v1738, 1
  %vm1758 = vcmp.lt.s32.totalorder %v1738, 2
  %vm1759 = vcmp.lt.s32.totalorder %v1738, 3
  %vm1760 = vcmp.lt.s32.totalorder %v1738, 4
  %v1761 = vsel %vm1757, %v1741, %v1744
  %v1762 = vsel %vm1760, %v1750, 2102212464
  %v1763 = vsel %vm1759, %v1747, %v1762
  %v1764 = vsel %vm1758, %v1761, %v1763
  %v1765 = vsel %vm1757, %v1744, %v1747
  %v1766 = vsel %vm1760, %v1753, 920167782
  %v1767 = vsel %vm1759, %v1750, %v1766
  %v1768 = vsel %vm1758, %v1765, %v1767
  %v1769 = vsel %vm1757, %v1747, %v1750
  %v1770 = vsel %vm1760, %v1756, 1326507024
  %v1771 = vsel %vm1759, %v1753, %v1770
  %v1772 = vsel %vm1758, %v1769, %v1771
  %v1773 = vshll.u32 %v1733, 8
  %v1774 = vmul.u32.u64.compose %v1773, %v1772
  %v1775 = vextract.low.u32 %v1774
  %v1776 = vextract.high.u32 %v1774
  %v1777 = vmul.u32.u64.compose %v1773, %v1768
  %v1778 = vextract.low.u32 %v1777
  %v1779 = vextract.high.u32 %v1777
  %v1780 = vmul.u32 %v1773, %v1764
  %v1781 = vadd.s32 %v1776, %v1778
  %vm1782 = vc.u32 %v1776, %v1778
  %v1783 = vadd.s32 %v1779, 1
  %v1784 = vsel %vm1782, %v1783, %v1779
  %v1785 = vadd.s32 %v1780, %v1784
  %v1786 = vadd.s32 %v1785, 536870912
  %v1787 = vshrl.u32 %v1786, 30
  %v1788 = vshll.u32 %v1787, 30
  %v1789 = vsub.s32 %v1785, %v1788
  %vm1790 = vcmp.lt.s32.totalorder %v1789, 0
  %v1791 = vsub.s32 0, %v1789
  %v1792 = vsel %vm1790, %v1791, %v1789
  %v1793 = vclz %v1792
  %v1794 = vsub.s32 %v1793, 2
  %vm1795 = vcmp.gt.s32.totalorder 0, %v1794
  %v1796 = vsel %vm1795, 0, %v1794
  %v1797 = vsub.s32 32, %v1796
  %v1798 = vshll.u32 %v1789, %v1796
  %v1799 = vshrl.u32 %v1781, %v1797
  %v1800 = vor.u32 %v1798, %v1799
  %v1801 = vsub.s32 4294967266, %v1796
  %v1802 = vadd.s32 %v1801, 127
  %v1803 = vshll.u32 %v1802, 23
  %v1804 = vor.u32 4788187, %v1803
  %v1805 = vand.u32 2147483647, %v1804
  %v1807 = vcvt.s32.f32 %v1800
  %v1808 = vmul.f32 %v1807, %v1805
  %v1809 = vxor.u32 %v1808, 2147483648
  %v1810 = vsel %vm1727, %v1809, %v1808
  %v1811 = vsub.s32 4, %v1787
  %v1812 = vsel %vm1727, %v1811, %v1787
  %v1813 = vsel %vm1726, %v1037, %v1810
  %v1814 = vsel %vm1726, 0, %v1812
  %v1815 = vcosq.f32.pop %v1813
  %v1816 = vsinq.f32.pop %v1813
  %vm1817 = vweird.f32 %v1037
  %v1818 = vand.u32 %v1814, 3
  %vm1819 = vcmp.lt.s32.totalorder %v1818, 2
  %vm1820 = vcmp.eq.s32.totalorder %v1818, 0
  %v1821 = vxor.u32 %v1816, 2147483648
  %v1822 = vsel %vm1820, %v1815, %v1821
  %vm1823 = vcmp.eq.s32.totalorder %v1818, 2
  %v1824 = vxor.u32 %v1815, 2147483648
  %v1825 = vsel %vm1823, %v1824, %v1816
  %v1826 = vsel %vm1819, %v1822, %v1825
  %v1827 = vsel %vm1817, nan, %v1826
  %v1828 = vand.u32 2147483647, %v1038
  %vm1829 = vcmp.le.f32.partialorder %v1828, 0.7853982
  %vm1830 = vcmp.lt.s32.totalorder %v1038, 0
  %v1831 = vand.u32 %v1038, 2139095040
  %v1832 = vshrl.u32 %v1831, 23
  %v1833 = vsub.s32 %v1832, 127
  %v1834 = vand.u32 2147483647, %v1038
  %v1835 = vand.u32 %v1834, 8388607
  %v1836 = vor.u32 %v1835, 8388608
  %v1837 = vsub.s32 0, %v1836
  %v1838 = vadd.s32 %v1833, 1
  %vm1839 = vcmp.gt.s32.totalorder %v1838, 0
  %v1840 = vsel %vm1839, %v1838, 0
  %v1841 = vshrl.u32 %v1840, 5
  %v1842 = vand.u32 %v1840, 31
  %v1843 = vsub.s32 32, %v1842
  %v1844 = vshrl.u32 683565275, %v1843
  %v1845 = vshll.u32 683565275, %v1842
  %v1846 = vshrl.u32 2475754826, %v1843
  %v1847 = vor.u32 %v1845, %v1846
  %v1848 = vshll.u32 2475754826, %v1842
  %v1849 = vshrl.u32 2131351028, %v1843
  %v1850 = vor.u32 %v1848, %v1849
  %v1851 = vshll.u32 2131351028, %v1842
  %v1852 = vshrl.u32 2102212464, %v1843
  %v1853 = vor.u32 %v1851, %v1852
  %v1854 = vshll.u32 2102212464, %v1842
  %v1855 = vshrl.u32 920167782, %v1843
  %v1856 = vor.u32 %v1854, %v1855
  %v1857 = vshll.u32 920167782, %v1842
  %v1858 = vshrl.u32 1326507024, %v1843
  %v1859 = vor.u32 %v1857, %v1858
  %vm1860 = vcmp.lt.s32.totalorder %v1841, 1
  %vm1861 = vcmp.lt.s32.totalorder %v1841, 2
  %vm1862 = vcmp.lt.s32.totalorder %v1841, 3
  %vm1863 = vcmp.lt.s32.totalorder %v1841, 4
  %v1864 = vsel %vm1860, %v1844, %v1847
  %v1865 = vsel %vm1863, %v1853, 2102212464
  %v1866 = vsel %vm1862, %v1850, %v1865
  %v1867 = vsel %vm1861, %v1864, %v1866
  %v1868 = vsel %vm1860, %v1847, %v1850
  %v1869 = vsel %vm1863, %v1856, 920167782
  %v1870 = vsel %vm1862, %v1853, %v1869
  %v1871 = vsel %vm1861, %v1868, %v1870
  %v1872 = vsel %vm1860, %v1850, %v1853
  %v1873 = vsel %vm1863, %v1859, 1326507024
  %v1874 = vsel %vm1862, %v1856, %v1873
  %v1875 = vsel %vm1861, %v1872, %v1874
  %v1876 = vshll.u32 %v1836, 8
  %v1877 = vmul.u32.u64.compose %v1876, %v1875
  %v1878 = vextract.low.u32 %v1877
  %v1879 = vextract.high.u32 %v1877
  %v1880 = vmul.u32.u64.compose %v1876, %v1871
  %v1881 = vextract.low.u32 %v1880
  %v1882 = vextract.high.u32 %v1880
  %v1883 = vmul.u32 %v1876, %v1867
  %v1884 = vadd.s32 %v1879, %v1881
  %vm1885 = vc.u32 %v1879, %v1881
  %v1886 = vadd.s32 %v1882, 1
  %v1887 = vsel %vm1885, %v1886, %v1882
  %v1888 = vadd.s32 %v1883, %v1887
  %v1889 = vadd.s32 %v1888, 536870912
  %v1890 = vshrl.u32 %v1889, 30
  %v1891 = vshll.u32 %v1890, 30
  %v1892 = vsub.s32 %v1888, %v1891
  %vm1893 = vcmp.lt.s32.totalorder %v1892, 0
  %v1894 = vsub.s32 0, %v1892
  %v1895 = vsel %vm1893, %v1894, %v1892
  %v1896 = vclz %v1895
  %v1897 = vsub.s32 %v1896, 2
  %vm1898 = vcmp.gt.s32.totalorder 0, %v1897
  %v1899 = vsel %vm1898, 0, %v1897
  %v1900 = vsub.s32 32, %v1899
  %v1901 = vshll.u32 %v1892, %v1899
  %v1902 = vshrl.u32 %v1884, %v1900
  %v1903 = vor.u32 %v1901, %v1902
  %v1904 = vsub.s32 4294967266, %v1899
  %v1905 = vadd.s32 %v1904, 127
  %v1906 = vshll.u32 %v1905, 23
  %v1907 = vor.u32 4788187, %v1906
  %v1908 = vand.u32 2147483647, %v1907
  %v1910 = vcvt.s32.f32 %v1903
  %v1911 = vmul.f32 %v1910, %v1908
  %v1912 = vxor.u32 %v1911, 2147483648
  %v1913 = vsel %vm1830, %v1912, %v1911
  %v1914 = vsub.s32 4, %v1890
  %v1915 = vsel %vm1830, %v1914, %v1890
  %v1916 = vsel %vm1829, %v1038, %v1913
  %v1917 = vsel %vm1829, 0, %v1915
  %v1918 = vcosq.f32.pop %v1916
  %v1919 = vsinq.f32.pop %v1916
  %vm1920 = vweird.f32 %v1038
  %v1921 = vand.u32 %v1917, 3
  %vm1922 = vcmp.lt.s32.totalorder %v1921, 2
  %vm1923 = vcmp.eq.s32.totalorder %v1921, 0
  %v1924 = vxor.u32 %v1919, 2147483648
  %v1925 = vsel %vm1923, %v1918, %v1924
  %vm1926 = vcmp.eq.s32.totalorder %v1921, 2
  %v1927 = vxor.u32 %v1918, 2147483648
  %v1928 = vsel %vm1926, %v1927, %v1919
  %v1929 = vsel %vm1922, %v1925, %v1928
  %v1930 = vsel %vm1920, nan, %v1929
  %v1931 = vand.u32 2147483647, %v1039
  %vm1932 = vcmp.le.f32.partialorder %v1931, 0.7853982
  %vm1933 = vcmp.lt.s32.totalorder %v1039, 0
  %v1934 = vand.u32 %v1039, 2139095040
  %v1935 = vshrl.u32 %v1934, 23
  %v1936 = vsub.s32 %v1935, 127
  %v1937 = vand.u32 2147483647, %v1039
  %v1938 = vand.u32 %v1937, 8388607
  %v1939 = vor.u32 %v1938, 8388608
  %v1940 = vsub.s32 0, %v1939
  %v1941 = vadd.s32 %v1936, 1
  %vm1942 = vcmp.gt.s32.totalorder %v1941, 0
  %v1943 = vsel %vm1942, %v1941, 0
  %v1944 = vshrl.u32 %v1943, 5
  %v1945 = vand.u32 %v1943, 31
  %v1946 = vsub.s32 32, %v1945
  %v1947 = vshrl.u32 683565275, %v1946
  %v1948 = vshll.u32 683565275, %v1945
  %v1949 = vshrl.u32 2475754826, %v1946
  %v1950 = vor.u32 %v1948, %v1949
  %v1951 = vshll.u32 2475754826, %v1945
  %v1952 = vshrl.u32 2131351028, %v1946
  %v1953 = vor.u32 %v1951, %v1952
  %v1954 = vshll.u32 2131351028, %v1945
  %v1955 = vshrl.u32 2102212464, %v1946
  %v1956 = vor.u32 %v1954, %v1955
  %v1957 = vshll.u32 2102212464, %v1945
  %v1958 = vshrl.u32 920167782, %v1946
  %v1959 = vor.u32 %v1957, %v1958
  %v1960 = vshll.u32 920167782, %v1945
  %v1961 = vshrl.u32 1326507024, %v1946
  %v1962 = vor.u32 %v1960, %v1961
  %vm1963 = vcmp.lt.s32.totalorder %v1944, 1
  %vm1964 = vcmp.lt.s32.totalorder %v1944, 2
  %vm1965 = vcmp.lt.s32.totalorder %v1944, 3
  %vm1966 = vcmp.lt.s32.totalorder %v1944, 4
  %v1967 = vsel %vm1963, %v1947, %v1950
  %v1968 = vsel %vm1966, %v1956, 2102212464
  %v1969 = vsel %vm1965, %v1953, %v1968
  %v1970 = vsel %vm1964, %v1967, %v1969
  %v1971 = vsel %vm1963, %v1950, %v1953
  %v1972 = vsel %vm1966, %v1959, 920167782
  %v1973 = vsel %vm1965, %v1956, %v1972
  %v1974 = vsel %vm1964, %v1971, %v1973
  %v1975 = vsel %vm1963, %v1953, %v1956
  %v1976 = vsel %vm1966, %v1962, 1326507024
  %v1977 = vsel %vm1965, %v1959, %v1976
  %v1978 = vsel %vm1964, %v1975, %v1977
  %v1979 = vshll.u32 %v1939, 8
  %v1980 = vmul.u32.u64.compose %v1979, %v1978
  %v1981 = vextract.low.u32 %v1980
  %v1982 = vextract.high.u32 %v1980
  %v1983 = vmul.u32.u64.compose %v1979, %v1974
  %v1984 = vextract.low.u32 %v1983
  %v1985 = vextract.high.u32 %v1983
  %v1986 = vmul.u32 %v1979, %v1970
  %v1987 = vadd.s32 %v1982, %v1984
  %vm1988 = vc.u32 %v1982, %v1984
  %v1989 = vadd.s32 %v1985, 1
  %v1990 = vsel %vm1988, %v1989, %v1985
  %v1991 = vadd.s32 %v1986, %v1990
  %v1992 = vadd.s32 %v1991, 536870912
  %v1993 = vshrl.u32 %v1992, 30
  %v1994 = vshll.u32 %v1993, 30
  %v1995 = vsub.s32 %v1991, %v1994
  %vm1996 = vcmp.lt.s32.totalorder %v1995, 0
  %v1997 = vsub.s32 0, %v1995
  %v1998 = vsel %vm1996, %v1997, %v1995
  %v1999 = vclz %v1998
  %v2000 = vsub.s32 %v1999, 2
  %vm2001 = vcmp.gt.s32.totalorder 0, %v2000
  %v2002 = vsel %vm2001, 0, %v2000
  %v2003 = vsub.s32 32, %v2002
  %v2004 = vshll.u32 %v1995, %v2002
  %v2005 = vshrl.u32 %v1987, %v2003
  %v2006 = vor.u32 %v2004, %v2005
  %v2007 = vsub.s32 4294967266, %v2002
  %v2008 = vadd.s32 %v2007, 127
  %v2009 = vshll.u32 %v2008, 23
  %v2010 = vor.u32 4788187, %v2009
  %v2011 = vand.u32 2147483647, %v2010
  %v2013 = vcvt.s32.f32 %v2006
  %v2014 = vmul.f32 %v2013, %v2011
  %v2015 = vxor.u32 %v2014, 2147483648
  %v2016 = vsel %vm1933, %v2015, %v2014
  %v2017 = vsub.s32 4, %v1993
  %v2018 = vsel %vm1933, %v2017, %v1993
  %v2019 = vsel %vm1932, %v1039, %v2016
  %v2020 = vsel %vm1932, 0, %v2018
  %v2021 = vcosq.f32.pop %v2019
  %v2022 = vsinq.f32.pop %v2019
  %vm2023 = vweird.f32 %v1039
  %v2024 = vand.u32 %v2020, 3
  %vm2025 = vcmp.lt.s32.totalorder %v2024, 2
  %vm2026 = vcmp.eq.s32.totalorder %v2024, 0
  %v2027 = vxor.u32 %v2022, 2147483648
  %v2028 = vsel %vm2026, %v2021, %v2027
  %vm2029 = vcmp.eq.s32.totalorder %v2024, 2
  %v2030 = vxor.u32 %v2021, 2147483648
  %v2031 = vsel %vm2029, %v2030, %v2022
  %v2032 = vsel %vm2025, %v2028, %v2031
  %v2033 = vsel %vm2023, nan, %v2032
  %v2034 = vand.u32 2147483647, %v1040
  %vm2035 = vcmp.le.f32.partialorder %v2034, 0.7853982
  %vm2036 = vcmp.lt.s32.totalorder %v1040, 0
  %v2037 = vand.u32 %v1040, 2139095040
  %v2038 = vshrl.u32 %v2037, 23
  %v2039 = vsub.s32 %v2038, 127
  %v2040 = vand.u32 2147483647, %v1040
  %v2041 = vand.u32 %v2040, 8388607
  %v2042 = vor.u32 %v2041, 8388608
  %v2043 = vsub.s32 0, %v2042
  %v2044 = vadd.s32 %v2039, 1
  %vm2045 = vcmp.gt.s32.totalorder %v2044, 0
  %v2046 = vsel %vm2045, %v2044, 0
  %v2047 = vshrl.u32 %v2046, 5
  %v2048 = vand.u32 %v2046, 31
  %v2049 = vsub.s32 32, %v2048
  %v2050 = vshrl.u32 683565275, %v2049
  %v2051 = vshll.u32 683565275, %v2048
  %v2052 = vshrl.u32 2475754826, %v2049
  %v2053 = vor.u32 %v2051, %v2052
  %v2054 = vshll.u32 2475754826, %v2048
  %v2055 = vshrl.u32 2131351028, %v2049
  %v2056 = vor.u32 %v2054, %v2055
  %v2057 = vshll.u32 2131351028, %v2048
  %v2058 = vshrl.u32 2102212464, %v2049
  %v2059 = vor.u32 %v2057, %v2058
  %v2060 = vshll.u32 2102212464, %v2048
  %v2061 = vshrl.u32 920167782, %v2049
  %v2062 = vor.u32 %v2060, %v2061
  %v2063 = vshll.u32 920167782, %v2048
  %v2064 = vshrl.u32 1326507024, %v2049
  %v2065 = vor.u32 %v2063, %v2064
  %vm2066 = vcmp.lt.s32.totalorder %v2047, 1
  %vm2067 = vcmp.lt.s32.totalorder %v2047, 2
  %vm2068 = vcmp.lt.s32.totalorder %v2047, 3
  %vm2069 = vcmp.lt.s32.totalorder %v2047, 4
  %v2070 = vsel %vm2066, %v2050, %v2053
  %v2071 = vsel %vm2069, %v2059, 2102212464
  %v2072 = vsel %vm2068, %v2056, %v2071
  %v2073 = vsel %vm2067, %v2070, %v2072
  %v2074 = vsel %vm2066, %v2053, %v2056
  %v2075 = vsel %vm2069, %v2062, 920167782
  %v2076 = vsel %vm2068, %v2059, %v2075
  %v2077 = vsel %vm2067, %v2074, %v2076
  %v2078 = vsel %vm2066, %v2056, %v2059
  %v2079 = vsel %vm2069, %v2065, 1326507024
  %v2080 = vsel %vm2068, %v2062, %v2079
  %v2081 = vsel %vm2067, %v2078, %v2080
  %v2082 = vshll.u32 %v2042, 8
  %v2083 = vmul.u32.u64.compose %v2082, %v2081
  %v2084 = vextract.low.u32 %v2083
  %v2085 = vextract.high.u32 %v2083
  %v2086 = vmul.u32.u64.compose %v2082, %v2077
  %v2087 = vextract.low.u32 %v2086
  %v2088 = vextract.high.u32 %v2086
  %v2089 = vmul.u32 %v2082, %v2073
  %v2090 = vadd.s32 %v2085, %v2087
  %vm2091 = vc.u32 %v2085, %v2087
  %v2092 = vadd.s32 %v2088, 1
  %v2093 = vsel %vm2091, %v2092, %v2088
  %v2094 = vadd.s32 %v2089, %v2093
  %v2095 = vadd.s32 %v2094, 536870912
  %v2096 = vshrl.u32 %v2095, 30
  %v2097 = vshll.u32 %v2096, 30
  %v2098 = vsub.s32 %v2094, %v2097
  %vm2099 = vcmp.lt.s32.totalorder %v2098, 0
  %v2100 = vsub.s32 0, %v2098
  %v2101 = vsel %vm2099, %v2100, %v2098
  %v2102 = vclz %v2101
  %v2103 = vsub.s32 %v2102, 2
  %vm2104 = vcmp.gt.s32.totalorder 0, %v2103
  %v2105 = vsel %vm2104, 0, %v2103
  %v2106 = vsub.s32 32, %v2105
  %v2107 = vshll.u32 %v2098, %v2105
  %v2108 = vshrl.u32 %v2090, %v2106
  %v2109 = vor.u32 %v2107, %v2108
  %v2110 = vsub.s32 4294967266, %v2105
  %v2111 = vadd.s32 %v2110, 127
  %v2112 = vshll.u32 %v2111, 23
  %v2113 = vor.u32 4788187, %v2112
  %v2114 = vand.u32 2147483647, %v2113
  %v2116 = vcvt.s32.f32 %v2109
  %v2117 = vmul.f32 %v2116, %v2114
  %v2118 = vxor.u32 %v2117, 2147483648
  %v2119 = vsel %vm2036, %v2118, %v2117
  %v2120 = vsub.s32 4, %v2096
  %v2121 = vsel %vm2036, %v2120, %v2096
  %v2122 = vsel %vm2035, %v1040, %v2119
  %v2123 = vsel %vm2035, 0, %v2121
  %v2124 = vcosq.f32.pop %v2122
  %v2125 = vsinq.f32.pop %v2122
  %vm2126 = vweird.f32 %v1040
  %v2127 = vand.u32 %v2123, 3
  %vm2128 = vcmp.lt.s32.totalorder %v2127, 2
  %vm2129 = vcmp.eq.s32.totalorder %v2127, 0
  %v2130 = vxor.u32 %v2125, 2147483648
  %v2131 = vsel %vm2129, %v2124, %v2130
  %vm2132 = vcmp.eq.s32.totalorder %v2127, 2
  %v2133 = vxor.u32 %v2124, 2147483648
  %v2134 = vsel %vm2132, %v2133, %v2125
  %v2135 = vsel %vm2128, %v2131, %v2134
  %v2136 = vsel %vm2126, nan, %v2135
  %v2137 = vmul.f32 %v1305, %v1415
  %v2138 = vmul.f32 %v1306, %v1518
  %v2139 = vmul.f32 %v1307, %v1621
  %v2140 = vmul.f32 %v1308, %v1724
  %v2141 = vmul.f32 %v1309, %v1827
  %v2142 = vmul.f32 %v1310, %v1930
  %v2143 = vmul.f32 %v1311, %v2033
  %v2144 = vmul.f32 %v1312, %v2136
  %v2145 = vand.u32 2147483647, %v1033
  %vm2146 = vcmp.le.f32.partialorder %v2145, 0.7853982
  %vm2147 = vcmp.lt.s32.totalorder %v1033, 0
  %v2148 = vand.u32 %v1033, 2139095040
  %v2149 = vshrl.u32 %v2148, 23
  %v2150 = vsub.s32 %v2149, 127
  %v2151 = vand.u32 2147483647, %v1033
  %v2152 = vand.u32 %v2151, 8388607
  %v2153 = vor.u32 %v2152, 8388608
  %v2154 = vsub.s32 0, %v2153
  %v2155 = vadd.s32 %v2150, 1
  %vm2156 = vcmp.gt.s32.totalorder %v2155, 0
  %v2157 = vsel %vm2156, %v2155, 0
  %v2158 = vshrl.u32 %v2157, 5
  %v2159 = vand.u32 %v2157, 31
  %v2160 = vsub.s32 32, %v2159
  %v2161 = vshrl.u32 683565275, %v2160
  %v2162 = vshll.u32 683565275, %v2159
  %v2163 = vshrl.u32 2475754826, %v2160
  %v2164 = vor.u32 %v2162, %v2163
  %v2165 = vshll.u32 2475754826, %v2159
  %v2166 = vshrl.u32 2131351028, %v2160
  %v2167 = vor.u32 %v2165, %v2166
  %v2168 = vshll.u32 2131351028, %v2159
  %v2169 = vshrl.u32 2102212464, %v2160
  %v2170 = vor.u32 %v2168, %v2169
  %v2171 = vshll.u32 2102212464, %v2159
  %v2172 = vshrl.u32 920167782, %v2160
  %v2173 = vor.u32 %v2171, %v2172
  %v2174 = vshll.u32 920167782, %v2159
  %v2175 = vshrl.u32 1326507024, %v2160
  %v2176 = vor.u32 %v2174, %v2175
  %vm2177 = vcmp.lt.s32.totalorder %v2158, 1
  %vm2178 = vcmp.lt.s32.totalorder %v2158, 2
  %vm2179 = vcmp.lt.s32.totalorder %v2158, 3
  %vm2180 = vcmp.lt.s32.totalorder %v2158, 4
  %v2181 = vsel %vm2177, %v2161, %v2164
  %v2182 = vsel %vm2180, %v2170, 2102212464
  %v2183 = vsel %vm2179, %v2167, %v2182
  %v2184 = vsel %vm2178, %v2181, %v2183
  %v2185 = vsel %vm2177, %v2164, %v2167
  %v2186 = vsel %vm2180, %v2173, 920167782
  %v2187 = vsel %vm2179, %v2170, %v2186
  %v2188 = vsel %vm2178, %v2185, %v2187
  %v2189 = vsel %vm2177, %v2167, %v2170
  %v2190 = vsel %vm2180, %v2176, 1326507024
  %v2191 = vsel %vm2179, %v2173, %v2190
  %v2192 = vsel %vm2178, %v2189, %v2191
  %v2193 = vshll.u32 %v2153, 8
  %v2194 = vmul.u32.u64.compose %v2193, %v2192
  %v2195 = vextract.low.u32 %v2194
  %v2196 = vextract.high.u32 %v2194
  %v2197 = vmul.u32.u64.compose %v2193, %v2188
  %v2198 = vextract.low.u32 %v2197
  %v2199 = vextract.high.u32 %v2197
  %v2200 = vmul.u32 %v2193, %v2184
  %v2201 = vadd.s32 %v2196, %v2198
  %vm2202 = vc.u32 %v2196, %v2198
  %v2203 = vadd.s32 %v2199, 1
  %v2204 = vsel %vm2202, %v2203, %v2199
  %v2205 = vadd.s32 %v2200, %v2204
  %v2206 = vadd.s32 %v2205, 536870912
  %v2207 = vshrl.u32 %v2206, 30
  %v2208 = vshll.u32 %v2207, 30
  %v2209 = vsub.s32 %v2205, %v2208
  %vm2210 = vcmp.lt.s32.totalorder %v2209, 0
  %v2211 = vsub.s32 0, %v2209
  %v2212 = vsel %vm2210, %v2211, %v2209
  %v2213 = vclz %v2212
  %v2214 = vsub.s32 %v2213, 2
  %vm2215 = vcmp.gt.s32.totalorder 0, %v2214
  %v2216 = vsel %vm2215, 0, %v2214
  %v2217 = vsub.s32 32, %v2216
  %v2218 = vshll.u32 %v2209, %v2216
  %v2219 = vshrl.u32 %v2201, %v2217
  %v2220 = vor.u32 %v2218, %v2219
  %v2221 = vsub.s32 4294967266, %v2216
  %v2222 = vadd.s32 %v2221, 127
  %v2223 = vshll.u32 %v2222, 23
  %v2224 = vor.u32 4788187, %v2223
  %v2225 = vand.u32 2147483647, %v2224
  %v2227 = vcvt.s32.f32 %v2220
  %v2228 = vmul.f32 %v2227, %v2225
  %v2229 = vxor.u32 %v2228, 2147483648
  %v2230 = vsel %vm2147, %v2229, %v2228
  %v2231 = vsub.s32 4, %v2207
  %v2232 = vsel %vm2147, %v2231, %v2207
  %v2233 = vsel %vm2146, %v1033, %v2230
  %v2234 = vsel %vm2146, 0, %v2232
  %v2235 = vcosq.f32.pop %v2233
  %v2236 = vsinq.f32.pop %v2233
  %vm2237 = vweird.f32 %v1033
  %v2238 = vadd.s32 %v2234, 3
  %v2239 = vand.u32 %v2238, 3
  %vm2240 = vcmp.lt.s32.totalorder %v2239, 2
  %vm2241 = vcmp.eq.s32.totalorder %v2239, 0
  %v2242 = vxor.u32 %v2236, 2147483648
  %v2243 = vsel %vm2241, %v2235, %v2242
  %vm2244 = vcmp.eq.s32.totalorder %v2239, 2
  %v2245 = vxor.u32 %v2235, 2147483648
  %v2246 = vsel %vm2244, %v2245, %v2236
  %v2247 = vsel %vm2240, %v2243, %v2246
  %v2248 = vsel %vm2237, nan, %v2247
  %v2249 = vand.u32 2147483647, %v1034
  %vm2250 = vcmp.le.f32.partialorder %v2249, 0.7853982
  %vm2251 = vcmp.lt.s32.totalorder %v1034, 0
  %v2252 = vand.u32 %v1034, 2139095040
  %v2253 = vshrl.u32 %v2252, 23
  %v2254 = vsub.s32 %v2253, 127
  %v2255 = vand.u32 2147483647, %v1034
  %v2256 = vand.u32 %v2255, 8388607
  %v2257 = vor.u32 %v2256, 8388608
  %v2258 = vsub.s32 0, %v2257
  %v2259 = vadd.s32 %v2254, 1
  %vm2260 = vcmp.gt.s32.totalorder %v2259, 0
  %v2261 = vsel %vm2260, %v2259, 0
  %v2262 = vshrl.u32 %v2261, 5
  %v2263 = vand.u32 %v2261, 31
  %v2264 = vsub.s32 32, %v2263
  %v2265 = vshrl.u32 683565275, %v2264
  %v2266 = vshll.u32 683565275, %v2263
  %v2267 = vshrl.u32 2475754826, %v2264
  %v2268 = vor.u32 %v2266, %v2267
  %v2269 = vshll.u32 2475754826, %v2263
  %v2270 = vshrl.u32 2131351028, %v2264
  %v2271 = vor.u32 %v2269, %v2270
  %v2272 = vshll.u32 2131351028, %v2263
  %v2273 = vshrl.u32 2102212464, %v2264
  %v2274 = vor.u32 %v2272, %v2273
  %v2275 = vshll.u32 2102212464, %v2263
  %v2276 = vshrl.u32 920167782, %v2264
  %v2277 = vor.u32 %v2275, %v2276
  %v2278 = vshll.u32 920167782, %v2263
  %v2279 = vshrl.u32 1326507024, %v2264
  %v2280 = vor.u32 %v2278, %v2279
  %vm2281 = vcmp.lt.s32.totalorder %v2262, 1
  %vm2282 = vcmp.lt.s32.totalorder %v2262, 2
  %vm2283 = vcmp.lt.s32.totalorder %v2262, 3
  %vm2284 = vcmp.lt.s32.totalorder %v2262, 4
  %v2285 = vsel %vm2281, %v2265, %v2268
  %v2286 = vsel %vm2284, %v2274, 2102212464
  %v2287 = vsel %vm2283, %v2271, %v2286
  %v2288 = vsel %vm2282, %v2285, %v2287
  %v2289 = vsel %vm2281, %v2268, %v2271
  %v2290 = vsel %vm2284, %v2277, 920167782
  %v2291 = vsel %vm2283, %v2274, %v2290
  %v2292 = vsel %vm2282, %v2289, %v2291
  %v2293 = vsel %vm2281, %v2271, %v2274
  %v2294 = vsel %vm2284, %v2280, 1326507024
  %v2295 = vsel %vm2283, %v2277, %v2294
  %v2296 = vsel %vm2282, %v2293, %v2295
  %v2297 = vshll.u32 %v2257, 8
  %v2298 = vmul.u32.u64.compose %v2297, %v2296
  %v2299 = vextract.low.u32 %v2298
  %v2300 = vextract.high.u32 %v2298
  %v2301 = vmul.u32.u64.compose %v2297, %v2292
  %v2302 = vextract.low.u32 %v2301
  %v2303 = vextract.high.u32 %v2301
  %v2304 = vmul.u32 %v2297, %v2288
  %v2305 = vadd.s32 %v2300, %v2302
  %vm2306 = vc.u32 %v2300, %v2302
  %v2307 = vadd.s32 %v2303, 1
  %v2308 = vsel %vm2306, %v2307, %v2303
  %v2309 = vadd.s32 %v2304, %v2308
  %v2310 = vadd.s32 %v2309, 536870912
  %v2311 = vshrl.u32 %v2310, 30
  %v2312 = vshll.u32 %v2311, 30
  %v2313 = vsub.s32 %v2309, %v2312
  %vm2314 = vcmp.lt.s32.totalorder %v2313, 0
  %v2315 = vsub.s32 0, %v2313
  %v2316 = vsel %vm2314, %v2315, %v2313
  %v2317 = vclz %v2316
  %v2318 = vsub.s32 %v2317, 2
  %vm2319 = vcmp.gt.s32.totalorder 0, %v2318
  %v2320 = vsel %vm2319, 0, %v2318
  %v2321 = vsub.s32 32, %v2320
  %v2322 = vshll.u32 %v2313, %v2320
  %v2323 = vshrl.u32 %v2305, %v2321
  %v2324 = vor.u32 %v2322, %v2323
  %v2325 = vsub.s32 4294967266, %v2320
  %v2326 = vadd.s32 %v2325, 127
  %v2327 = vshll.u32 %v2326, 23
  %v2328 = vor.u32 4788187, %v2327
  %v2329 = vand.u32 2147483647, %v2328
  %v2331 = vcvt.s32.f32 %v2324
  %v2332 = vmul.f32 %v2331, %v2329
  %v2333 = vxor.u32 %v2332, 2147483648
  %v2334 = vsel %vm2251, %v2333, %v2332
  %v2335 = vsub.s32 4, %v2311
  %v2336 = vsel %vm2251, %v2335, %v2311
  %v2337 = vsel %vm2250, %v1034, %v2334
  %v2338 = vsel %vm2250, 0, %v2336
  %v2339 = vcosq.f32.pop %v2337
  %v2340 = vsinq.f32.pop %v2337
  %vm2341 = vweird.f32 %v1034
  %v2342 = vadd.s32 %v2338, 3
  %v2343 = vand.u32 %v2342, 3
  %vm2344 = vcmp.lt.s32.totalorder %v2343, 2
  %vm2345 = vcmp.eq.s32.totalorder %v2343, 0
  %v2346 = vxor.u32 %v2340, 2147483648
  %v2347 = vsel %vm2345, %v2339, %v2346
  %vm2348 = vcmp.eq.s32.totalorder %v2343, 2
  %v2349 = vxor.u32 %v2339, 2147483648
  %v2350 = vsel %vm2348, %v2349, %v2340
  %v2351 = vsel %vm2344, %v2347, %v2350
  %v2352 = vsel %vm2341, nan, %v2351
  %v2353 = vand.u32 2147483647, %v1035
  %vm2354 = vcmp.le.f32.partialorder %v2353, 0.7853982
  %vm2355 = vcmp.lt.s32.totalorder %v1035, 0
  %v2356 = vand.u32 %v1035, 2139095040
  %v2357 = vshrl.u32 %v2356, 23
  %v2358 = vsub.s32 %v2357, 127
  %v2359 = vand.u32 2147483647, %v1035
  %v2360 = vand.u32 %v2359, 8388607
  %v2361 = vor.u32 %v2360, 8388608
  %v2362 = vsub.s32 0, %v2361
  %v2363 = vadd.s32 %v2358, 1
  %vm2364 = vcmp.gt.s32.totalorder %v2363, 0
  %v2365 = vsel %vm2364, %v2363, 0
  %v2366 = vshrl.u32 %v2365, 5
  %v2367 = vand.u32 %v2365, 31
  %v2368 = vsub.s32 32, %v2367
  %v2369 = vshrl.u32 683565275, %v2368
  %v2370 = vshll.u32 683565275, %v2367
  %v2371 = vshrl.u32 2475754826, %v2368
  %v2372 = vor.u32 %v2370, %v2371
  %v2373 = vshll.u32 2475754826, %v2367
  %v2374 = vshrl.u32 2131351028, %v2368
  %v2375 = vor.u32 %v2373, %v2374
  %v2376 = vshll.u32 2131351028, %v2367
  %v2377 = vshrl.u32 2102212464, %v2368
  %v2378 = vor.u32 %v2376, %v2377
  %v2379 = vshll.u32 2102212464, %v2367
  %v2380 = vshrl.u32 920167782, %v2368
  %v2381 = vor.u32 %v2379, %v2380
  %v2382 = vshll.u32 920167782, %v2367
  %v2383 = vshrl.u32 1326507024, %v2368
  %v2384 = vor.u32 %v2382, %v2383
  %vm2385 = vcmp.lt.s32.totalorder %v2366, 1
  %vm2386 = vcmp.lt.s32.totalorder %v2366, 2
  %vm2387 = vcmp.lt.s32.totalorder %v2366, 3
  %vm2388 = vcmp.lt.s32.totalorder %v2366, 4
  %v2389 = vsel %vm2385, %v2369, %v2372
  %v2390 = vsel %vm2388, %v2378, 2102212464
  %v2391 = vsel %vm2387, %v2375, %v2390
  %v2392 = vsel %vm2386, %v2389, %v2391
  %v2393 = vsel %vm2385, %v2372, %v2375
  %v2394 = vsel %vm2388, %v2381, 920167782
  %v2395 = vsel %vm2387, %v2378, %v2394
  %v2396 = vsel %vm2386, %v2393, %v2395
  %v2397 = vsel %vm2385, %v2375, %v2378
  %v2398 = vsel %vm2388, %v2384, 1326507024
  %v2399 = vsel %vm2387, %v2381, %v2398
  %v2400 = vsel %vm2386, %v2397, %v2399
  %v2401 = vshll.u32 %v2361, 8
  %v2402 = vmul.u32.u64.compose %v2401, %v2400
  %v2403 = vextract.low.u32 %v2402
  %v2404 = vextract.high.u32 %v2402
  %v2405 = vmul.u32.u64.compose %v2401, %v2396
  %v2406 = vextract.low.u32 %v2405
  %v2407 = vextract.high.u32 %v2405
  %v2408 = vmul.u32 %v2401, %v2392
  %v2409 = vadd.s32 %v2404, %v2406
  %vm2410 = vc.u32 %v2404, %v2406
  %v2411 = vadd.s32 %v2407, 1
  %v2412 = vsel %vm2410, %v2411, %v2407
  %v2413 = vadd.s32 %v2408, %v2412
  %v2414 = vadd.s32 %v2413, 536870912
  %v2415 = vshrl.u32 %v2414, 30
  %v2416 = vshll.u32 %v2415, 30
  %v2417 = vsub.s32 %v2413, %v2416
  %vm2418 = vcmp.lt.s32.totalorder %v2417, 0
  %v2419 = vsub.s32 0, %v2417
  %v2420 = vsel %vm2418, %v2419, %v2417
  %v2421 = vclz %v2420
  %v2422 = vsub.s32 %v2421, 2
  %vm2423 = vcmp.gt.s32.totalorder 0, %v2422
  %v2424 = vsel %vm2423, 0, %v2422
  %v2425 = vsub.s32 32, %v2424
  %v2426 = vshll.u32 %v2417, %v2424
  %v2427 = vshrl.u32 %v2409, %v2425
  %v2428 = vor.u32 %v2426, %v2427
  %v2429 = vsub.s32 4294967266, %v2424
  %v2430 = vadd.s32 %v2429, 127
  %v2431 = vshll.u32 %v2430, 23
  %v2432 = vor.u32 4788187, %v2431
  %v2433 = vand.u32 2147483647, %v2432
  %v2435 = vcvt.s32.f32 %v2428
  %v2436 = vmul.f32 %v2435, %v2433
  %v2437 = vxor.u32 %v2436, 2147483648
  %v2438 = vsel %vm2355, %v2437, %v2436
  %v2439 = vsub.s32 4, %v2415
  %v2440 = vsel %vm2355, %v2439, %v2415
  %v2441 = vsel %vm2354, %v1035, %v2438
  %v2442 = vsel %vm2354, 0, %v2440
  %v2443 = vcosq.f32.pop %v2441
  %v2444 = vsinq.f32.pop %v2441
  %vm2445 = vweird.f32 %v1035
  %v2446 = vadd.s32 %v2442, 3
  %v2447 = vand.u32 %v2446, 3
  %vm2448 = vcmp.lt.s32.totalorder %v2447, 2
  %vm2449 = vcmp.eq.s32.totalorder %v2447, 0
  %v2450 = vxor.u32 %v2444, 2147483648
  %v2451 = vsel %vm2449, %v2443, %v2450
  %vm2452 = vcmp.eq.s32.totalorder %v2447, 2
  %v2453 = vxor.u32 %v2443, 2147483648
  %v2454 = vsel %vm2452, %v2453, %v2444
  %v2455 = vsel %vm2448, %v2451, %v2454
  %v2456 = vsel %vm2445, nan, %v2455
  %v2457 = vand.u32 2147483647, %v1036
  %vm2458 = vcmp.le.f32.partialorder %v2457, 0.7853982
  %vm2459 = vcmp.lt.s32.totalorder %v1036, 0
  %v2460 = vand.u32 %v1036, 2139095040
  %v2461 = vshrl.u32 %v2460, 23
  %v2462 = vsub.s32 %v2461, 127
  %v2463 = vand.u32 2147483647, %v1036
  %v2464 = vand.u32 %v2463, 8388607
  %v2465 = vor.u32 %v2464, 8388608
  %v2466 = vsub.s32 0, %v2465
  %v2467 = vadd.s32 %v2462, 1
  %vm2468 = vcmp.gt.s32.totalorder %v2467, 0
  %v2469 = vsel %vm2468, %v2467, 0
  %v2470 = vshrl.u32 %v2469, 5
  %v2471 = vand.u32 %v2469, 31
  %v2472 = vsub.s32 32, %v2471
  %v2473 = vshrl.u32 683565275, %v2472
  %v2474 = vshll.u32 683565275, %v2471
  %v2475 = vshrl.u32 2475754826, %v2472
  %v2476 = vor.u32 %v2474, %v2475
  %v2477 = vshll.u32 2475754826, %v2471
  %v2478 = vshrl.u32 2131351028, %v2472
  %v2479 = vor.u32 %v2477, %v2478
  %v2480 = vshll.u32 2131351028, %v2471
  %v2481 = vshrl.u32 2102212464, %v2472
  %v2482 = vor.u32 %v2480, %v2481
  %v2483 = vshll.u32 2102212464, %v2471
  %v2484 = vshrl.u32 920167782, %v2472
  %v2485 = vor.u32 %v2483, %v2484
  %v2486 = vshll.u32 920167782, %v2471
  %v2487 = vshrl.u32 1326507024, %v2472
  %v2488 = vor.u32 %v2486, %v2487
  %vm2489 = vcmp.lt.s32.totalorder %v2470, 1
  %vm2490 = vcmp.lt.s32.totalorder %v2470, 2
  %vm2491 = vcmp.lt.s32.totalorder %v2470, 3
  %vm2492 = vcmp.lt.s32.totalorder %v2470, 4
  %v2493 = vsel %vm2489, %v2473, %v2476
  %v2494 = vsel %vm2492, %v2482, 2102212464
  %v2495 = vsel %vm2491, %v2479, %v2494
  %v2496 = vsel %vm2490, %v2493, %v2495
  %v2497 = vsel %vm2489, %v2476, %v2479
  %v2498 = vsel %vm2492, %v2485, 920167782
  %v2499 = vsel %vm2491, %v2482, %v2498
  %v2500 = vsel %vm2490, %v2497, %v2499
  %v2501 = vsel %vm2489, %v2479, %v2482
  %v2502 = vsel %vm2492, %v2488, 1326507024
  %v2503 = vsel %vm2491, %v2485, %v2502
  %v2504 = vsel %vm2490, %v2501, %v2503
  %v2505 = vshll.u32 %v2465, 8
  %v2506 = vmul.u32.u64.compose %v2505, %v2504
  %v2507 = vextract.low.u32 %v2506
  %v2508 = vextract.high.u32 %v2506
  %v2509 = vmul.u32.u64.compose %v2505, %v2500
  %v2510 = vextract.low.u32 %v2509
  %v2511 = vextract.high.u32 %v2509
  %v2512 = vmul.u32 %v2505, %v2496
  %v2513 = vadd.s32 %v2508, %v2510
  %vm2514 = vc.u32 %v2508, %v2510
  %v2515 = vadd.s32 %v2511, 1
  %v2516 = vsel %vm2514, %v2515, %v2511
  %v2517 = vadd.s32 %v2512, %v2516
  %v2518 = vadd.s32 %v2517, 536870912
  %v2519 = vshrl.u32 %v2518, 30
  %v2520 = vshll.u32 %v2519, 30
  %v2521 = vsub.s32 %v2517, %v2520
  %vm2522 = vcmp.lt.s32.totalorder %v2521, 0
  %v2523 = vsub.s32 0, %v2521
  %v2524 = vsel %vm2522, %v2523, %v2521
  %v2525 = vclz %v2524
  %v2526 = vsub.s32 %v2525, 2
  %vm2527 = vcmp.gt.s32.totalorder 0, %v2526
  %v2528 = vsel %vm2527, 0, %v2526
  %v2529 = vsub.s32 32, %v2528
  %v2530 = vshll.u32 %v2521, %v2528
  %v2531 = vshrl.u32 %v2513, %v2529
  %v2532 = vor.u32 %v2530, %v2531
  %v2533 = vsub.s32 4294967266, %v2528
  %v2534 = vadd.s32 %v2533, 127
  %v2535 = vshll.u32 %v2534, 23
  %v2536 = vor.u32 4788187, %v2535
  %v2537 = vand.u32 2147483647, %v2536
  %v2539 = vcvt.s32.f32 %v2532
  %v2540 = vmul.f32 %v2539, %v2537
  %v2541 = vxor.u32 %v2540, 2147483648
  %v2542 = vsel %vm2459, %v2541, %v2540
  %v2543 = vsub.s32 4, %v2519
  %v2544 = vsel %vm2459, %v2543, %v2519
  %v2545 = vsel %vm2458, %v1036, %v2542
  %v2546 = vsel %vm2458, 0, %v2544
  %v2547 = vcosq.f32.pop %v2545
  %v2548 = vsinq.f32.pop %v2545
  %vm2549 = vweird.f32 %v1036
  %v2550 = vadd.s32 %v2546, 3
  %v2551 = vand.u32 %v2550, 3
  %vm2552 = vcmp.lt.s32.totalorder %v2551, 2
  %vm2553 = vcmp.eq.s32.totalorder %v2551, 0
  %v2554 = vxor.u32 %v2548, 2147483648
  %v2555 = vsel %vm2553, %v2547, %v2554
  %vm2556 = vcmp.eq.s32.totalorder %v2551, 2
  %v2557 = vxor.u32 %v2547, 2147483648
  %v2558 = vsel %vm2556, %v2557, %v2548
  %v2559 = vsel %vm2552, %v2555, %v2558
  %v2560 = vsel %vm2549, nan, %v2559
  %v2561 = vand.u32 2147483647, %v1037
  %vm2562 = vcmp.le.f32.partialorder %v2561, 0.7853982
  %vm2563 = vcmp.lt.s32.totalorder %v1037, 0
  %v2564 = vand.u32 %v1037, 2139095040
  %v2565 = vshrl.u32 %v2564, 23
  %v2566 = vsub.s32 %v2565, 127
  %v2567 = vand.u32 2147483647, %v1037
  %v2568 = vand.u32 %v2567, 8388607
  %v2569 = vor.u32 %v2568, 8388608
  %v2570 = vsub.s32 0, %v2569
  %v2571 = vadd.s32 %v2566, 1
  %vm2572 = vcmp.gt.s32.totalorder %v2571, 0
  %v2573 = vsel %vm2572, %v2571, 0
  %v2574 = vshrl.u32 %v2573, 5
  %v2575 = vand.u32 %v2573, 31
  %v2576 = vsub.s32 32, %v2575
  %v2577 = vshrl.u32 683565275, %v2576
  %v2578 = vshll.u32 683565275, %v2575
  %v2579 = vshrl.u32 2475754826, %v2576
  %v2580 = vor.u32 %v2578, %v2579
  %v2581 = vshll.u32 2475754826, %v2575
  %v2582 = vshrl.u32 2131351028, %v2576
  %v2583 = vor.u32 %v2581, %v2582
  %v2584 = vshll.u32 2131351028, %v2575
  %v2585 = vshrl.u32 2102212464, %v2576
  %v2586 = vor.u32 %v2584, %v2585
  %v2587 = vshll.u32 2102212464, %v2575
  %v2588 = vshrl.u32 920167782, %v2576
  %v2589 = vor.u32 %v2587, %v2588
  %v2590 = vshll.u32 920167782, %v2575
  %v2591 = vshrl.u32 1326507024, %v2576
  %v2592 = vor.u32 %v2590, %v2591
  %vm2593 = vcmp.lt.s32.totalorder %v2574, 1
  %vm2594 = vcmp.lt.s32.totalorder %v2574, 2
  %vm2595 = vcmp.lt.s32.totalorder %v2574, 3
  %vm2596 = vcmp.lt.s32.totalorder %v2574, 4
  %v2597 = vsel %vm2593, %v2577, %v2580
  %v2598 = vsel %vm2596, %v2586, 2102212464
  %v2599 = vsel %vm2595, %v2583, %v2598
  %v2600 = vsel %vm2594, %v2597, %v2599
  %v2601 = vsel %vm2593, %v2580, %v2583
  %v2602 = vsel %vm2596, %v2589, 920167782
  %v2603 = vsel %vm2595, %v2586, %v2602
  %v2604 = vsel %vm2594, %v2601, %v2603
  %v2605 = vsel %vm2593, %v2583, %v2586
  %v2606 = vsel %vm2596, %v2592, 1326507024
  %v2607 = vsel %vm2595, %v2589, %v2606
  %v2608 = vsel %vm2594, %v2605, %v2607
  %v2609 = vshll.u32 %v2569, 8
  %v2610 = vmul.u32.u64.compose %v2609, %v2608
  %v2611 = vextract.low.u32 %v2610
  %v2612 = vextract.high.u32 %v2610
  %v2613 = vmul.u32.u64.compose %v2609, %v2604
  %v2614 = vextract.low.u32 %v2613
  %v2615 = vextract.high.u32 %v2613
  %v2616 = vmul.u32 %v2609, %v2600
  %v2617 = vadd.s32 %v2612, %v2614
  %vm2618 = vc.u32 %v2612, %v2614
  %v2619 = vadd.s32 %v2615, 1
  %v2620 = vsel %vm2618, %v2619, %v2615
  %v2621 = vadd.s32 %v2616, %v2620
  %v2622 = vadd.s32 %v2621, 536870912
  %v2623 = vshrl.u32 %v2622, 30
  %v2624 = vshll.u32 %v2623, 30
  %v2625 = vsub.s32 %v2621, %v2624
  %vm2626 = vcmp.lt.s32.totalorder %v2625, 0
  %v2627 = vsub.s32 0, %v2625
  %v2628 = vsel %vm2626, %v2627, %v2625
  %v2629 = vclz %v2628
  %v2630 = vsub.s32 %v2629, 2
  %vm2631 = vcmp.gt.s32.totalorder 0, %v2630
  %v2632 = vsel %vm2631, 0, %v2630
  %v2633 = vsub.s32 32, %v2632
  %v2634 = vshll.u32 %v2625, %v2632
  %v2635 = vshrl.u32 %v2617, %v2633
  %v2636 = vor.u32 %v2634, %v2635
  %v2637 = vsub.s32 4294967266, %v2632
  %v2638 = vadd.s32 %v2637, 127
  %v2639 = vshll.u32 %v2638, 23
  %v2640 = vor.u32 4788187, %v2639
  %v2641 = vand.u32 2147483647, %v2640
  %v2643 = vcvt.s32.f32 %v2636
  %v2644 = vmul.f32 %v2643, %v2641
  %v2645 = vxor.u32 %v2644, 2147483648
  %v2646 = vsel %vm2563, %v2645, %v2644
  %v2647 = vsub.s32 4, %v2623
  %v2648 = vsel %vm2563, %v2647, %v2623
  %v2649 = vsel %vm2562, %v1037, %v2646
  %v2650 = vsel %vm2562, 0, %v2648
  %v2651 = vcosq.f32.pop %v2649
  %v2652 = vsinq.f32.pop %v2649
  %vm2653 = vweird.f32 %v1037
  %v2654 = vadd.s32 %v2650, 3
  %v2655 = vand.u32 %v2654, 3
  %vm2656 = vcmp.lt.s32.totalorder %v2655, 2
  %vm2657 = vcmp.eq.s32.totalorder %v2655, 0
  %v2658 = vxor.u32 %v2652, 2147483648
  %v2659 = vsel %vm2657, %v2651, %v2658
  %vm2660 = vcmp.eq.s32.totalorder %v2655, 2
  %v2661 = vxor.u32 %v2651, 2147483648
  %v2662 = vsel %vm2660, %v2661, %v2652
  %v2663 = vsel %vm2656, %v2659, %v2662
  %v2664 = vsel %vm2653, nan, %v2663
  %v2665 = vand.u32 2147483647, %v1038
  %vm2666 = vcmp.le.f32.partialorder %v2665, 0.7853982
  %vm2667 = vcmp.lt.s32.totalorder %v1038, 0
  %v2668 = vand.u32 %v1038, 2139095040
  %v2669 = vshrl.u32 %v2668, 23
  %v2670 = vsub.s32 %v2669, 127
  %v2671 = vand.u32 2147483647, %v1038
  %v2672 = vand.u32 %v2671, 8388607
  %v2673 = vor.u32 %v2672, 8388608
  %v2674 = vsub.s32 0, %v2673
  %v2675 = vadd.s32 %v2670, 1
  %vm2676 = vcmp.gt.s32.totalorder %v2675, 0
  %v2677 = vsel %vm2676, %v2675, 0
  %v2678 = vshrl.u32 %v2677, 5
  %v2679 = vand.u32 %v2677, 31
  %v2680 = vsub.s32 32, %v2679
  %v2681 = vshrl.u32 683565275, %v2680
  %v2682 = vshll.u32 683565275, %v2679
  %v2683 = vshrl.u32 2475754826, %v2680
  %v2684 = vor.u32 %v2682, %v2683
  %v2685 = vshll.u32 2475754826, %v2679
  %v2686 = vshrl.u32 2131351028, %v2680
  %v2687 = vor.u32 %v2685, %v2686
  %v2688 = vshll.u32 2131351028, %v2679
  %v2689 = vshrl.u32 2102212464, %v2680
  %v2690 = vor.u32 %v2688, %v2689
  %v2691 = vshll.u32 2102212464, %v2679
  %v2692 = vshrl.u32 920167782, %v2680
  %v2693 = vor.u32 %v2691, %v2692
  %v2694 = vshll.u32 920167782, %v2679
  %v2695 = vshrl.u32 1326507024, %v2680
  %v2696 = vor.u32 %v2694, %v2695
  %vm2697 = vcmp.lt.s32.totalorder %v2678, 1
  %vm2698 = vcmp.lt.s32.totalorder %v2678, 2
  %vm2699 = vcmp.lt.s32.totalorder %v2678, 3
  %vm2700 = vcmp.lt.s32.totalorder %v2678, 4
  %v2701 = vsel %vm2697, %v2681, %v2684
  %v2702 = vsel %vm2700, %v2690, 2102212464
  %v2703 = vsel %vm2699, %v2687, %v2702
  %v2704 = vsel %vm2698, %v2701, %v2703
  %v2705 = vsel %vm2697, %v2684, %v2687
  %v2706 = vsel %vm2700, %v2693, 920167782
  %v2707 = vsel %vm2699, %v2690, %v2706
  %v2708 = vsel %vm2698, %v2705, %v2707
  %v2709 = vsel %vm2697, %v2687, %v2690
  %v2710 = vsel %vm2700, %v2696, 1326507024
  %v2711 = vsel %vm2699, %v2693, %v2710
  %v2712 = vsel %vm2698, %v2709, %v2711
  %v2713 = vshll.u32 %v2673, 8
  %v2714 = vmul.u32.u64.compose %v2713, %v2712
  %v2715 = vextract.low.u32 %v2714
  %v2716 = vextract.high.u32 %v2714
  %v2717 = vmul.u32.u64.compose %v2713, %v2708
  %v2718 = vextract.low.u32 %v2717
  %v2719 = vextract.high.u32 %v2717
  %v2720 = vmul.u32 %v2713, %v2704
  %v2721 = vadd.s32 %v2716, %v2718
  %vm2722 = vc.u32 %v2716, %v2718
  %v2723 = vadd.s32 %v2719, 1
  %v2724 = vsel %vm2722, %v2723, %v2719
  %v2725 = vadd.s32 %v2720, %v2724
  %v2726 = vadd.s32 %v2725, 536870912
  %v2727 = vshrl.u32 %v2726, 30
  %v2728 = vshll.u32 %v2727, 30
  %v2729 = vsub.s32 %v2725, %v2728
  %vm2730 = vcmp.lt.s32.totalorder %v2729, 0
  %v2731 = vsub.s32 0, %v2729
  %v2732 = vsel %vm2730, %v2731, %v2729
  %v2733 = vclz %v2732
  %v2734 = vsub.s32 %v2733, 2
  %vm2735 = vcmp.gt.s32.totalorder 0, %v2734
  %v2736 = vsel %vm2735, 0, %v2734
  %v2737 = vsub.s32 32, %v2736
  %v2738 = vshll.u32 %v2729, %v2736
  %v2739 = vshrl.u32 %v2721, %v2737
  %v2740 = vor.u32 %v2738, %v2739
  %v2741 = vsub.s32 4294967266, %v2736
  %v2742 = vadd.s32 %v2741, 127
  %v2743 = vshll.u32 %v2742, 23
  %v2744 = vor.u32 4788187, %v2743
  %v2745 = vand.u32 2147483647, %v2744
  %v2747 = vcvt.s32.f32 %v2740
  %v2748 = vmul.f32 %v2747, %v2745
  %v2749 = vxor.u32 %v2748, 2147483648
  %v2750 = vsel %vm2667, %v2749, %v2748
  %v2751 = vsub.s32 4, %v2727
  %v2752 = vsel %vm2667, %v2751, %v2727
  %v2753 = vsel %vm2666, %v1038, %v2750
  %v2754 = vsel %vm2666, 0, %v2752
  %v2755 = vcosq.f32.pop %v2753
  %v2756 = vsinq.f32.pop %v2753
  %vm2757 = vweird.f32 %v1038
  %v2758 = vadd.s32 %v2754, 3
  %v2759 = vand.u32 %v2758, 3
  %vm2760 = vcmp.lt.s32.totalorder %v2759, 2
  %vm2761 = vcmp.eq.s32.totalorder %v2759, 0
  %v2762 = vxor.u32 %v2756, 2147483648
  %v2763 = vsel %vm2761, %v2755, %v2762
  %vm2764 = vcmp.eq.s32.totalorder %v2759, 2
  %v2765 = vxor.u32 %v2755, 2147483648
  %v2766 = vsel %vm2764, %v2765, %v2756
  %v2767 = vsel %vm2760, %v2763, %v2766
  %v2768 = vsel %vm2757, nan, %v2767
  %v2769 = vand.u32 2147483647, %v1039
  %vm2770 = vcmp.le.f32.partialorder %v2769, 0.7853982
  %vm2771 = vcmp.lt.s32.totalorder %v1039, 0
  %v2772 = vand.u32 %v1039, 2139095040
  %v2773 = vshrl.u32 %v2772, 23
  %v2774 = vsub.s32 %v2773, 127
  %v2775 = vand.u32 2147483647, %v1039
  %v2776 = vand.u32 %v2775, 8388607
  %v2777 = vor.u32 %v2776, 8388608
  %v2778 = vsub.s32 0, %v2777
  %v2779 = vadd.s32 %v2774, 1
  %vm2780 = vcmp.gt.s32.totalorder %v2779, 0
  %v2781 = vsel %vm2780, %v2779, 0
  %v2782 = vshrl.u32 %v2781, 5
  %v2783 = vand.u32 %v2781, 31
  %v2784 = vsub.s32 32, %v2783
  %v2785 = vshrl.u32 683565275, %v2784
  %v2786 = vshll.u32 683565275, %v2783
  %v2787 = vshrl.u32 2475754826, %v2784
  %v2788 = vor.u32 %v2786, %v2787
  %v2789 = vshll.u32 2475754826, %v2783
  %v2790 = vshrl.u32 2131351028, %v2784
  %v2791 = vor.u32 %v2789, %v2790
  %v2792 = vshll.u32 2131351028, %v2783
  %v2793 = vshrl.u32 2102212464, %v2784
  %v2794 = vor.u32 %v2792, %v2793
  %v2795 = vshll.u32 2102212464, %v2783
  %v2796 = vshrl.u32 920167782, %v2784
  %v2797 = vor.u32 %v2795, %v2796
  %v2798 = vshll.u32 920167782, %v2783
  %v2799 = vshrl.u32 1326507024, %v2784
  %v2800 = vor.u32 %v2798, %v2799
  %vm2801 = vcmp.lt.s32.totalorder %v2782, 1
  %vm2802 = vcmp.lt.s32.totalorder %v2782, 2
  %vm2803 = vcmp.lt.s32.totalorder %v2782, 3
  %vm2804 = vcmp.lt.s32.totalorder %v2782, 4
  %v2805 = vsel %vm2801, %v2785, %v2788
  %v2806 = vsel %vm2804, %v2794, 2102212464
  %v2807 = vsel %vm2803, %v2791, %v2806
  %v2808 = vsel %vm2802, %v2805, %v2807
  %v2809 = vsel %vm2801, %v2788, %v2791
  %v2810 = vsel %vm2804, %v2797, 920167782
  %v2811 = vsel %vm2803, %v2794, %v2810
  %v2812 = vsel %vm2802, %v2809, %v2811
  %v2813 = vsel %vm2801, %v2791, %v2794
  %v2814 = vsel %vm2804, %v2800, 1326507024
  %v2815 = vsel %vm2803, %v2797, %v2814
  %v2816 = vsel %vm2802, %v2813, %v2815
  %v2817 = vshll.u32 %v2777, 8
  %v2818 = vmul.u32.u64.compose %v2817, %v2816
  %v2819 = vextract.low.u32 %v2818
  %v2820 = vextract.high.u32 %v2818
  %v2821 = vmul.u32.u64.compose %v2817, %v2812
  %v2822 = vextract.low.u32 %v2821
  %v2823 = vextract.high.u32 %v2821
  %v2824 = vmul.u32 %v2817, %v2808
  %v2825 = vadd.s32 %v2820, %v2822
  %vm2826 = vc.u32 %v2820, %v2822
  %v2827 = vadd.s32 %v2823, 1
  %v2828 = vsel %vm2826, %v2827, %v2823
  %v2829 = vadd.s32 %v2824, %v2828
  %v2830 = vadd.s32 %v2829, 536870912
  %v2831 = vshrl.u32 %v2830, 30
  %v2832 = vshll.u32 %v2831, 30
  %v2833 = vsub.s32 %v2829, %v2832
  %vm2834 = vcmp.lt.s32.totalorder %v2833, 0
  %v2835 = vsub.s32 0, %v2833
  %v2836 = vsel %vm2834, %v2835, %v2833
  %v2837 = vclz %v2836
  %v2838 = vsub.s32 %v2837, 2
  %vm2839 = vcmp.gt.s32.totalorder 0, %v2838
  %v2840 = vsel %vm2839, 0, %v2838
  %v2841 = vsub.s32 32, %v2840
  %v2842 = vshll.u32 %v2833, %v2840
  %v2843 = vshrl.u32 %v2825, %v2841
  %v2844 = vor.u32 %v2842, %v2843
  %v2845 = vsub.s32 4294967266, %v2840
  %v2846 = vadd.s32 %v2845, 127
  %v2847 = vshll.u32 %v2846, 23
  %v2848 = vor.u32 4788187, %v2847
  %v2849 = vand.u32 2147483647, %v2848
  %v2851 = vcvt.s32.f32 %v2844
  %v2852 = vmul.f32 %v2851, %v2849
  %v2853 = vxor.u32 %v2852, 2147483648
  %v2854 = vsel %vm2771, %v2853, %v2852
  %v2855 = vsub.s32 4, %v2831
  %v2856 = vsel %vm2771, %v2855, %v2831
  %v2857 = vsel %vm2770, %v1039, %v2854
  %v2858 = vsel %vm2770, 0, %v2856
  %v2859 = vcosq.f32.pop %v2857
  %v2860 = vsinq.f32.pop %v2857
  %vm2861 = vweird.f32 %v1039
  %v2862 = vadd.s32 %v2858, 3
  %v2863 = vand.u32 %v2862, 3
  %vm2864 = vcmp.lt.s32.totalorder %v2863, 2
  %vm2865 = vcmp.eq.s32.totalorder %v2863, 0
  %v2866 = vxor.u32 %v2860, 2147483648
  %v2867 = vsel %vm2865, %v2859, %v2866
  %vm2868 = vcmp.eq.s32.totalorder %v2863, 2
  %v2869 = vxor.u32 %v2859, 2147483648
  %v2870 = vsel %vm2868, %v2869, %v2860
  %v2871 = vsel %vm2864, %v2867, %v2870
  %v2872 = vsel %vm2861, nan, %v2871
  %v2873 = vand.u32 2147483647, %v1040
  %vm2874 = vcmp.le.f32.partialorder %v2873, 0.7853982
  %vm2875 = vcmp.lt.s32.totalorder %v1040, 0
  %v2876 = vand.u32 %v1040, 2139095040
  %v2877 = vshrl.u32 %v2876, 23
  %v2878 = vsub.s32 %v2877, 127
  %v2879 = vand.u32 2147483647, %v1040
  %v2880 = vand.u32 %v2879, 8388607
  %v2881 = vor.u32 %v2880, 8388608
  %v2882 = vsub.s32 0, %v2881
  %v2883 = vadd.s32 %v2878, 1
  %vm2884 = vcmp.gt.s32.totalorder %v2883, 0
  %v2885 = vsel %vm2884, %v2883, 0
  %v2886 = vshrl.u32 %v2885, 5
  %v2887 = vand.u32 %v2885, 31
  %v2888 = vsub.s32 32, %v2887
  %v2889 = vshrl.u32 683565275, %v2888
  %v2890 = vshll.u32 683565275, %v2887
  %v2891 = vshrl.u32 2475754826, %v2888
  %v2892 = vor.u32 %v2890, %v2891
  %v2893 = vshll.u32 2475754826, %v2887
  %v2894 = vshrl.u32 2131351028, %v2888
  %v2895 = vor.u32 %v2893, %v2894
  %v2896 = vshll.u32 2131351028, %v2887
  %v2897 = vshrl.u32 2102212464, %v2888
  %v2898 = vor.u32 %v2896, %v2897
  %v2899 = vshll.u32 2102212464, %v2887
  %v2900 = vshrl.u32 920167782, %v2888
  %v2901 = vor.u32 %v2899, %v2900
  %v2902 = vshll.u32 920167782, %v2887
  %v2903 = vshrl.u32 1326507024, %v2888
  %v2904 = vor.u32 %v2902, %v2903
  %vm2905 = vcmp.lt.s32.totalorder %v2886, 1
  %vm2906 = vcmp.lt.s32.totalorder %v2886, 2
  %vm2907 = vcmp.lt.s32.totalorder %v2886, 3
  %vm2908 = vcmp.lt.s32.totalorder %v2886, 4
  %v2909 = vsel %vm2905, %v2889, %v2892
  %v2910 = vsel %vm2908, %v2898, 2102212464
  %v2911 = vsel %vm2907, %v2895, %v2910
  %v2912 = vsel %vm2906, %v2909, %v2911
  %v2913 = vsel %vm2905, %v2892, %v2895
  %v2914 = vsel %vm2908, %v2901, 920167782
  %v2915 = vsel %vm2907, %v2898, %v2914
  %v2916 = vsel %vm2906, %v2913, %v2915
  %v2917 = vsel %vm2905, %v2895, %v2898
  %v2918 = vsel %vm2908, %v2904, 1326507024
  %v2919 = vsel %vm2907, %v2901, %v2918
  %v2920 = vsel %vm2906, %v2917, %v2919
  %v2921 = vshll.u32 %v2881, 8
  %v2922 = vmul.u32.u64.compose %v2921, %v2920
  %v2923 = vextract.low.u32 %v2922
  %v2924 = vextract.high.u32 %v2922
  %v2925 = vmul.u32.u64.compose %v2921, %v2916
  %v2926 = vextract.low.u32 %v2925
  %v2927 = vextract.high.u32 %v2925
  %v2928 = vmul.u32 %v2921, %v2912
  %v2929 = vadd.s32 %v2924, %v2926
  %vm2930 = vc.u32 %v2924, %v2926
  %v2931 = vadd.s32 %v2927, 1
  %v2932 = vsel %vm2930, %v2931, %v2927
  %v2933 = vadd.s32 %v2928, %v2932
  %v2934 = vadd.s32 %v2933, 536870912
  %v2935 = vshrl.u32 %v2934, 30
  %v2936 = vshll.u32 %v2935, 30
  %v2937 = vsub.s32 %v2933, %v2936
  %vm2938 = vcmp.lt.s32.totalorder %v2937, 0
  %v2939 = vsub.s32 0, %v2937
  %v2940 = vsel %vm2938, %v2939, %v2937
  %v2941 = vclz %v2940
  %v2942 = vsub.s32 %v2941, 2
  %vm2943 = vcmp.gt.s32.totalorder 0, %v2942
  %v2944 = vsel %vm2943, 0, %v2942
  %v2945 = vsub.s32 32, %v2944
  %v2946 = vshll.u32 %v2937, %v2944
  %v2947 = vshrl.u32 %v2929, %v2945
  %v2948 = vor.u32 %v2946, %v2947
  %v2949 = vsub.s32 4294967266, %v2944
  %v2950 = vadd.s32 %v2949, 127
  %v2951 = vshll.u32 %v2950, 23
  %v2952 = vor.u32 4788187, %v2951
  %v2953 = vand.u32 2147483647, %v2952
  %v2955 = vcvt.s32.f32 %v2948
  %v2956 = vmul.f32 %v2955, %v2953
  %v2957 = vxor.u32 %v2956, 2147483648
  %v2958 = vsel %vm2875, %v2957, %v2956
  %v2959 = vsub.s32 4, %v2935
  %v2960 = vsel %vm2875, %v2959, %v2935
  %v2961 = vsel %vm2874, %v1040, %v2958
  %v2962 = vsel %vm2874, 0, %v2960
  %v2963 = vcosq.f32.pop %v2961
  %v2964 = vsinq.f32.pop %v2961
  %vm2965 = vweird.f32 %v1040
  %v2966 = vadd.s32 %v2962, 3
  %v2967 = vand.u32 %v2966, 3
  %vm2968 = vcmp.lt.s32.totalorder %v2967, 2
  %vm2969 = vcmp.eq.s32.totalorder %v2967, 0
  %v2970 = vxor.u32 %v2964, 2147483648
  %v2971 = vsel %vm2969, %v2963, %v2970
  %vm2972 = vcmp.eq.s32.totalorder %v2967, 2
  %v2973 = vxor.u32 %v2963, 2147483648
  %v2974 = vsel %vm2972, %v2973, %v2964
  %v2975 = vsel %vm2968, %v2971, %v2974
  %v2976 = vsel %vm2965, nan, %v2975
  %v2977 = vmul.f32 %v1305, %v2248
  %v2978 = vmul.f32 %v1306, %v2352
  %v2979 = vmul.f32 %v1307, %v2456
  %v2980 = vmul.f32 %v1308, %v2560
  %v2981 = vmul.f32 %v1309, %v2664
  %v2982 = vmul.f32 %v1310, %v2768
  %v2983 = vmul.f32 %v1311, %v2872
  %v2984 = vmul.f32 %v1312, %v2976
  %v2985 = vld [vmem:[%s6] sm:$0xff]
  %v2986 = vld [vmem:[%s6 + $0x8] sm:$0xff]
  %v2987 = vld [vmem:[%s6 + $0x10] sm:$0xff]
  %v2988 = vld [vmem:[%s6 + $0x18] sm:$0xff]
  %v2989 = vld [vmem:[%s6 + $0x20] sm:$0xff]
  %v2990 = vld [vmem:[%s6 + $0x28] sm:$0xff]
  %v2991 = vld [vmem:[%s6 + $0x30] sm:$0xff]
  %v2992 = vld [vmem:[%s6 + $0x38] sm:$0xff]
  %v2993 = vld [vmem:[%s6 + $0x40] sm:$0xff]
  %v2994 = vld [vmem:[%s6 + $0x48] sm:$0xff]
  %v2995 = vld [vmem:[%s6 + $0x50] sm:$0xff]
  %v2996 = vld [vmem:[%s6 + $0x58] sm:$0xff]
  %v2997 = vld [vmem:[%s6 + $0x60] sm:$0xff]
  %v2998 = vld [vmem:[%s6 + $0x68] sm:$0xff]
  %v2999 = vld [vmem:[%s6 + $0x70] sm:$0xff]
  %v3000 = vld [vmem:[%s6 + $0x78] sm:$0xff]
  %v3001 = vld [vmem:[%s6 + $0x80] sm:$0xff]
  %v3002 = vld [vmem:[%s6 + $0x88] sm:$0xff]
  %v3003 = vld [vmem:[%s6 + $0x90] sm:$0xff]
  %v3004 = vld [vmem:[%s6 + $0x98] sm:$0xff]
  %v3005 = vld [vmem:[%s6 + $0xa0] sm:$0xff]
  %v3006 = vld [vmem:[%s6 + $0xa8] sm:$0xff]
  %v3007 = vld [vmem:[%s6 + $0xb0] sm:$0xff]
  %v3008 = vld [vmem:[%s6 + $0xb8] sm:$0xff]
  %v3009 = vld [vmem:[%s6 + $0xc0] sm:$0xff]
  %v3010 = vld [vmem:[%s6 + $0xc8] sm:$0xff]
  %v3011 = vld [vmem:[%s6 + $0xd0] sm:$0xff]
  %v3012 = vld [vmem:[%s6 + $0xd8] sm:$0xff]
  %v3013 = vld [vmem:[%s6 + $0xe0] sm:$0xff]
  %v3014 = vld [vmem:[%s6 + $0xe8] sm:$0xff]
  %v3015 = vld [vmem:[%s6 + $0xf0] sm:$0xff]
  %v3016 = vld [vmem:[%s6 + $0xf8] sm:$0xff]
  %3017 = vmatprep.subr.mxu0 0.0
  %3018 = vmatpush1.msra.mxu0 %v2985
  %3019 = vmatprep.subr.mxu0 0.0
  %3020 = vmatpush1.msra.mxu0 %v2986
  %3021 = vmatprep.subr.mxu0 0.0
  %3022 = vmatpush1.msra.mxu0 %v2987
  %3023 = vmatprep.subr.mxu0 0.0
  %3024 = vmatpush1.msra.mxu0 %v2988
  %3025 = vmatprep.subr.mxu0 0.0
  %3026 = vmatpush1.msra.mxu0 %v2989
  %3027 = vmatprep.subr.mxu0 0.0
  %3028 = vmatpush1.msra.mxu0 %v2990
  %3029 = vmatprep.subr.mxu0 0.0
  %3030 = vmatpush1.msra.mxu0 %v2991
  %3031 = vmatprep.subr.mxu0 0.0
  %3032 = vmatpush1.msra.mxu0 %v2992
  %3033 = vmatprep.subr.mxu0 0.0
  %3034 = vmatpush1.msra.mxu0 %v2993
  %3035 = vmatprep.subr.mxu0 0.0
  %3036 = vmatpush1.msra.mxu0 %v2994
  %3037 = vmatprep.subr.mxu0 0.0
  %3038 = vmatpush1.msra.mxu0 %v2995
  %3039 = vmatprep.subr.mxu0 0.0
  %3040 = vmatpush1.msra.mxu0 %v2996
  %3041 = vmatprep.subr.mxu0 0.0
  %3042 = vmatpush1.msra.mxu0 %v2997
  %3043 = vmatprep.subr.mxu0 0.0
  %3044 = vmatpush1.msra.mxu0 %v2998
  %3045 = vmatprep.subr.mxu0 0.0
  %3046 = vmatpush1.msra.mxu0 %v2999
  %3047 = vmatprep.subr.mxu0 0.0
  %3048 = vmatpush1.msra.mxu0 %v3000
  %3049 = vmatprep.subr.mxu0 0.0
  %3050 = vmatpush1.msra.mxu0 %v3001
  %3051 = vmatprep.subr.mxu0 0.0
  %3052 = vmatpush1.msra.mxu0 %v3002
  %3053 = vmatprep.subr.mxu0 0.0
  %3054 = vmatpush1.msra.mxu0 %v3003
  %3055 = vmatprep.subr.mxu0 0.0
  %3056 = vmatpush1.msra.mxu0 %v3004
  %3057 = vmatprep.subr.mxu0 0.0
  %3058 = vmatpush1.msra.mxu0 %v3005
  %3059 = vmatprep.subr.mxu0 0.0
  %3060 = vmatpush1.msra.mxu0 %v3006
  %3061 = vmatprep.subr.mxu0 0.0
  %3062 = vmatpush1.msra.mxu0 %v3007
  %3063 = vmatprep.subr.mxu0 0.0
  %3064 = vmatpush1.msra.mxu0 %v3008
  %3065 = vmatprep.subr.mxu0 0.0
  %3066 = vmatpush1.msra.mxu0 %v3009
  %3067 = vmatprep.subr.mxu0 0.0
  %3068 = vmatpush1.msra.mxu0 %v3010
  %3069 = vmatprep.subr.mxu0 0.0
  %3070 = vmatpush1.msra.mxu0 %v3011
  %3071 = vmatprep.subr.mxu0 0.0
  %3072 = vmatpush1.msra.mxu0 %v3012
  %3073 = vmatprep.subr.mxu0 0.0
  %3074 = vmatpush1.msra.mxu0 %v3013
  %3075 = vmatprep.subr.mxu0 0.0
  %3076 = vmatpush1.msra.mxu0 %v3014
  %3077 = vmatprep.subr.mxu0 0.0
  %3078 = vmatpush1.msra.mxu0 %v3015
  %3079 = vmatprep.subr.mxu0 0.0
  %3080 = vmatpush1.msra.mxu0 %v3016
  %3081 = vmatprep.mubr.f32.mxu0 %v2977
  %3082 = vmatmul.mubr.f32.gmra.mrb[0].mxu0 %v2137
  %v3083 = vpop.f32.mrb[0].mxu0
  %v3084 = vadd.f32 0.0, %v3083
  %v3085 = vpop.f32.mrb[0].mxu0
  %3086 = vmatprep.mubr.f32.mxu0 %v2978
  %3087 = vmatmul.mubr.f32.gmra.mrb[0].mxu0 %v2138
  %v3088 = vpop.f32.mrb[0].mxu0
  %v3089 = vadd.f32 0.0, %v3088
  %v3090 = vpop.f32.mrb[0].mxu0
  %3091 = vmatprep.mubr.f32.mxu0 %v2979
  %3092 = vmatmul.mubr.f32.gmra.mrb[0].mxu0 %v2139
  %v3093 = vpop.f32.mrb[0].mxu0
  %v3094 = vadd.f32 0.0, %v3093
  %v3095 = vpop.f32.mrb[0].mxu0
  %3096 = vmatprep.mubr.f32.mxu0 %v2980
  %3097 = vmatmul.mubr.f32.gmra.mrb[0].mxu0 %v2140
  %v3098 = vpop.f32.mrb[0].mxu0
  %v3099 = vadd.f32 0.0, %v3098
  %v3100 = vpop.f32.mrb[0].mxu0
  %3101 = vmatprep.mubr.f32.mxu0 %v2981
  %3102 = vmatmul.mubr.f32.gmra.mrb[0].mxu0 %v2141
  %v3103 = vpop.f32.mrb[0].mxu0
  %v3104 = vadd.f32 0.0, %v3103
  %v3105 = vpop.f32.mrb[0].mxu0
  %3106 = vmatprep.mubr.f32.mxu0 %v2982
  %3107 = vmatmul.mubr.f32.gmra.mrb[0].mxu0 %v2142
  %v3108 = vpop.f32.mrb[0].mxu0
  %v3109 = vadd.f32 0.0, %v3108
  %v3110 = vpop.f32.mrb[0].mxu0
  %3111 = vmatprep.mubr.f32.mxu0 %v2983
  %3112 = vmatmul.mubr.f32.gmra.mrb[0].mxu0 %v2143
  %v3113 = vpop.f32.mrb[0].mxu0
  %v3114 = vadd.f32 0.0, %v3113
  %v3115 = vpop.f32.mrb[0].mxu0
  %3116 = vmatprep.mubr.f32.mxu0 %v2984
  %3117 = vmatmul.mubr.f32.gmra.mrb[0].mxu0 %v2144
  %v3118 = vpop.f32.mrb[0].mxu0
  %v3119 = vadd.f32 0.0, %v3118
  %v3120 = vpop.f32.mrb[0].mxu0
  %3121 = vdwg.mxu0
  %v3122 = vld [vmem:[%s7] sm:$0x1]
  %v3124 = vlaneseq
  %v3125 = vshrl.u32 %v3124, 7
  %v3126 = vsub.s32 0, %v3125
  %v3127 = vrot.slane %v3122, %v3126
  %v3129 = vmul.f32 %v3084, %v3127
  %v3130 = vmul.f32 %v3089, %v3127
  %v3131 = vmul.f32 %v3094, %v3127
  %v3132 = vmul.f32 %v3099, %v3127
  %v3133 = vmul.f32 %v3104, %v3127
  %v3134 = vmul.f32 %v3109, %v3127
  %v3135 = vmul.f32 %v3114, %v3127
  %v3136 = vmul.f32 %v3119, %v3127
  %3137 = vst [vmem:[%s8] sm:$0xff] %v3129
  %3138 = vst [vmem:[%s8 + $0x8] sm:$0xff] %v3130
  %3139 = vst [vmem:[%s8 + $0x10] sm:$0xff] %v3131
  %3140 = vst [vmem:[%s8 + $0x18] sm:$0xff] %v3132
  %3141 = vst [vmem:[%s8 + $0x20] sm:$0xff] %v3133
  %3142 = vst [vmem:[%s8 + $0x28] sm:$0xff] %v3134
  %3143 = vst [vmem:[%s8 + $0x30] sm:$0xff] %v3135
  %3144 = vst [vmem:[%s8 + $0x38] sm:$0xff] %v3136
  // Predicated region
  $region34: #{time_stretch_and_pitch_shift.4} parent=0 // pred_check
    _
  $region35: #{time_stretch_and_pitch_shift.4} parent=0 // pred_check_branch
    %3146 = sbr.rel (0) target = $region37
  $region36: #{time_stretch_and_pitch_shift.4} parent=0 // pred_region
    _
  $region37: #{time_stretch_and_pitch_shift.4} parent=0 // pred_fallthru
    _
  // Predicated region
  $region38: #{time_stretch_and_pitch_shift.4} parent=0 // pred_check
    _
  $region39: #{time_stretch_and_pitch_shift.4} parent=0 // pred_check_branch
    %3148 = sbr.rel (0) target = $region41
  $region40: #{time_stretch_and_pitch_shift.4} parent=0 // pred_region
    _
  $region41: #{time_stretch_and_pitch_shift.4} parent=0 // pred_fallthru
    _

// kernel: time_stretch_and_pitch_shift.5
$region0: #{time_stretch_and_pitch_shift.5}
  #allocation0 [shape = 'u32[]', space=smem, size = 0x4, offset = 0x4, fixed_abs, tag = 'smem constant byte address 0x4 - core index']
  #allocation1 [shape = 'u32[144,128]{1,0:T(1,128)}', space=vmem, size = 0x12000, scoped, tag = 'internal scratch']
  %s0 = inlined_call_operand.vmem [shape: f32[192,48], index: 0, kind: input, shape index: {}]
  %s1 = inlined_call_operand.vmem [shape: f32[48,128], index: 1, kind: input, shape index: {}]
  %s2 = inlined_call_operand.vmem [shape: f32[192,128], index: 2, kind: output, shape index: {}]
  %s3 = sld [smem:[#allocation0]]
  $region18: #{time_stretch_and_pitch_shift.5} parent=0
    _
  %s5 = ssub.s32 1, %s3
  %s6 = scalar_select 0, %s5, %s3
  // Predicated region
  $region2: #{time_stretch_and_pitch_shift.5} parent=0 // pred_check
    _
  $region3: #{time_stretch_and_pitch_shift.5} parent=0 // pred_check_branch
    %8 = sbr.rel (0) target = $region5
  $region4: #{time_stretch_and_pitch_shift.5} parent=0 // pred_region
    _
  $region5: #{time_stretch_and_pitch_shift.5} parent=0 // pred_fallthru
    _
  // Predicated region
  $region6: #{time_stretch_and_pitch_shift.5} parent=0 // pred_check
    _
  $region7: #{time_stretch_and_pitch_shift.5} parent=0 // pred_check_branch
    %10 = sbr.rel (0) target = $region9
  $region8: #{time_stretch_and_pitch_shift.5} parent=0 // pred_region
    _
  $region9: #{time_stretch_and_pitch_shift.5} parent=0 // pred_fallthru
    _
  %v11 = vld [vmem:[%s0] sm:$0xff]
  %v12 = vld [vmem:[%s0 + $0x8] sm:$0xff]
  %v13 = vld [vmem:[%s0 + $0x10] sm:$0xff]
  %v14 = vld [vmem:[%s0 + $0x18] sm:$0xff]
  %v15 = vld [vmem:[%s0 + $0x20] sm:$0xff]
  %v16 = vld [vmem:[%s0 + $0x28] sm:$0xff]
  %v17 = vld [vmem:[%s0 + $0x30] sm:$0xff]
  %v18 = vld [vmem:[%s0 + $0x38] sm:$0xff]
  %v19 = vld [vmem:[%s0 + $0x40] sm:$0xff]
  %v20 = vld [vmem:[%s0 + $0x48] sm:$0xff]
  %v21 = vld [vmem:[%s0 + $0x50] sm:$0xff]
  %v22 = vld [vmem:[%s0 + $0x58] sm:$0xff]
  %v23 = vld [vmem:[%s0 + $0x60] sm:$0xff]
  %v24 = vld [vmem:[%s0 + $0x68] sm:$0xff]
  %v25 = vld [vmem:[%s0 + $0x70] sm:$0xff]
  %v26 = vld [vmem:[%s0 + $0x78] sm:$0xff]
  %v27 = vld [vmem:[%s0 + $0x80] sm:$0xff]
  %v28 = vld [vmem:[%s0 + $0x88] sm:$0xff]
  %v29 = vld [vmem:[%s0 + $0x90] sm:$0xff]
  %v30 = vld [vmem:[%s0 + $0x98] sm:$0xff]
  %v31 = vld [vmem:[%s0 + $0xa0] sm:$0xff]
  %v32 = vld [vmem:[%s0 + $0xa8] sm:$0xff]
  %v33 = vld [vmem:[%s0 + $0xb0] sm:$0xff]
  %v34 = vld [vmem:[%s0 + $0xb8] sm:$0xff]
  %v35 = vld [vmem:[%s1] sm:$0xff]
  %v36 = vld [vmem:[%s1 + $0x8] sm:$0xff]
  %v37 = vld [vmem:[%s1 + $0x10] sm:$0xff]
  %v38 = vld [vmem:[%s1 + $0x18] sm:$0xff]
  %v39 = vld [vmem:[%s1 + $0x20] sm:$0xff]
  %v40 = vld [vmem:[%s1 + $0x28] sm:$0xff]
  %vm41 = vcmask 392192
  %v43 = vsel %vm41, %v11, 0
  %v46 = vsel %vm41, %v12, 0
  %v49 = vsel %vm41, %v13, 0
  %v52 = vsel %vm41, %v14, 0
  %v55 = vsel %vm41, %v15, 0
  %v58 = vsel %vm41, %v16, 0
  %v61 = vsel %vm41, %v17, 0
  %v64 = vsel %vm41, %v18, 0
  %v67 = vsel %vm41, %v19, 0
  %v70 = vsel %vm41, %v20, 0
  %v73 = vsel %vm41, %v21, 0
  %v76 = vsel %vm41, %v22, 0
  %v79 = vsel %vm41, %v23, 0
  %v82 = vsel %vm41, %v24, 0
  %v85 = vsel %vm41, %v25, 0
  %v88 = vsel %vm41, %v26, 0
  %v91 = vsel %vm41, %v27, 0
  %v94 = vsel %vm41, %v28, 0
  %v97 = vsel %vm41, %v29, 0
  %v100 = vsel %vm41, %v30, 0
  %v103 = vsel %vm41, %v31, 0
  %v106 = vsel %vm41, %v32, 0
  %v109 = vsel %vm41, %v33, 0
  %v112 = vsel %vm41, %v34, 0
  %114 = vmatprep.subr.mxu0 0.0
  %115 = vmatpush1.msra.mxu0 %v35
  %116 = vmatprep.subr.mxu0 0.0
  %117 = vmatpush1.msra.mxu0 %v36
  %118 = vmatprep.subr.mxu0 0.0
  %119 = vmatpush1.msra.mxu0 %v37
  %120 = vmatprep.subr.mxu0 0.0
  %121 = vmatpush1.msra.mxu0 %v38
  %122 = vmatprep.subr.mxu0 0.0
  %123 = vmatpush1.msra.mxu0 %v39
  %124 = vmatprep.subr.mxu0 0.0
  %125 = vmatpush1.msra.mxu0 %v40
  %126 = vmatprep.subr.mxu0 0.0
  %127 = vmatpush1.msra.mxu0 0.0
  %128 = vmatprep.subr.mxu0 0.0
  %129 = vmatpush1.msra.mxu0 0.0
  %130 = vmatprep.subr.mxu0 0.0
  %131 = vmatpush1.msra.mxu0 0.0
  %132 = vmatprep.subr.mxu0 0.0
  %133 = vmatpush1.msra.mxu0 0.0
  %134 = vmatprep.subr.mxu0 0.0
  %135 = vmatpush1.msra.mxu0 0.0
  %136 = vmatprep.subr.mxu0 0.0
  %137 = vmatpush1.msra.mxu0 0.0
  %138 = vmatprep.subr.mxu0 0.0
  %139 = vmatpush1.msra.mxu0 0.0
  %140 = vmatprep.subr.mxu0 0.0
  %141 = vmatpush1.msra.mxu0 0.0
  %142 = vmatprep.subr.mxu0 0.0
  %143 = vmatpush1.msra.mxu0 0.0
  %144 = vmatprep.subr.mxu0 0.0
  %145 = vmatpush1.msra.mxu0 0.0
  %146 = vmatprep.subr.mxu0 0.0
  %147 = vmatpush1.msra.mxu0 0.0
  %148 = vmatprep.subr.mxu0 0.0
  %149 = vmatpush1.msra.mxu0 0.0
  %150 = vmatprep.subr.mxu0 0.0
  %151 = vmatpush1.msra.mxu0 0.0
  %152 = vmatprep.subr.mxu0 0.0
  %153 = vmatpush1.msra.mxu0 0.0
  %154 = vmatprep.subr.mxu0 0.0
  %155 = vmatpush1.msra.mxu0 0.0
  %156 = vmatprep.subr.mxu0 0.0
  %157 = vmatpush1.msra.mxu0 0.0
  %158 = vmatprep.subr.mxu0 0.0
  %159 = vmatpush1.msra.mxu0 0.0
  %160 = vmatprep.subr.mxu0 0.0
  %161 = vmatpush1.msra.mxu0 0.0
  %162 = vmatprep.subr.mxu0 0.0
  %163 = vmatpush1.msra.mxu0 0.0
  %164 = vmatprep.subr.mxu0 0.0
  %165 = vmatpush1.msra.mxu0 0.0
  %166 = vmatprep.subr.mxu0 0.0
  %167 = vmatpush1.msra.mxu0 0.0
  %168 = vmatprep.subr.mxu0 0.0
  %169 = vmatpush1.msra.mxu0 0.0
  %170 = vmatprep.subr.mxu0 0.0
  %171 = vmatpush1.msra.mxu0 0.0
  %172 = vmatprep.subr.mxu0 0.0
  %173 = vmatpush1.msra.mxu0 0.0
  %174 = vmatprep.subr.mxu0 0.0
  %175 = vmatpush1.msra.mxu0 0.0
  %176 = vmatprep.subr.mxu0 0.0
  %177 = vmatpush1.msra.mxu0 0.0
  %178 = vmatprep.mubr.f32.mxu0 0.0
  %179 = vmatmul.mubr.f32.gmra.mrb[0].mxu0 %v43
  %v180 = vpop.f32.mrb[0].mxu0
  %v181 = vadd.f32 0.0, %v180
  %v182 = vpop.f32.mrb[0].mxu0
  %183 = vmatprep.mubr.f32.mxu0 0.0
  %184 = vmatmul.mubr.f32.gmra.mrb[0].mxu0 %v46
  %v185 = vpop.f32.mrb[0].mxu0
  %v186 = vadd.f32 0.0, %v185
  %v187 = vpop.f32.mrb[0].mxu0
  %188 = vmatprep.mubr.f32.mxu0 0.0
  %189 = vmatmul.mubr.f32.gmra.mrb[0].mxu0 %v49
  %v190 = vpop.f32.mrb[0].mxu0
  %v191 = vadd.f32 0.0, %v190
  %v192 = vpop.f32.mrb[0].mxu0
  %193 = vmatprep.mubr.f32.mxu0 0.0
  %194 = vmatmul.mubr.f32.gmra.mrb[0].mxu0 %v52
  %v195 = vpop.f32.mrb[0].mxu0
  %v196 = vadd.f32 0.0, %v195
  %v197 = vpop.f32.mrb[0].mxu0
  %198 = vmatprep.mubr.f32.mxu0 0.0
  %199 = vmatmul.mubr.f32.gmra.mrb[0].mxu0 %v55
  %v200 = vpop.f32.mrb[0].mxu0
  %v201 = vadd.f32 0.0, %v200
  %v202 = vpop.f32.mrb[0].mxu0
  %203 = vmatprep.mubr.f32.mxu0 0.0
  %204 = vmatmul.mubr.f32.gmra.mrb[0].mxu0 %v58
  %v205 = vpop.f32.mrb[0].mxu0
  %v206 = vadd.f32 0.0, %v205
  %v207 = vpop.f32.mrb[0].mxu0
  %208 = vmatprep.mubr.f32.mxu0 0.0
  %209 = vmatmul.mubr.f32.gmra.mrb[0].mxu0 %v61
  %v210 = vpop.f32.mrb[0].mxu0
  %v211 = vadd.f32 0.0, %v210
  %v212 = vpop.f32.mrb[0].mxu0
  %213 = vmatprep.mubr.f32.mxu0 0.0
  %214 = vmatmul.mubr.f32.gmra.mrb[0].mxu0 %v64
  %v215 = vpop.f32.mrb[0].mxu0
  %v216 = vadd.f32 0.0, %v215
  %v217 = vpop.f32.mrb[0].mxu0
  %218 = vmatprep.mubr.f32.mxu0 0.0
  %219 = vmatmul.mubr.f32.gmra.mrb[0].mxu0 %v67
  %v220 = vpop.f32.mrb[0].mxu0
  %v221 = vadd.f32 0.0, %v220
  %v222 = vpop.f32.mrb[0].mxu0
  %223 = vmatprep.mubr.f32.mxu0 0.0
  %224 = vmatmul.mubr.f32.gmra.mrb[0].mxu0 %v70
  %v225 = vpop.f32.mrb[0].mxu0
  %v226 = vadd.f32 0.0, %v225
  %v227 = vpop.f32.mrb[0].mxu0
  %228 = vmatprep.mubr.f32.mxu0 0.0
  %229 = vmatmul.mubr.f32.gmra.mrb[0].mxu0 %v73
  %v230 = vpop.f32.mrb[0].mxu0
  %v231 = vadd.f32 0.0, %v230
  %v232 = vpop.f32.mrb[0].mxu0
  %233 = vmatprep.mubr.f32.mxu0 0.0
  %234 = vmatmul.mubr.f32.gmra.mrb[0].mxu0 %v76
  %v235 = vpop.f32.mrb[0].mxu0
  %v236 = vadd.f32 0.0, %v235
  %v237 = vpop.f32.mrb[0].mxu0
  %238 = vmatprep.mubr.f32.mxu0 0.0
  %239 = vmatmul.mubr.f32.gmra.mrb[0].mxu0 %v79
  %v240 = vpop.f32.mrb[0].mxu0
  %v241 = vadd.f32 0.0, %v240
  %v242 = vpop.f32.mrb[0].mxu0
  %243 = vmatprep.mubr.f32.mxu0 0.0
  %244 = vmatmul.mubr.f32.gmra.mrb[0].mxu0 %v82
  %v245 = vpop.f32.mrb[0].mxu0
  %v246 = vadd.f32 0.0, %v245
  %v247 = vpop.f32.mrb[0].mxu0
  %248 = vmatprep.mubr.f32.mxu0 0.0
  %249 = vmatmul.mubr.f32.gmra.mrb[0].mxu0 %v85
  %v250 = vpop.f32.mrb[0].mxu0
  %v251 = vadd.f32 0.0, %v250
  %v252 = vpop.f32.mrb[0].mxu0
  %253 = vmatprep.mubr.f32.mxu0 0.0
  %254 = vmatmul.mubr.f32.gmra.mrb[0].mxu0 %v88
  %v255 = vpop.f32.mrb[0].mxu0
  %v256 = vadd.f32 0.0, %v255
  %v257 = vpop.f32.mrb[0].mxu0
  %258 = vmatprep.mubr.f32.mxu0 0.0
  %259 = vmatmul.mubr.f32.gmra.mrb[0].mxu0 %v91
  %v260 = vpop.f32.mrb[0].mxu0
  %v261 = vadd.f32 0.0, %v260
  %v262 = vpop.f32.mrb[0].mxu0
  %263 = vmatprep.mubr.f32.mxu0 0.0
  %264 = vmatmul.mubr.f32.gmra.mrb[0].mxu0 %v94
  %v265 = vpop.f32.mrb[0].mxu0
  %v266 = vadd.f32 0.0, %v265
  %v267 = vpop.f32.mrb[0].mxu0
  %268 = vmatprep.mubr.f32.mxu0 0.0
  %269 = vmatmul.mubr.f32.gmra.mrb[0].mxu0 %v97
  %v270 = vpop.f32.mrb[0].mxu0
  %v271 = vadd.f32 0.0, %v270
  %v272 = vpop.f32.mrb[0].mxu0
  %273 = vmatprep.mubr.f32.mxu0 0.0
  %274 = vmatmul.mubr.f32.gmra.mrb[0].mxu0 %v100
  %v275 = vpop.f32.mrb[0].mxu0
  %v276 = vadd.f32 0.0, %v275
  %v277 = vpop.f32.mrb[0].mxu0
  %278 = vmatprep.mubr.f32.mxu0 0.0
  %279 = vmatmul.mubr.f32.gmra.mrb[0].mxu0 %v103
  %v280 = vpop.f32.mrb[0].mxu0
  %v281 = vadd.f32 0.0, %v280
  %v282 = vpop.f32.mrb[0].mxu0
  %283 = vmatprep.mubr.f32.mxu0 0.0
  %284 = vmatmul.mubr.f32.gmra.mrb[0].mxu0 %v106
  %v285 = vpop.f32.mrb[0].mxu0
  %v286 = vadd.f32 0.0, %v285
  %v287 = vpop.f32.mrb[0].mxu0
  %288 = vmatprep.mubr.f32.mxu0 0.0
  %289 = vmatmul.mubr.f32.gmra.mrb[0].mxu0 %v109
  %v290 = vpop.f32.mrb[0].mxu0
  %v291 = vadd.f32 0.0, %v290
  %v292 = vpop.f32.mrb[0].mxu0
  %293 = vmatprep.mubr.f32.mxu0 0.0
  %294 = vmatmul.mubr.f32.gmra.mrb[0].mxu0 %v112
  %v295 = vpop.f32.mrb[0].mxu0
  %v296 = vadd.f32 0.0, %v295
  %v297 = vpop.f32.mrb[0].mxu0
  %298 = vdwg.mxu0
  %299 = vst [vmem:[%s2] sm:$0xff] %v181
  %300 = vst [vmem:[%s2 + $0x8] sm:$0xff] %v186
  %301 = vst [vmem:[%s2 + $0x10] sm:$0xff] %v191
  %302 = vst [vmem:[%s2 + $0x18] sm:$0xff] %v196
  %303 = vst [vmem:[%s2 + $0x20] sm:$0xff] %v201
  %304 = vst [vmem:[%s2 + $0x28] sm:$0xff] %v206
  %305 = vst [vmem:[%s2 + $0x30] sm:$0xff] %v211
  %306 = vst [vmem:[%s2 + $0x38] sm:$0xff] %v216
  %307 = vst [vmem:[%s2 + $0x40] sm:$0xff] %v221
  %308 = vst [vmem:[%s2 + $0x48] sm:$0xff] %v226
  %309 = vst [vmem:[%s2 + $0x50] sm:$0xff] %v231
  %310 = vst [vmem:[%s2 + $0x58] sm:$0xff] %v236
  %311 = vst [vmem:[%s2 + $0x60] sm:$0xff] %v241
  %312 = vst [vmem:[%s2 + $0x68] sm:$0xff] %v246
  %313 = vst [vmem:[%s2 + $0x70] sm:$0xff] %v251
  %314 = vst [vmem:[%s2 + $0x78] sm:$0xff] %v256
  %315 = vst [vmem:[%s2 + $0x80] sm:$0xff] %v261
  %316 = vst [vmem:[%s2 + $0x88] sm:$0xff] %v266
  %317 = vst [vmem:[%s2 + $0x90] sm:$0xff] %v271
  %318 = vst [vmem:[%s2 + $0x98] sm:$0xff] %v276
  %319 = vst [vmem:[%s2 + $0xa0] sm:$0xff] %v281
  %320 = vst [vmem:[%s2 + $0xa8] sm:$0xff] %v286
  %321 = vst [vmem:[%s2 + $0xb0] sm:$0xff] %v291
  %322 = vst [vmem:[%s2 + $0xb8] sm:$0xff] %v296
  // Predicated region
  $region10: #{time_stretch_and_pitch_shift.5} parent=0 // pred_check
    _
  $region11: #{time_stretch_and_pitch_shift.5} parent=0 // pred_check_branch
    %324 = sbr.rel (0) target = $region13
  $region12: #{time_stretch_and_pitch_shift.5} parent=0 // pred_region
    _
  $region13: #{time_stretch_and_pitch_shift.5} parent=0 // pred_fallthru
    _
  // Predicated region
  $region14: #{time_stretch_and_pitch_shift.5} parent=0 // pred_check
    _
  $region15: #{time_stretch_and_pitch_shift.5} parent=0 // pred_check_branch
    %326 = sbr.rel (0) target = $region17
  $region16: #{time_stretch_and_pitch_shift.5} parent=0 // pred_region
    _
  $region17: #{time_stretch_and_pitch_shift.5} parent=0 // pred_fallthru
    _

</llo_original>
